<compile_context>
chip_gen: v6e
topology: v6e:2x2x1
jax: 0.10.0
libtpu: 0.0.40
codegen_flags: <defaults>
</compile_context>

<pallas_src>
import functools

import jax
import jax.numpy as jnp
from jax.experimental import pallas as pl
from jax.experimental.pallas import tpu as pltpu


# bf16 hidden scratch for v6e/v7x; use jnp.float32 on v5e (no bf16 VPU).
_HIDDEN_DTYPE = jnp.bfloat16
_EXPAND_ROWS_TARGET = 128    # M rows per expand matmul (keep f32 interm. small)
_PROJECT_ROWS_TARGET = 256   # M rows per project matmul (fills 256-wide MXU)


# ---------------------------------------------------------------------------
# Fused inverted-residual kernel (one image per grid step)
# ---------------------------------------------------------------------------

def _inverted_residual_kernel(
    x_ref,                       # (1, H*W, Cin)    f32
    we_ref, be_ref,              # (Cin, hid) bf16, (1, hid) f32   (scale folded)
    wd_ref, bd_ref,              # (9, hid)   f32,  (1, hid) f32   (scale folded)
    wp_ref, bp_ref,              # (hid, Cout) bf16,(1, Cout) f32  (scale folded)
    o_ref,                       # (1, OH*OW, Cout) f32
    hpad_ref,                    # VMEM scratch (Hp, W+2, hid)  _HIDDEN_DTYPE
    g_ref,                       # VMEM scratch (OH*OW, hid)    bf16
    *, H, W, Cin, hid, Cout, stride, use_res):
  OH = (H - 1) // stride + 1
  OW = (W - 1) // stride + 1
  E = (W + 1) // 2                       # even-column count (== OW for stride 2)
  Hp = stride * OH + 2
  Wp = W + 2
  hdt = hpad_ref.dtype

  # ---- zero ONLY the row halo; the interior is fully rewritten below -------
  hpad_ref[pl.ds(0, 1), :, :] = jnp.zeros((1, Wp, hid), hdt)
  hpad_ref[pl.ds(H + 1, Hp - H - 1), :, :] = jnp.zeros((Hp - H - 1, Wp, hid), hdt)

  # ---- expand 1x1 (BN scale folded into weights) + bias + ReLU6 ------------
  we = we_ref[...]
  be = be_ref[...]
  rows_per_chunk = max(1, _EXPAND_ROWS_TARGET // W)
  for r0 in range(0, H, rows_per_chunk):
    rows = min(rows_per_chunk, H - r0)
    xr = x_ref[0, pl.ds(r0 * W, rows * W), :]                 # (rows*W, Cin) f32
    hr = jnp.dot(xr.astype(jnp.bfloat16), we,
                 preferred_element_type=jnp.float32)          # MXU, f32 acc
    hr = jnp.clip(hr + be, 0.0, 6.0).astype(hdt).reshape(rows, W, hid)
    zc = jnp.zeros((rows, 1, hid), hdt)
    if stride == 1:
      # row layout: [0 | cols 0..W-1 | 0]  (width W+2)
      block = jnp.concatenate([zc, hr, zc], axis=1)
    else:
      # columns arrive pre-reordered as [even..., odd...]; row layout:
      # [even (E) | 0 | odd (W-E) | 0]  so all 3 column taps are unit-stride.
      block = jnp.concatenate([hr[:, :E, :], zc, hr[:, E:, :], zc], axis=1)
    # single full-width (aligned, unmasked) block store per chunk
    hpad_ref[pl.ds(r0 + 1, rows), :, :] = block

  # ---- depthwise 3x3 (scale folded) + bias + ReLU6 -> g (bf16) -------------
  bd = bd_ref[...]
  wtaps = [wd_ref[k] for k in range(9)]                       # each (hid,)
  if stride == 1:
    starts = (0, 1, 2)                   # (left, center, right) slice starts
    R = max(1, 128 // OW)                # output rows per slab
    o0 = 0
    while o0 < OH:
      rcur = min(R, OH - o0)
      acc = jnp.zeros((rcur, OW, hid), jnp.float32)
      for kh in range(3):
        slab = hpad_ref[pl.ds(o0 + kh, rcur), :, :]           # (rcur, Wp, hid)
        acc = acc + slab[:, starts[0]:starts[0] + OW, :] * wtaps[kh * 3 + 0]
        acc = acc + slab[:, starts[1]:starts[1] + OW, :] * wtaps[kh * 3 + 1]
        acc = acc + slab[:, starts[2]:starts[2] + OW, :] * wtaps[kh * 3 + 2]
      y = jnp.clip(acc + bd, 0.0, 6.0)
      g_ref[pl.ds(o0 * OW, rcur * OW), :] = (
          y.reshape(rcur * OW, hid).astype(g_ref.dtype))
      o0 += rcur
  else:
    starts = (E, 0, E + 1)               # (left, center, right) in split layout
    for oh in range(OH):
      acc = jnp.zeros((OW, hid), jnp.float32)
      for kh in range(3):
        row = hpad_ref[stride * oh + kh, :, :]                # (Wp, hid), full row
        acc = acc + row[starts[0]:starts[0] + OW, :] * wtaps[kh * 3 + 0]
        acc = acc + row[starts[1]:starts[1] + OW, :] * wtaps[kh * 3 + 1]
        acc = acc + row[starts[2]:starts[2] + OW, :] * wtaps[kh * 3 + 2]
      y = jnp.clip(acc + bd, 0.0, 6.0)
      g_ref[pl.ds(oh * OW, OW), :] = y.astype(g_ref.dtype)

  # ---- project 1x1 (scale folded) + bias (+ residual) ----------------------
  wp = wp_ref[...]
  bp = bp_ref[...]
  M = OH * OW
  chunk = min(M, _PROJECT_ROWS_TARGET)
  for lo in range(0, M, chunk):
    sz = min(chunk, M - lo)
    gr = g_ref[pl.ds(lo, sz), :]                              # (sz, hid) bf16
    y = jnp.dot(gr, wp, preferred_element_type=jnp.float32) + bp
    if use_res:                                               # stride==1, Cin==Cout
      y = y + x_ref[0, pl.ds(lo, sz), :]
    o_ref[0, pl.ds(lo, sz), :] = y.astype(o_ref.dtype)


# ---------------------------------------------------------------------------
# Wrapper: NCHW in / NCHW out, builds the pallas_call
# ---------------------------------------------------------------------------

def inverted_residual_forward(x_nchw, folded, stride):
  assert stride in (1, 2), "MobileNetV2 inverted residual uses stride 1 or 2"
  we, be, wd, bd, wp, bp = folded
  N, Cin, H, W = x_nchw.shape
  hid = we.shape[1]
  Cout = wp.shape[1]
  OH = (H - 1) // stride + 1
  OW = (W - 1) // stride + 1
  use_res = (stride == 1) and (Cin == Cout)
  Hp = stride * OH + 2
  Wp = W + 2

  # NCHW -> NHWC (channels on lanes).  For stride 2, pre-reorder each row's
  # columns to [even..., odd...] so the kernel's split hidden layout works
  # with unit-stride slices only (no strided ref reads).
  x = jnp.transpose(x_nchw.astype(jnp.float32), (0, 2, 3, 1))
  if stride == 2:
    perm = jnp.concatenate([jnp.arange(0, W, 2), jnp.arange(1, W, 2)])
    x = jnp.take(x, perm, axis=2)
  x = x.reshape(N, H * W, Cin)

  kernel = functools.partial(
      _inverted_residual_kernel,
      H=H, W=W, Cin=Cin, hid=hid, Cout=Cout, stride=stride, use_res=use_res)

  flops = int(N * (2 * H * W * Cin * hid          # expand matmul
                   + 18 * OH * OW * hid           # depthwise taps
                   + 2 * OH * OW * hid * Cout))   # project matmul
  bytes_accessed = int(
      N * H * W * Cin * 4 + N * OH * OW * Cout * 4
      + we.size * 2 + wp.size * 2 + wd.size * 4
      + (be.size + bd.size + bp.size) * 4)

  out = pl.pallas_call(
      kernel,
      out_shape=jax.ShapeDtypeStruct((N, OH * OW, Cout), jnp.float32),
      grid_spec=pltpu.PrefetchScalarGridSpec(
          num_scalar_prefetch=0,
          grid=(N,),
          in_specs=[
              pl.BlockSpec((1, H * W, Cin), lambda n: (n, 0, 0)),
              pl.BlockSpec((Cin, hid), lambda n: (0, 0)),
              pl.BlockSpec((1, hid), lambda n: (0, 0)),
              pl.BlockSpec((9, hid), lambda n: (0, 0)),
              pl.BlockSpec((1, hid), lambda n: (0, 0)),
              pl.BlockSpec((hid, Cout), lambda n: (0, 0)),
              pl.BlockSpec((1, Cout), lambda n: (0, 0)),
          ],
          out_specs=pl.BlockSpec((1, OH * OW, Cout), lambda n: (n, 0, 0)),
          scratch_shapes=[
              pltpu.VMEM((Hp, Wp, hid), _HIDDEN_DTYPE),   # padded hidden buffer
              pltpu.VMEM((OH * OW, hid), jnp.bfloat16),   # depthwise output
          ],
      ),
      compiler_params=pltpu.CompilerParams(
          dimension_semantics=("parallel",),
          vmem_limit_bytes=32 * 1024 * 1024),
      cost_estimate=pl.CostEstimate(
          flops=flops, transcendentals=0, bytes_accessed=bytes_accessed),
  )(x, we, be, wd, bd, wp, bp)

  return jnp.transpose(out.reshape(N, OH, OW, Cout), (0, 3, 1, 2))


# ---------------------------------------------------------------------------
# Parameters (PyTorch layout) + inference-mode BN fold (scales into weights)
# ---------------------------------------------------------------------------

def init_params(key, inp, oup, expand_ratio):
  hid = inp * expand_ratio
  keys = iter(jax.random.split(key, 16))

  def nrm(shape, s=0.1):
    return (s * jax.random.normal(next(keys), shape)).astype(jnp.float32)

  def bn(C):
    gamma = (1.0 + 0.1 * jax.random.normal(next(keys), (C,))).astype(jnp.float32)
    beta = (0.1 * jax.random.normal(next(keys), (C,))).astype(jnp.float32)
    mean = (0.05 * jax.random.normal(next(keys), (C,))).astype(jnp.float32)
    var = (1.0 + 0.1 * jax.random.uniform(next(keys), (C,))).astype(jnp.float32)
    return gamma, beta, mean, var

  return {
      "w_exp": nrm((hid, inp, 1, 1)),    # Conv2d(inp, hid, 1, bias=False)
      "bn1": bn(hid),
      "w_dw": nrm((hid, 1, 3, 3)),       # Conv2d(hid, hid, 3, groups=hid)
      "bn2": bn(hid),
      "w_proj": nrm((oup, hid, 1, 1)),   # Conv2d(hid, oup, 1, bias=False)
      "bn3": bn(oup),
  }


def _fold_bn(gamma, beta, mean, var, eps=1e-5):
  scale = gamma / jnp.sqrt(var + eps)
  bias = beta - mean * scale
  return scale, bias


def fold_params(p):
  hid, cin = p["w_exp"].shape[0], p["w_exp"].shape[1]
  cout = p["w_proj"].shape[0]
  s1, b1 = _fold_bn(*p["bn1"])
  s2, b2 = _fold_bn(*p["bn2"])
  s3, b3 = _fold_bn(*p["bn3"])
  # BN scales folded into the weights (per output channel); biases kept.
  we = (jnp.transpose(p["w_exp"].reshape(hid, cin), (1, 0))
        * s1[None, :]).astype(jnp.bfloat16)                     # (cin, hid)
  wd = (jnp.transpose(p["w_dw"].reshape(hid, 9), (1, 0))
        * s2[None, :]).astype(jnp.float32)                      # (9, hid)
  wp = (jnp.transpose(p["w_proj"].reshape(cout, hid), (1, 0))
        * s3[None, :]).astype(jnp.bfloat16)                     # (hid, cout)
  return (we, b1.reshape(1, hid),
          wd, b2.reshape(1, hid),
          wp, b3.reshape(1, cout))


# ---------------------------------------------------------------------------
# Pure-JAX reference (matching the kernel's precision choices)
# ---------------------------------------------------------------------------

def inverted_residual_reference(x_nchw, folded, stride):
  we, be, wd, bd, wp, bp = folded
  N, Cin, H, W = x_nchw.shape
  hid = we.shape[1]
  Cout = wp.shape[1]
  use_res = (stride == 1) and (Cin == Cout)

  x = jnp.transpose(x_nchw.astype(jnp.float32), (0, 2, 3, 1))   # N,H,W,Cin
  h = jnp.dot(x.reshape(N * H * W, Cin).astype(jnp.bfloat16), we,
              preferred_element_type=jnp.float32)
  h = jnp.clip(h + be, 0.0, 6.0).astype(_HIDDEN_DTYPE).reshape(N, H, W, hid)

  hp = jnp.pad(h, ((0, 0), (1, 1), (1, 1), (0, 0)))
  OH = (H - 1) // stride + 1
  OW = (W - 1) // stride + 1
  acc = jnp.zeros((N, OH, OW, hid), jnp.float32)
  for kh in range(3):
    for kw in range(3):
      tap = hp[:, kh:kh + (OH - 1) * stride + 1:stride,
               kw:kw + (OW - 1) * stride + 1:stride, :]
      acc = acc + tap.astype(jnp.float32) * wd[kh * 3 + kw]
  g = jnp.clip(acc + bd, 0.0, 6.0).astype(jnp.bfloat16)

  y = jnp.dot(g.reshape(N * OH * OW, hid), wp,
              preferred_element_type=jnp.float32)
  y = (y + bp).reshape(N, OH, OW, Cout)
  if use_res:
    y = y + x
  return jnp.transpose(y, (0, 3, 1, 2))


# ---------------------------------------------------------------------------
# Main
# ---------------------------------------------------------------------------

if __name__ == "__main__":
  key = jax.random.PRNGKey(0)
  k1, k2, kx = jax.random.split(key, 3)

  batch, spatial = 2, 16

  # Case 1: stride 1, inp == oup -> residual branch is used.
  inp1, oup1, t1, s1 = 32, 32, 6, 1
  p1 = fold_params(init_params(k1, inp1, oup1, t1))
  x1 = jax.random.normal(kx, (batch, inp1, spatial, spatial), jnp.float32)
  fwd1 = jax.jit(functools.partial(inverted_residual_forward, stride=s1))
  y1 = jax.block_until_ready(fwd1(x1, p1))
  r1 = inverted_residual_reference(x1, p1, s1)
  assert y1.shape == (batch, oup1, spatial, spatial), y1.shape
  assert bool(jnp.all(jnp.isfinite(y1)))
  assert float(jnp.max(jnp.abs(y1 - r1))) < 2e-2, float(jnp.max(jnp.abs(y1 - r1)))

  # Case 2: stride 2, inp != oup -> no residual, spatial downsampling.
  inp2, oup2, t2, s2 = 32, 48, 6, 2
  p2 = fold_params(init_params(k2, inp2, oup2, t2))
  x2 = jax.random.normal(kx, (batch, inp2, spatial, spatial), jnp.float32)
  fwd2 = jax.jit(functools.partial(inverted_residual_forward, stride=s2))
  y2 = jax.block_until_ready(fwd2(x2, p2))
  r2 = inverted_residual_reference(x2, p2, s2)
  assert y2.shape == (batch, oup2, spatial // 2, spatial // 2), y2.shape
  assert bool(jnp.all(jnp.isfinite(y2)))
  assert float(jnp.max(jnp.abs(y2 - r2))) < 2e-2, float(jnp.max(jnp.abs(y2 - r2)))

  print("KERNEL_OK")
</pallas_src>

<mosaic_0001>
module attributes {stable_mosaic.version = 11 : i64} {
  func.func @_inverted_residual_kernel(%arg0: i32, %arg1: memref<1x256x32xf32, #tpu.memory_space<vmem>>, %arg2: memref<32x192xbf16, #tpu.memory_space<vmem>>, %arg3: memref<1x192xf32, #tpu.memory_space<vmem>>, %arg4: memref<9x192xf32, #tpu.memory_space<vmem>>, %arg5: memref<1x192xf32, #tpu.memory_space<vmem>>, %arg6: memref<192x32xbf16, #tpu.memory_space<vmem>>, %arg7: memref<1x32xf32, #tpu.memory_space<vmem>>, %arg8: memref<1x256x32xf32, #tpu.memory_space<vmem>>, %arg9: memref<18x18x192xbf16, #tpu.memory_space<vmem>>, %arg10: memref<256x192xbf16, #tpu.memory_space<vmem>>) attributes {dimension_semantics = [#tpu.dimension_semantics<parallel>], iteration_bounds = array<i64: 2>, scalar_prefetch = 0 : i64, scratch_operands = 2 : i64, tpu.core_type = #tpu.core_type<tc>, window_params = [{transform_indices = @transform_0, window_bounds = array<i64: 1, 256, 32>}, {pipeline_mode = #tpu.pipeline_mode<synchronous>, transform_indices = @transform_1, window_bounds = array<i64: 32, 192>}, {pipeline_mode = #tpu.pipeline_mode<synchronous>, transform_indices = @transform_2, window_bounds = array<i64: 1, 192>}, {pipeline_mode = #tpu.pipeline_mode<synchronous>, transform_indices = @transform_3, window_bounds = array<i64: 9, 192>}, {pipeline_mode = #tpu.pipeline_mode<synchronous>, transform_indices = @transform_4, window_bounds = array<i64: 1, 192>}, {pipeline_mode = #tpu.pipeline_mode<synchronous>, transform_indices = @transform_5, window_bounds = array<i64: 192, 32>}, {pipeline_mode = #tpu.pipeline_mode<synchronous>, transform_indices = @transform_6, window_bounds = array<i64: 1, 32>}, {transform_indices = @transform_7, window_bounds = array<i64: 1, 256, 32>}]} {
    %cst = arith.constant 0.000000e+00 : bf16
    %0 = vector.broadcast %cst : bf16 to vector<1x18x192xbf16>
    %c0 = arith.constant 0 : index
    %c0_0 = arith.constant 0 : index
    %c0_1 = arith.constant 0 : index
    %1 = vector.load %arg9[%c0, %c0_0, %c0_1] : memref<18x18x192xbf16, #tpu.memory_space<vmem>>, vector<1x18x192xbf16>
    tpu.vector_store %arg9[%c0, %c0_0, %c0_1], %0 {strides = array<i32>} : memref<18x18x192xbf16, #tpu.memory_space<vmem>>, vector<1x18x192xbf16>,
    %cst_2 = arith.constant 0.000000e+00 : bf16
    %2 = vector.broadcast %cst_2 : bf16 to vector<1x18x192xbf16>
    %c17 = arith.constant 17 : index
    %c0_3 = arith.constant 0 : index
    %c0_4 = arith.constant 0 : index
    %3 = vector.load %arg9[%c17, %c0_3, %c0_4] : memref<18x18x192xbf16, #tpu.memory_space<vmem>>, vector<1x18x192xbf16>
    tpu.vector_store %arg9[%c17, %c0_3, %c0_4], %2 {strides = array<i32>} : memref<18x18x192xbf16, #tpu.memory_space<vmem>>, vector<1x18x192xbf16>,
    %c0_5 = arith.constant 0 : index
    %c0_6 = arith.constant 0 : index
    %4 = vector.load %arg2[%c0_5, %c0_6] : memref<32x192xbf16, #tpu.memory_space<vmem>>, vector<32x192xbf16>
    %c0_7 = arith.constant 0 : index
    %c0_8 = arith.constant 0 : index
    %5 = vector.load %arg3[%c0_7, %c0_8] : memref<1x192xf32, #tpu.memory_space<vmem>>, vector<1x192xf32>
    %c0_9 = arith.constant 0 : index
    %c0_10 = arith.constant 0 : index
    %c0_11 = arith.constant 0 : index
    %6 = vector.load %arg1[%c0_9, %c0_10, %c0_11] : memref<1x256x32xf32, #tpu.memory_space<vmem>>, vector<1x128x32xf32>
    %7 = vector.shape_cast %6 : vector<1x128x32xf32> to vector<128x32xf32>
    %8 = arith.truncf %7 : vector<128x32xf32> to vector<128x32xbf16>
    %cst_12 = arith.constant dense<0.000000e+00> : vector<128x192xf32>
    %9 = tpu.matmul %8, %4, %cst_12 {dimension_numbers = #tpu.dot_dimension_numbers<[1], [0], [0], [1], [0, 0, 1, 1], [], []>} : vector<128x32xbf16>, vector<32x192xbf16>, vector<128x192xf32> -> vector<128x192xf32>
    %10 = vector.broadcast %5 : vector<1x192xf32> to vector<128x192xf32>
    %11 = arith.addf %9, %10 : vector<128x192xf32>
    %cst_13 = arith.constant 0.000000e+00 : f32
    %cst_14 = arith.constant 6.000000e+00 : f32
    %12 = vector.broadcast %cst_13 : f32 to vector<128x192xf32>
    %13 = arith.maximumf %12, %11 : vector<128x192xf32>
    %14 = vector.broadcast %cst_14 : f32 to vector<128x192xf32>
    %15 = arith.minimumf %14, %13 : vector<128x192xf32>
    %16 = arith.truncf %15 : vector<128x192xf32> to vector<128x192xbf16>
    %17 = vector.shape_cast %16 : vector<128x192xbf16> to vector<8x16x192xbf16>
    %cst_15 = arith.constant 0.000000e+00 : bf16
    %18 = vector.broadcast %cst_15 : bf16 to vector<8x1x192xbf16>
    %19 = tpu.concatenate %18, %17, %18 in 1 : vector<8x1x192xbf16>, vector<8x16x192xbf16>, vector<8x1x192xbf16> -> vector<8x18x192xbf16>
    %c1 = arith.constant 1 : index
    %c0_16 = arith.constant 0 : index
    %c0_17 = arith.constant 0 : index
    %20 = vector.load %arg9[%c1, %c0_16, %c0_17] : memref<18x18x192xbf16, #tpu.memory_space<vmem>>, vector<8x18x192xbf16>
    tpu.vector_store %arg9[%c1, %c0_16, %c0_17], %19 {strides = array<i32>} : memref<18x18x192xbf16, #tpu.memory_space<vmem>>, vector<8x18x192xbf16>,
    %c0_18 = arith.constant 0 : index
    %c128 = arith.constant 128 : index
    %c0_19 = arith.constant 0 : index
    %21 = vector.load %arg1[%c0_18, %c128, %c0_19] : memref<1x256x32xf32, #tpu.memory_space<vmem>>, vector<1x128x32xf32>
    %22 = vector.shape_cast %21 : vector<1x128x32xf32> to vector<128x32xf32>
    %23 = arith.truncf %22 : vector<128x32xf32> to vector<128x32xbf16>
    %cst_20 = arith.constant dense<0.000000e+00> : vector<128x192xf32>
    %24 = tpu.matmul %23, %4, %cst_20 {dimension_numbers = #tpu.dot_dimension_numbers<[1], [0], [0], [1], [0, 0, 1, 1], [], []>} : vector<128x32xbf16>, vector<32x192xbf16>, vector<128x192xf32> -> vector<128x192xf32>
    %25 = vector.broadcast %5 : vector<1x192xf32> to vector<128x192xf32>
    %26 = arith.addf %24, %25 : vector<128x192xf32>
    %cst_21 = arith.constant 0.000000e+00 : f32
    %cst_22 = arith.constant 6.000000e+00 : f32
    %27 = vector.broadcast %cst_21 : f32 to vector<128x192xf32>
    %28 = arith.maximumf %27, %26 : vector<128x192xf32>
    %29 = vector.broadcast %cst_22 : f32 to vector<128x192xf32>
    %30 = arith.minimumf %29, %28 : vector<128x192xf32>
    %31 = arith.truncf %30 : vector<128x192xf32> to vector<128x192xbf16>
    %32 = vector.shape_cast %31 : vector<128x192xbf16> to vector<8x16x192xbf16>
    %cst_23 = arith.constant 0.000000e+00 : bf16
    %33 = vector.broadcast %cst_23 : bf16 to vector<8x1x192xbf16>
    %34 = tpu.concatenate %33, %32, %33 in 1 : vector<8x1x192xbf16>, vector<8x16x192xbf16>, vector<8x1x192xbf16> -> vector<8x18x192xbf16>
    %c9 = arith.constant 9 : index
    %c0_24 = arith.constant 0 : index
    %c0_25 = arith.constant 0 : index
    %35 = vector.load %arg9[%c9, %c0_24, %c0_25] : memref<18x18x192xbf16, #tpu.memory_space<vmem>>, vector<8x18x192xbf16>
    tpu.vector_store %arg9[%c9, %c0_24, %c0_25], %34 {strides = array<i32>} : memref<18x18x192xbf16, #tpu.memory_space<vmem>>, vector<8x18x192xbf16>,
    %c0_26 = arith.constant 0 : index
    %c0_27 = arith.constant 0 : index
    %36 = vector.load %arg5[%c0_26, %c0_27] : memref<1x192xf32, #tpu.memory_space<vmem>>, vector<1x192xf32>
    %c0_28 = arith.constant 0 : index
    %c0_29 = arith.constant 0 : index
    %37 = vector.load %arg4[%c0_28, %c0_29] : memref<9x192xf32, #tpu.memory_space<vmem>>, vector<1x192xf32>
    %38 = vector.shape_cast %37 : vector<1x192xf32> to vector<192xf32>
    %c1_30 = arith.constant 1 : index
    %c0_31 = arith.constant 0 : index
    %39 = vector.load %arg4[%c1_30, %c0_31] : memref<9x192xf32, #tpu.memory_space<vmem>>, vector<1x192xf32>
    %40 = vector.shape_cast %39 : vector<1x192xf32> to vector<192xf32>
    %c2 = arith.constant 2 : index
    %c0_32 = arith.constant 0 : index
    %41 = vector.load %arg4[%c2, %c0_32] : memref<9x192xf32, #tpu.memory_space<vmem>>, vector<1x192xf32>
    %42 = vector.shape_cast %41 : vector<1x192xf32> to vector<192xf32>
    %c3 = arith.constant 3 : index
    %c0_33 = arith.constant 0 : index
    %43 = vector.load %arg4[%c3, %c0_33] : memref<9x192xf32, #tpu.memory_space<vmem>>, vector<1x192xf32>
    %44 = vector.shape_cast %43 : vector<1x192xf32> to vector<192xf32>
    %c4 = arith.constant 4 : index
    %c0_34 = arith.constant 0 : index
    %45 = vector.load %arg4[%c4, %c0_34] : memref<9x192xf32, #tpu.memory_space<vmem>>, vector<1x192xf32>
    %46 = vector.shape_cast %45 : vector<1x192xf32> to vector<192xf32>
    %c5 = arith.constant 5 : index
    %c0_35 = arith.constant 0 : index
    %47 = vector.load %arg4[%c5, %c0_35] : memref<9x192xf32, #tpu.memory_space<vmem>>, vector<1x192xf32>
    %48 = vector.shape_cast %47 : vector<1x192xf32> to vector<192xf32>
    %c6 = arith.constant 6 : index
    %c0_36 = arith.constant 0 : index
    %49 = vector.load %arg4[%c6, %c0_36] : memref<9x192xf32, #tpu.memory_space<vmem>>, vector<1x192xf32>
    %50 = vector.shape_cast %49 : vector<1x192xf32> to vector<192xf32>
    %c7 = arith.constant 7 : index
    %c0_37 = arith.constant 0 : index
    %51 = vector.load %arg4[%c7, %c0_37] : memref<9x192xf32, #tpu.memory_space<vmem>>, vector<1x192xf32>
    %52 = vector.shape_cast %51 : vector<1x192xf32> to vector<192xf32>
    %c8 = arith.constant 8 : index
    %c0_38 = arith.constant 0 : index
    %53 = vector.load %arg4[%c8, %c0_38] : memref<9x192xf32, #tpu.memory_space<vmem>>, vector<1x192xf32>
    %54 = vector.shape_cast %53 : vector<1x192xf32> to vector<192xf32>
    %cst_39 = arith.constant 0.000000e+00 : f32
    %55 = vector.broadcast %cst_39 : f32 to vector<8x16x192xf32>
    %c0_40 = arith.constant 0 : index
    %c0_41 = arith.constant 0 : index
    %c0_42 = arith.constant 0 : index
    %56 = vector.load %arg9[%c0_40, %c0_41, %c0_42] : memref<18x18x192xbf16, #tpu.memory_space<vmem>>, vector<8x18x192xbf16>
    %57 = vector.extract_strided_slice %56 {offsets = [0, 0, 0], sizes = [8, 16, 192], strides = [1, 1, 1]} : vector<8x18x192xbf16> to vector<8x16x192xbf16>
    %58 = arith.extf %57 : vector<8x16x192xbf16> to vector<8x16x192xf32>
    %59 = vector.shape_cast %38 : vector<192xf32> to vector<1x1x192xf32>
    %60 = vector.broadcast %59 : vector<1x1x192xf32> to vector<8x16x192xf32>
    %61 = arith.mulf %58, %60 : vector<8x16x192xf32>
    %62 = arith.addf %55, %61 : vector<8x16x192xf32>
    %63 = vector.extract_strided_slice %56 {offsets = [0, 1, 0], sizes = [8, 16, 192], strides = [1, 1, 1]} : vector<8x18x192xbf16> to vector<8x16x192xbf16>
    %64 = arith.extf %63 : vector<8x16x192xbf16> to vector<8x16x192xf32>
    %65 = vector.shape_cast %40 : vector<192xf32> to vector<1x1x192xf32>
    %66 = vector.broadcast %65 : vector<1x1x192xf32> to vector<8x16x192xf32>
    %67 = arith.mulf %64, %66 : vector<8x16x192xf32>
    %68 = arith.addf %62, %67 : vector<8x16x192xf32>
    %69 = vector.extract_strided_slice %56 {offsets = [0, 2, 0], sizes = [8, 16, 192], strides = [1, 1, 1]} : vector<8x18x192xbf16> to vector<8x16x192xbf16>
    %70 = arith.extf %69 : vector<8x16x192xbf16> to vector<8x16x192xf32>
    %71 = vector.shape_cast %42 : vector<192xf32> to vector<1x1x192xf32>
    %72 = vector.broadcast %71 : vector<1x1x192xf32> to vector<8x16x192xf32>
    %73 = arith.mulf %70, %72 : vector<8x16x192xf32>
    %74 = arith.addf %68, %73 : vector<8x16x192xf32>
    %c1_43 = arith.constant 1 : index
    %c0_44 = arith.constant 0 : index
    %c0_45 = arith.constant 0 : index
    %75 = vector.load %arg9[%c1_43, %c0_44, %c0_45] : memref<18x18x192xbf16, #tpu.memory_space<vmem>>, vector<8x18x192xbf16>
    %76 = vector.extract_strided_slice %75 {offsets = [0, 0, 0], sizes = [8, 16, 192], strides = [1, 1, 1]} : vector<8x18x192xbf16> to vector<8x16x192xbf16>
    %77 = arith.extf %76 : vector<8x16x192xbf16> to vector<8x16x192xf32>
    %78 = vector.shape_cast %44 : vector<192xf32> to vector<1x1x192xf32>
    %79 = vector.broadcast %78 : vector<1x1x192xf32> to vector<8x16x192xf32>
    %80 = arith.mulf %77, %79 : vector<8x16x192xf32>
    %81 = arith.addf %74, %80 : vector<8x16x192xf32>
    %82 = vector.extract_strided_slice %75 {offsets = [0, 1, 0], sizes = [8, 16, 192], strides = [1, 1, 1]} : vector<8x18x192xbf16> to vector<8x16x192xbf16>
    %83 = arith.extf %82 : vector<8x16x192xbf16> to vector<8x16x192xf32>
    %84 = vector.shape_cast %46 : vector<192xf32> to vector<1x1x192xf32>
    %85 = vector.broadcast %84 : vector<1x1x192xf32> to vector<8x16x192xf32>
    %86 = arith.mulf %83, %85 : vector<8x16x192xf32>
    %87 = arith.addf %81, %86 : vector<8x16x192xf32>
    %88 = vector.extract_strided_slice %75 {offsets = [0, 2, 0], sizes = [8, 16, 192], strides = [1, 1, 1]} : vector<8x18x192xbf16> to vector<8x16x192xbf16>
    %89 = arith.extf %88 : vector<8x16x192xbf16> to vector<8x16x192xf32>
    %90 = vector.shape_cast %48 : vector<192xf32> to vector<1x1x192xf32>
    %91 = vector.broadcast %90 : vector<1x1x192xf32> to vector<8x16x192xf32>
    %92 = arith.mulf %89, %91 : vector<8x16x192xf32>
    %93 = arith.addf %87, %92 : vector<8x16x192xf32>
    %c2_46 = arith.constant 2 : index
    %c0_47 = arith.constant 0 : index
    %c0_48 = arith.constant 0 : index
    %94 = vector.load %arg9[%c2_46, %c0_47, %c0_48] : memref<18x18x192xbf16, #tpu.memory_space<vmem>>, vector<8x18x192xbf16>
    %95 = vector.extract_strided_slice %94 {offsets = [0, 0, 0], sizes = [8, 16, 192], strides = [1, 1, 1]} : vector<8x18x192xbf16> to vector<8x16x192xbf16>
    %96 = arith.extf %95 : vector<8x16x192xbf16> to vector<8x16x192xf32>
    %97 = vector.shape_cast %50 : vector<192xf32> to vector<1x1x192xf32>
    %98 = vector.broadcast %97 : vector<1x1x192xf32> to vector<8x16x192xf32>
    %99 = arith.mulf %96, %98 : vector<8x16x192xf32>
    %100 = arith.addf %93, %99 : vector<8x16x192xf32>
    %101 = vector.extract_strided_slice %94 {offsets = [0, 1, 0], sizes = [8, 16, 192], strides = [1, 1, 1]} : vector<8x18x192xbf16> to vector<8x16x192xbf16>
    %102 = arith.extf %101 : vector<8x16x192xbf16> to vector<8x16x192xf32>
    %103 = vector.shape_cast %52 : vector<192xf32> to vector<1x1x192xf32>
    %104 = vector.broadcast %103 : vector<1x1x192xf32> to vector<8x16x192xf32>
    %105 = arith.mulf %102, %104 : vector<8x16x192xf32>
    %106 = arith.addf %100, %105 : vector<8x16x192xf32>
    %107 = vector.extract_strided_slice %94 {offsets = [0, 2, 0], sizes = [8, 16, 192], strides = [1, 1, 1]} : vector<8x18x192xbf16> to vector<8x16x192xbf16>
    %108 = arith.extf %107 : vector<8x16x192xbf16> to vector<8x16x192xf32>
    %109 = vector.shape_cast %54 : vector<192xf32> to vector<1x1x192xf32>
    %110 = vector.broadcast %109 : vector<1x1x192xf32> to vector<8x16x192xf32>
    %111 = arith.mulf %108, %110 : vector<8x16x192xf32>
    %112 = arith.addf %106, %111 : vector<8x16x192xf32>
    %113 = vector.shape_cast %36 : vector<1x192xf32> to vector<1x1x192xf32>
    %114 = vector.broadcast %113 : vector<1x1x192xf32> to vector<8x16x192xf32>
    %115 = arith.addf %112, %114 : vector<8x16x192xf32>
    %cst_49 = arith.constant 0.000000e+00 : f32
    %cst_50 = arith.constant 6.000000e+00 : f32
    %116 = vector.broadcast %cst_49 : f32 to vector<8x16x192xf32>
    %117 = arith.maximumf %116, %115 : vector<8x16x192xf32>
    %118 = vector.broadcast %cst_50 : f32 to vector<8x16x192xf32>
    %119 = arith.minimumf %118, %117 : vector<8x16x192xf32>
    %120 = vector.shape_cast %119 : vector<8x16x192xf32> to vector<128x192xf32>
    %121 = arith.truncf %120 : vector<128x192xf32> to vector<128x192xbf16>
    %c0_51 = arith.constant 0 : index
    %c0_52 = arith.constant 0 : index
    %122 = vector.load %arg10[%c0_51, %c0_52] : memref<256x192xbf16, #tpu.memory_space<vmem>>, vector<128x192xbf16>
    tpu.vector_store %arg10[%c0_51, %c0_52], %121 {strides = array<i32>} : memref<256x192xbf16, #tpu.memory_space<vmem>>, vector<128x192xbf16>,
    %cst_53 = arith.constant 0.000000e+00 : f32
    %123 = vector.broadcast %cst_53 : f32 to vector<8x16x192xf32>
    %c8_54 = arith.constant 8 : index
    %c0_55 = arith.constant 0 : index
    %c0_56 = arith.constant 0 : index
    %124 = vector.load %arg9[%c8_54, %c0_55, %c0_56] : memref<18x18x192xbf16, #tpu.memory_space<vmem>>, vector<8x18x192xbf16>
    %125 = vector.extract_strided_slice %124 {offsets = [0, 0, 0], sizes = [8, 16, 192], strides = [1, 1, 1]} : vector<8x18x192xbf16> to vector<8x16x192xbf16>
    %126 = arith.extf %125 : vector<8x16x192xbf16> to vector<8x16x192xf32>
    %127 = vector.shape_cast %38 : vector<192xf32> to vector<1x1x192xf32>
    %128 = vector.broadcast %127 : vector<1x1x192xf32> to vector<8x16x192xf32>
    %129 = arith.mulf %126, %128 : vector<8x16x192xf32>
    %130 = arith.addf %123, %129 : vector<8x16x192xf32>
    %131 = vector.extract_strided_slice %124 {offsets = [0, 1, 0], sizes = [8, 16, 192], strides = [1, 1, 1]} : vector<8x18x192xbf16> to vector<8x16x192xbf16>
    %132 = arith.extf %131 : vector<8x16x192xbf16> to vector<8x16x192xf32>
    %133 = vector.shape_cast %40 : vector<192xf32> to vector<1x1x192xf32>
    %134 = vector.broadcast %133 : vector<1x1x192xf32> to vector<8x16x192xf32>
    %135 = arith.mulf %132, %134 : vector<8x16x192xf32>
    %136 = arith.addf %130, %135 : vector<8x16x192xf32>
    %137 = vector.extract_strided_slice %124 {offsets = [0, 2, 0], sizes = [8, 16, 192], strides = [1, 1, 1]} : vector<8x18x192xbf16> to vector<8x16x192xbf16>
    %138 = arith.extf %137 : vector<8x16x192xbf16> to vector<8x16x192xf32>
    %139 = vector.shape_cast %42 : vector<192xf32> to vector<1x1x192xf32>
    %140 = vector.broadcast %139 : vector<1x1x192xf32> to vector<8x16x192xf32>
    %141 = arith.mulf %138, %140 : vector<8x16x192xf32>
    %142 = arith.addf %136, %141 : vector<8x16x192xf32>
    %c9_57 = arith.constant 9 : index
    %c0_58 = arith.constant 0 : index
    %c0_59 = arith.constant 0 : index
    %143 = vector.load %arg9[%c9_57, %c0_58, %c0_59] : memref<18x18x192xbf16, #tpu.memory_space<vmem>>, vector<8x18x192xbf16>
    %144 = vector.extract_strided_slice %143 {offsets = [0, 0, 0], sizes = [8, 16, 192], strides = [1, 1, 1]} : vector<8x18x192xbf16> to vector<8x16x192xbf16>
    %145 = arith.extf %144 : vector<8x16x192xbf16> to vector<8x16x192xf32>
    %146 = vector.shape_cast %44 : vector<192xf32> to vector<1x1x192xf32>
    %147 = vector.broadcast %146 : vector<1x1x192xf32> to vector<8x16x192xf32>
    %148 = arith.mulf %145, %147 : vector<8x16x192xf32>
    %149 = arith.addf %142, %148 : vector<8x16x192xf32>
    %150 = vector.extract_strided_slice %143 {offsets = [0, 1, 0], sizes = [8, 16, 192], strides = [1, 1, 1]} : vector<8x18x192xbf16> to vector<8x16x192xbf16>
    %151 = arith.extf %150 : vector<8x16x192xbf16> to vector<8x16x192xf32>
    %152 = vector.shape_cast %46 : vector<192xf32> to vector<1x1x192xf32>
    %153 = vector.broadcast %152 : vector<1x1x192xf32> to vector<8x16x192xf32>
    %154 = arith.mulf %151, %153 : vector<8x16x192xf32>
    %155 = arith.addf %149, %154 : vector<8x16x192xf32>
    %156 = vector.extract_strided_slice %143 {offsets = [0, 2, 0], sizes = [8, 16, 192], strides = [1, 1, 1]} : vector<8x18x192xbf16> to vector<8x16x192xbf16>
    %157 = arith.extf %156 : vector<8x16x192xbf16> to vector<8x16x192xf32>
    %158 = vector.shape_cast %48 : vector<192xf32> to vector<1x1x192xf32>
    %159 = vector.broadcast %158 : vector<1x1x192xf32> to vector<8x16x192xf32>
    %160 = arith.mulf %157, %159 : vector<8x16x192xf32>
    %161 = arith.addf %155, %160 : vector<8x16x192xf32>
    %c10 = arith.constant 10 : index
    %c0_60 = arith.constant 0 : index
    %c0_61 = arith.constant 0 : index
    %162 = vector.load %arg9[%c10, %c0_60, %c0_61] : memref<18x18x192xbf16, #tpu.memory_space<vmem>>, vector<8x18x192xbf16>
    %163 = vector.extract_strided_slice %162 {offsets = [0, 0, 0], sizes = [8, 16, 192], strides = [1, 1, 1]} : vector<8x18x192xbf16> to vector<8x16x192xbf16>
    %164 = arith.extf %163 : vector<8x16x192xbf16> to vector<8x16x192xf32>
    %165 = vector.shape_cast %50 : vector<192xf32> to vector<1x1x192xf32>
    %166 = vector.broadcast %165 : vector<1x1x192xf32> to vector<8x16x192xf32>
    %167 = arith.mulf %164, %166 : vector<8x16x192xf32>
    %168 = arith.addf %161, %167 : vector<8x16x192xf32>
    %169 = vector.extract_strided_slice %162 {offsets = [0, 1, 0], sizes = [8, 16, 192], strides = [1, 1, 1]} : vector<8x18x192xbf16> to vector<8x16x192xbf16>
    %170 = arith.extf %169 : vector<8x16x192xbf16> to vector<8x16x192xf32>
    %171 = vector.shape_cast %52 : vector<192xf32> to vector<1x1x192xf32>
    %172 = vector.broadcast %171 : vector<1x1x192xf32> to vector<8x16x192xf32>
    %173 = arith.mulf %170, %172 : vector<8x16x192xf32>
    %174 = arith.addf %168, %173 : vector<8x16x192xf32>
    %175 = vector.extract_strided_slice %162 {offsets = [0, 2, 0], sizes = [8, 16, 192], strides = [1, 1, 1]} : vector<8x18x192xbf16> to vector<8x16x192xbf16>
    %176 = arith.extf %175 : vector<8x16x192xbf16> to vector<8x16x192xf32>
    %177 = vector.shape_cast %54 : vector<192xf32> to vector<1x1x192xf32>
    %178 = vector.broadcast %177 : vector<1x1x192xf32> to vector<8x16x192xf32>
    %179 = arith.mulf %176, %178 : vector<8x16x192xf32>
    %180 = arith.addf %174, %179 : vector<8x16x192xf32>
    %181 = vector.shape_cast %36 : vector<1x192xf32> to vector<1x1x192xf32>
    %182 = vector.broadcast %181 : vector<1x1x192xf32> to vector<8x16x192xf32>
    %183 = arith.addf %180, %182 : vector<8x16x192xf32>
    %cst_62 = arith.constant 0.000000e+00 : f32
    %cst_63 = arith.constant 6.000000e+00 : f32
    %184 = vector.broadcast %cst_62 : f32 to vector<8x16x192xf32>
    %185 = arith.maximumf %184, %183 : vector<8x16x192xf32>
    %186 = vector.broadcast %cst_63 : f32 to vector<8x16x192xf32>
    %187 = arith.minimumf %186, %185 : vector<8x16x192xf32>
    %188 = vector.shape_cast %187 : vector<8x16x192xf32> to vector<128x192xf32>
    %189 = arith.truncf %188 : vector<128x192xf32> to vector<128x192xbf16>
    %c128_64 = arith.constant 128 : index
    %c0_65 = arith.constant 0 : index
    %190 = vector.load %arg10[%c128_64, %c0_65] : memref<256x192xbf16, #tpu.memory_space<vmem>>, vector<128x192xbf16>
    tpu.vector_store %arg10[%c128_64, %c0_65], %189 {strides = array<i32>} : memref<256x192xbf16, #tpu.memory_space<vmem>>, vector<128x192xbf16>,
    %c0_66 = arith.constant 0 : index
    %c0_67 = arith.constant 0 : index
    %191 = vector.load %arg6[%c0_66, %c0_67] : memref<192x32xbf16, #tpu.memory_space<vmem>>, vector<192x32xbf16>
    %c0_68 = arith.constant 0 : index
    %c0_69 = arith.constant 0 : index
    %192 = vector.load %arg7[%c0_68, %c0_69] : memref<1x32xf32, #tpu.memory_space<vmem>>, vector<1x32xf32>
    %c0_70 = arith.constant 0 : index
    %c0_71 = arith.constant 0 : index
    %193 = vector.load %arg10[%c0_70, %c0_71] : memref<256x192xbf16, #tpu.memory_space<vmem>>, vector<256x192xbf16>
    %cst_72 = arith.constant dense<0.000000e+00> : vector<256x32xf32>
    %194 = tpu.matmul %193, %191, %cst_72 {dimension_numbers = #tpu.dot_dimension_numbers<[1], [0], [0], [1], [0, 0, 1, 1], [], []>} : vector<256x192xbf16>, vector<192x32xbf16>, vector<256x32xf32> -> vector<256x32xf32>
    %195 = vector.broadcast %192 : vector<1x32xf32> to vector<256x32xf32>
    %196 = arith.addf %194, %195 : vector<256x32xf32>
    %c0_73 = arith.constant 0 : index
    %c0_74 = arith.constant 0 : index
    %c0_75 = arith.constant 0 : index
    %197 = vector.load %arg1[%c0_73, %c0_74, %c0_75] : memref<1x256x32xf32, #tpu.memory_space<vmem>>, vector<1x256x32xf32>
    %198 = vector.shape_cast %197 : vector<1x256x32xf32> to vector<256x32xf32>
    %199 = arith.addf %196, %198 : vector<256x32xf32>
    %c0_76 = arith.constant 0 : index
    %c0_77 = arith.constant 0 : index
    %c0_78 = arith.constant 0 : index
    %200 = vector.load %arg8[%c0_76, %c0_77, %c0_78] : memref<1x256x32xf32, #tpu.memory_space<vmem>>, vector<1x256x32xf32>
    %201 = vector.shape_cast %200 : vector<1x256x32xf32> to vector<256x32xf32>
    %202 = vector.shape_cast %199 : vector<256x32xf32> to vector<1x256x32xf32>
    tpu.vector_store %arg8[%c0_76, %c0_77, %c0_78], %202 {strides = array<i32>} : memref<1x256x32xf32, #tpu.memory_space<vmem>>, vector<1x256x32xf32>,
    return
  }
  func.func @transform_0(%arg0: i32) -> (i32, i32, i32) {
    %c0_i32 = arith.constant 0 : i32
    %c0_i32_0 = arith.constant 0 : i32
    %c0_i32_1 = arith.constant 0 : i32
    return %arg0, %c0_i32, %c0_i32_0 : i32, i32, i32
  }
  func.func @transform_1(%arg0: i32) -> (i32, i32) {
    %c0_i32 = arith.constant 0 : i32
    %c0_i32_0 = arith.constant 0 : i32
    %c0_i32_1 = arith.constant 0 : i32
    return %c0_i32, %c0_i32_0 : i32, i32
  }
  func.func @transform_2(%arg0: i32) -> (i32, i32) {
    %c0_i32 = arith.constant 0 : i32
    %c0_i32_0 = arith.constant 0 : i32
    %c0_i32_1 = arith.constant 0 : i32
    return %c0_i32, %c0_i32_0 : i32, i32
  }
  func.func @transform_3(%arg0: i32) -> (i32, i32) {
    %c0_i32 = arith.constant 0 : i32
    %c0_i32_0 = arith.constant 0 : i32
    %c0_i32_1 = arith.constant 0 : i32
    return %c0_i32, %c0_i32_0 : i32, i32
  }
  func.func @transform_4(%arg0: i32) -> (i32, i32) {
    %c0_i32 = arith.constant 0 : i32
    %c0_i32_0 = arith.constant 0 : i32
    %c0_i32_1 = arith.constant 0 : i32
    return %c0_i32, %c0_i32_0 : i32, i32
  }
  func.func @transform_5(%arg0: i32) -> (i32, i32) {
    %c0_i32 = arith.constant 0 : i32
    %c0_i32_0 = arith.constant 0 : i32
    %c0_i32_1 = arith.constant 0 : i32
    return %c0_i32, %c0_i32_0 : i32, i32
  }
  func.func @transform_6(%arg0: i32) -> (i32, i32) {
    %c0_i32 = arith.constant 0 : i32
    %c0_i32_0 = arith.constant 0 : i32
    %c0_i32_1 = arith.constant 0 : i32
    return %c0_i32, %c0_i32_0 : i32, i32
  }
  func.func @transform_7(%arg0: i32) -> (i32, i32, i32) {
    %c0_i32 = arith.constant 0 : i32
    %c0_i32_0 = arith.constant 0 : i32
    %c0_i32_1 = arith.constant 0 : i32
    return %arg0, %c0_i32, %c0_i32_0 : i32, i32, i32
  }
}

</mosaic_0001>

<llo_original>
// kernel: inverted_residual_forward.1
$region0: #{inverted_residual_forward.1}
  #allocation0 [shape = 'u32[]', space=smem, size = 0x4, offset = 0x4, fixed_abs, tag = 'smem constant byte address 0x4 - core index']
  #allocation1 [shape = 'u32[144,128]{1,0:T(1,128)}', space=vmem, size = 0x12000, scoped, tag = 'internal scratch']
  #allocation2 [shape = 'bf16[18,18,192]{2,1,0:T(8,128)(2,1)}', space=vmem, size = 0x36000, scoped, tag = 'scratch operand']
  #allocation3 [shape = 'bf16[256,192]{1,0:T(8,128)(2,1)}', space=vmem, size = 0x20000, scoped, tag = 'scratch operand']
  %s0 = inlined_call_operand.hbm [shape: f32[2,256,32], index: 0, kind: input, shape index: {}]
  %s1 = inlined_call_operand.vmem [shape: bf16[32,192], index: 1, kind: input, shape index: {}]
  %s2 = inlined_call_operand.vmem [shape: f32[1,192], index: 2, kind: input, shape index: {}]
  %s3 = inlined_call_operand.vmem [shape: f32[9,192], index: 3, kind: input, shape index: {}]
  %s4 = inlined_call_operand.vmem [shape: f32[1,192], index: 4, kind: input, shape index: {}]
  %s5 = inlined_call_operand.vmem [shape: bf16[192,32], index: 5, kind: input, shape index: {}]
  %s6 = inlined_call_operand.vmem [shape: f32[1,32], index: 6, kind: input, shape index: {}]
  %s7 = inlined_call_operand.hbm [shape: f32[2,256,32], index: 7, kind: output, shape index: {}]
  %s8 = sld [smem:[#allocation0]]
  $region65: #{inverted_residual_forward.1} parent=0
    _
  %s10 = ssub.s32 1, %s8
  %s11 = scalar_select 0, %s10, %s8
  $region1: #{inverted_residual_forward.1} parent=0
    #allocation4 [shape = 'u8[262144]{0}', space=vmem, size = 0x40000, scoped, tag = 'input window, operand 0']
    #allocation5 [shape = 's32[2]{0}', space=sflag, size = 0x8, scoped, tag = 'scoped memory for inverted_residual_forward.1']
    #allocation6 [shape = 's32[2]{0}', space=sflag, size = 0x8, scoped, tag = 'scoped memory for inverted_residual_forward.1']
    #allocation7 [shape = 'u8[262144]{0}', space=vmem, size = 0x40000, scoped, tag = 'output window, operand 0']
    %12 = vsyncpa [#allocation5], 0
    %s13 = scalar_lea.sflag [#allocation5], 1
    %14 = vsyncpa %s13, 0
    %15 = vsyncpa [#allocation6], 0
    %s16 = scalar_lea.sflag [#allocation6], 1
    %17 = vsyncpa %s16, 0
    loop: start=0, step=1, limit=4
    $region2: #{inverted_residual_forward.1} parent=1 // loop_pre_header
      _
    $region3: #{inverted_residual_forward.1} parent=1 // loop_header
      %s19 = sphi 0, %s23
      %p20 = scmp.ge.s32.totalorder %s19, 4
      %s29 = sphi 0, %s31
      %s32 = sphi 0, %s29
      %s33 = sphi 0, %s32
      %s49 = sphi 0, %s33
      %s53 = sphi 0, %s53
      %s55 = sphi 0, %s53
      %s56 = sphi 0, %s55
      %s70 = sphi 0, %s56
      %s74 = sphi 0, %s74
      %s76 = sphi 0, %s74
      %s77 = sphi 0, %s76
      %s91 = sphi 0, %s77
      %s95 = sphi 0, %s95
      %s97 = sphi 0, %s95
      %s98 = sphi 0, %s97
      %s112 = sphi 0, %s98
      %s116 = sphi 0, %s116
      %s118 = sphi 0, %s116
      %s119 = sphi 0, %s118
      %s133 = sphi 0, %s119
      %s137 = sphi 0, %s137
      %s139 = sphi 0, %s137
      %s140 = sphi 0, %s139
      %s154 = sphi 0, %s140
      %s158 = sphi 0, %s158
      %s160 = sphi 0, %s158
      %s161 = sphi 0, %s160
      %s175 = sphi 0, %s161
      %s181 = sphi 0, %s183
      %s184 = sphi 0, %s181
      %s185 = sphi 0, %s184
      %s201 = sphi 0, %s185
    $region4: #{inverted_residual_forward.1} parent=1 // loop_header_branch
      %22 = sbr.rel (%p20) target = $region8
    $region5: #{inverted_residual_forward.1} parent=1 // loop_body
      %s24 = ssub.s32 %s19, 1
      %s25 = ssub.s32 %s19, 2
      %s26 = sadd.s32 %s19, 1
      %s27 = ssub.s32 %s19, %s26
      %p28 = scmp.eq.s32.totalorder %s27, 0
      %s30 = sadd.s32 %s29, 1
      %s31 = scalar_select %p28, %s29, %s30
      %p34 = pneg %p28
      %p35 = scmp.eq.s32.totalorder %s19, 1
      %p36 = por %p34, %p35
      %p37 = scmp.ne.s32.totalorder %s29, %s32
      %p38 = scmp.eq.s32.totalorder %s19, 0
      %p39 = por %p37, %p38
      %p40 = scmp.ne.s32.totalorder %s29, %s32
      %p41 = scmp.eq.s32.totalorder %s24, 1
      %p42 = por %p40, %p41
      %p43 = scmp.ne.s32.totalorder %s32, %s33
      %p44 = scmp.eq.s32.totalorder %s24, 0
      %p45 = por %p43, %p44
      %p46 = scmp.ne.s32.totalorder %s32, %s33
      %p47 = scmp.eq.s32.totalorder %s25, 1
      %p48 = por %p46, %p47
      %p50 = scmp.ne.s32.totalorder %s33, %s49
      %p51 = scmp.eq.s32.totalorder %s25, 0
      %p52 = por %p50, %p51
      %s54 = sadd.s32 %s53, 1
      %p57 = scmp.eq.s32.totalorder %s19, 1
      %p58 = scmp.ne.s32.totalorder %s53, %s55
      %p59 = scmp.eq.s32.totalorder %s19, 0
      %p60 = por %p58, %p59
      %p61 = scmp.ne.s32.totalorder %s53, %s55
      %p62 = scmp.eq.s32.totalorder %s24, 1
      %p63 = por %p61, %p62
      %p64 = scmp.ne.s32.totalorder %s55, %s56
      %p65 = scmp.eq.s32.totalorder %s24, 0
      %p66 = por %p64, %p65
      %p67 = scmp.ne.s32.totalorder %s55, %s56
      %p68 = scmp.eq.s32.totalorder %s25, 1
      %p69 = por %p67, %p68
      %p71 = scmp.ne.s32.totalorder %s56, %s70
      %p72 = scmp.eq.s32.totalorder %s25, 0
      %p73 = por %p71, %p72
      %s75 = sadd.s32 %s74, 1
      %p78 = scmp.eq.s32.totalorder %s19, 1
      %p79 = scmp.ne.s32.totalorder %s74, %s76
      %p80 = scmp.eq.s32.totalorder %s19, 0
      %p81 = por %p79, %p80
      %p82 = scmp.ne.s32.totalorder %s74, %s76
      %p83 = scmp.eq.s32.totalorder %s24, 1
      %p84 = por %p82, %p83
      %p85 = scmp.ne.s32.totalorder %s76, %s77
      %p86 = scmp.eq.s32.totalorder %s24, 0
      %p87 = por %p85, %p86
      %p88 = scmp.ne.s32.totalorder %s76, %s77
      %p89 = scmp.eq.s32.totalorder %s25, 1
      %p90 = por %p88, %p89
      %p92 = scmp.ne.s32.totalorder %s77, %s91
      %p93 = scmp.eq.s32.totalorder %s25, 0
      %p94 = por %p92, %p93
      %s96 = sadd.s32 %s95, 1
      %p99 = scmp.eq.s32.totalorder %s19, 1
      %p100 = scmp.ne.s32.totalorder %s95, %s97
      %p101 = scmp.eq.s32.totalorder %s19, 0
      %p102 = por %p100, %p101
      %p103 = scmp.ne.s32.totalorder %s95, %s97
      %p104 = scmp.eq.s32.totalorder %s24, 1
      %p105 = por %p103, %p104
      %p106 = scmp.ne.s32.totalorder %s97, %s98
      %p107 = scmp.eq.s32.totalorder %s24, 0
      %p108 = por %p106, %p107
      %p109 = scmp.ne.s32.totalorder %s97, %s98
      %p110 = scmp.eq.s32.totalorder %s25, 1
      %p111 = por %p109, %p110
      %p113 = scmp.ne.s32.totalorder %s98, %s112
      %p114 = scmp.eq.s32.totalorder %s25, 0
      %p115 = por %p113, %p114
      %s117 = sadd.s32 %s116, 1
      %p120 = scmp.eq.s32.totalorder %s19, 1
      %p121 = scmp.ne.s32.totalorder %s116, %s118
      %p122 = scmp.eq.s32.totalorder %s19, 0
      %p123 = por %p121, %p122
      %p124 = scmp.ne.s32.totalorder %s116, %s118
      %p125 = scmp.eq.s32.totalorder %s24, 1
      %p126 = por %p124, %p125
      %p127 = scmp.ne.s32.totalorder %s118, %s119
      %p128 = scmp.eq.s32.totalorder %s24, 0
      %p129 = por %p127, %p128
      %p130 = scmp.ne.s32.totalorder %s118, %s119
      %p131 = scmp.eq.s32.totalorder %s25, 1
      %p132 = por %p130, %p131
      %p134 = scmp.ne.s32.totalorder %s119, %s133
      %p135 = scmp.eq.s32.totalorder %s25, 0
      %p136 = por %p134, %p135
      %s138 = sadd.s32 %s137, 1
      %p141 = scmp.eq.s32.totalorder %s19, 1
      %p142 = scmp.ne.s32.totalorder %s137, %s139
      %p143 = scmp.eq.s32.totalorder %s19, 0
      %p144 = por %p142, %p143
      %p145 = scmp.ne.s32.totalorder %s137, %s139
      %p146 = scmp.eq.s32.totalorder %s24, 1
      %p147 = por %p145, %p146
      %p148 = scmp.ne.s32.totalorder %s139, %s140
      %p149 = scmp.eq.s32.totalorder %s24, 0
      %p150 = por %p148, %p149
      %p151 = scmp.ne.s32.totalorder %s139, %s140
      %p152 = scmp.eq.s32.totalorder %s25, 1
      %p153 = por %p151, %p152
      %p155 = scmp.ne.s32.totalorder %s140, %s154
      %p156 = scmp.eq.s32.totalorder %s25, 0
      %p157 = por %p155, %p156
      %s159 = sadd.s32 %s158, 1
      %p162 = scmp.eq.s32.totalorder %s19, 1
      %p163 = scmp.ne.s32.totalorder %s158, %s160
      %p164 = scmp.eq.s32.totalorder %s19, 0
      %p165 = por %p163, %p164
      %p166 = scmp.ne.s32.totalorder %s158, %s160
      %p167 = scmp.eq.s32.totalorder %s24, 1
      %p168 = por %p166, %p167
      %p169 = scmp.ne.s32.totalorder %s160, %s161
      %p170 = scmp.eq.s32.totalorder %s24, 0
      %p171 = por %p169, %p170
      %p172 = scmp.ne.s32.totalorder %s160, %s161
      %p173 = scmp.eq.s32.totalorder %s25, 1
      %p174 = por %p172, %p173
      %p176 = scmp.ne.s32.totalorder %s161, %s175
      %p177 = scmp.eq.s32.totalorder %s25, 0
      %p178 = por %p176, %p177
      %s179 = ssub.s32 %s19, %s26
      %p180 = scmp.eq.s32.totalorder %s179, 0
      %s182 = sadd.s32 %s181, 1
      %s183 = scalar_select %p180, %s181, %s182
      %p186 = pneg %p180
      %p187 = scmp.eq.s32.totalorder %s19, 1
      %p188 = por %p186, %p187
      %p189 = scmp.ne.s32.totalorder %s181, %s184
      %p190 = scmp.eq.s32.totalorder %s19, 0
      %p191 = por %p189, %p190
      %p192 = scmp.ne.s32.totalorder %s181, %s184
      %p193 = scmp.eq.s32.totalorder %s24, 1
      %p194 = por %p192, %p193
      %p195 = scmp.ne.s32.totalorder %s184, %s185
      %p196 = scmp.eq.s32.totalorder %s24, 0
      %p197 = por %p195, %p196
      %p198 = scmp.ne.s32.totalorder %s184, %s185
      %p199 = scmp.eq.s32.totalorder %s25, 1
      %p200 = por %p198, %p199
      %p202 = scmp.ne.s32.totalorder %s185, %s201
      %p203 = scmp.eq.s32.totalorder %s25, 0
      %p204 = por %p202, %p203
      %p205 = scmp.le.s32.totalorder 1, %s19
      %p206 = scmp.lt.s32.totalorder %s19, 3
      %p207 = pnand %p205, %p206
      %p208 = pneg %p207
      // Predicated region
      $region9: #{inverted_residual_forward.1} parent=5 // pred_check
        _
      $region10: #{inverted_residual_forward.1} parent=5 // pred_check_branch
        %210 = sbr.rel (%p207) target = $region12
      $region11: #{inverted_residual_forward.1} parent=5 // pred_region
        %s211 = ssub.s32 %s19, 1
        // Predicated region
        $region13: #{inverted_residual_forward.1} parent=11 // pred_check
          %p212 = pneg %p66
        $region14: #{inverted_residual_forward.1} parent=11 // pred_check_branch
          %214 = sbr.rel (%p212) target = $region16
        $region15: #{inverted_residual_forward.1} parent=11 // pred_region
          _
        $region16: #{inverted_residual_forward.1} parent=11 // pred_fallthru
          _
        // Predicated region
        $region17: #{inverted_residual_forward.1} parent=11 // pred_check
          %p215 = pneg %p87
        $region18: #{inverted_residual_forward.1} parent=11 // pred_check_branch
          %217 = sbr.rel (%p215) target = $region20
        $region19: #{inverted_residual_forward.1} parent=11 // pred_region
          _
        $region20: #{inverted_residual_forward.1} parent=11 // pred_fallthru
          _
        // Predicated region
        $region21: #{inverted_residual_forward.1} parent=11 // pred_check
          %p218 = pneg %p108
        $region22: #{inverted_residual_forward.1} parent=11 // pred_check_branch
          %220 = sbr.rel (%p218) target = $region24
        $region23: #{inverted_residual_forward.1} parent=11 // pred_region
          _
        $region24: #{inverted_residual_forward.1} parent=11 // pred_fallthru
          _
        // Predicated region
        $region25: #{inverted_residual_forward.1} parent=11 // pred_check
          %p221 = pneg %p129
        $region26: #{inverted_residual_forward.1} parent=11 // pred_check_branch
          %223 = sbr.rel (%p221) target = $region28
        $region27: #{inverted_residual_forward.1} parent=11 // pred_region
          _
        $region28: #{inverted_residual_forward.1} parent=11 // pred_fallthru
          _
        // Predicated region
        $region29: #{inverted_residual_forward.1} parent=11 // pred_check
          %p224 = pneg %p150
        $region30: #{inverted_residual_forward.1} parent=11 // pred_check_branch
          %226 = sbr.rel (%p224) target = $region32
        $region31: #{inverted_residual_forward.1} parent=11 // pred_region
          _
        $region32: #{inverted_residual_forward.1} parent=11 // pred_fallthru
          _
        // Predicated region
        $region33: #{inverted_residual_forward.1} parent=11 // pred_check
          %p227 = pneg %p171
        $region34: #{inverted_residual_forward.1} parent=11 // pred_check_branch
          %229 = sbr.rel (%p227) target = $region36
        $region35: #{inverted_residual_forward.1} parent=11 // pred_region
          _
        $region36: #{inverted_residual_forward.1} parent=11 // pred_fallthru
          _
      $region12: #{inverted_residual_forward.1} parent=5 // pred_fallthru
        _
      %p230 = scmp.lt.s32.totalorder %s19, 2
      // Predicated region
      $region37: #{inverted_residual_forward.1} parent=5 // pred_check
        %p231 = pneg %p230
      $region38: #{inverted_residual_forward.1} parent=5 // pred_check_branch
        %233 = sbr.rel (%p231) target = $region40
      $region39: #{inverted_residual_forward.1} parent=5 // pred_region
        // Predicated region
        $region41: #{inverted_residual_forward.1} parent=39 // pred_check
          %p234 = pneg %p39
        $region42: #{inverted_residual_forward.1} parent=39 // pred_check_branch
          %236 = sbr.rel (%p234) target = $region44
        $region43: #{inverted_residual_forward.1} parent=39 // pred_region
          %s237 = sand.u32 %s29, 1
          %s238 = scalar_lea.sflag [#allocation5], %s237
          %s239 = sand.u32 %s29, 1
          %s240 = smul.addr %s239, 256
          %s241 = scalar_lea.vmem [#allocation4], %s240
          %s243 = ssub.s32 4096, 4096
          %244 = vsyncadd %s238, %s243
          %s245 = smul.addr %s19, 32
          %s246 = smul.addr %s245, 128
          %s247 = scalar_lea.hbm %s0, %s246
          %s248 = sshll.u32 %s241, 4
          %s249 = int_to_ptr.vmem [resolvable:$true] %s248
          %254 = dma.hbm_to_vmem [thread:$0]  %s247, 4096, %s249, %s238, 128, 128, 8
        $region44: #{inverted_residual_forward.1} parent=39 // pred_fallthru
          _
      $region40: #{inverted_residual_forward.1} parent=5 // pred_fallthru
        _
      %p255 = scmp.le.s32.totalorder 1, %s19
      %p256 = scmp.lt.s32.totalorder %s19, 3
      %p257 = pnand %p255, %p256
      %p258 = pneg %p257
      // Predicated region
      $region45: #{inverted_residual_forward.1} parent=5 // pred_check
        _
      $region46: #{inverted_residual_forward.1} parent=5 // pred_check_branch
        %260 = sbr.rel (%p257) target = $region48
      $region47: #{inverted_residual_forward.1} parent=5 // pred_region
        %s261 = ssub.s32 %s19, 1
        %s262 = sand.u32 %s32, 1
        %s263 = scalar_lea.sflag [#allocation5], %s262
        %s264 = sand.u32 %s32, 1
        %s265 = smul.addr %s264, 256
        %s266 = scalar_lea.vmem [#allocation4], %s265
        // Predicated region
        $region49: #{inverted_residual_forward.1} parent=47 // pred_check
          %p267 = pneg %p45
        $region50: #{inverted_residual_forward.1} parent=47 // pred_check_branch
          %269 = sbr.rel (%p267) target = $region52
        $region51: #{inverted_residual_forward.1} parent=47 // pred_region
          %270 = dma.done %s263, 4096
        $region52: #{inverted_residual_forward.1} parent=47 // pred_fallthru
          _
        %s271 = sand.u32 %s32, 1
        %s272 = scalar_lea.sflag [#allocation5], %s271
        %s273 = sand.u32 %s32, 1
        %s274 = smul.addr %s273, 256
        %s275 = scalar_lea.vmem [#allocation4], %s274
        %p276 = pneg %p45
        %p277 = pneg %p42
        %p278 = pneg %p66
        %p279 = pneg %p63
        %p280 = pneg %p87
        %p281 = pneg %p84
        %p282 = pneg %p108
        %p283 = pneg %p105
        %p284 = pneg %p129
        %p285 = pneg %p126
        %p286 = pneg %p150
        %p287 = pneg %p147
        %p288 = pneg %p171
        %p289 = pneg %p168
        %p290 = pneg %p197
        %p291 = pneg %p194
        %s292 = sand.u32 %s184, 1
        %s293 = scalar_lea.sflag [#allocation6], %s292
        %s294 = sand.u32 %s184, 1
        %s295 = smul.addr %s294, 256
        %s296 = scalar_lea.vmem [#allocation7], %s295
        %vm298 = vcmask 1043456
        %vm299 = vcmask 523268
        %vm300 = vmor %vm299, %vm298
        %301 = vst.msk [vmem:[#allocation2] sm:$0xff] %vm300, 0
        %302 = vst.msk [vmem:[#allocation2 + $0x8] sm:$0xff] %vm300, 0
        %vm303 = vcmask 1040384
        %vm304 = vcmask 520196
        %vm305 = vmor %vm304, %vm303
        %306 = vst.msk [vmem:[#allocation2 + $0x10] sm:$0x11] %vm305, 0
        %s307 = scalar_lea.vmem [#allocation2], 408
        %308 = vst.msk [vmem:[%s307] sm:$0xff] %vm300, 0
        %309 = vst.msk [vmem:[%s307 + $0x8] sm:$0xff] %vm300, 0
        %310 = vst.msk [vmem:[%s307 + $0x10] sm:$0x11] %vm305, 0
        %v311 = vld [vmem:[%s1] sm:$0xff]
        %v312 = vld [vmem:[%s1 + $0x8] sm:$0xff]
        %v313 = vld [vmem:[%s1 + $0x10] sm:$0xff]
        %v314 = vld [vmem:[%s1 + $0x18] sm:$0xff]
        %v315 = vld [vmem:[%s2] sm:$0x3]
        %v316 = vld [vmem:[%s266] sm:$0xff]
        %v317 = vld [vmem:[%s266 + $0x8] sm:$0xff]
        %v318 = vld [vmem:[%s266 + $0x10] sm:$0xff]
        %v319 = vld [vmem:[%s266 + $0x18] sm:$0xff]
        %v320 = vld [vmem:[%s266 + $0x20] sm:$0xff]
        %v321 = vld [vmem:[%s266 + $0x28] sm:$0xff]
        %v322 = vld [vmem:[%s266 + $0x30] sm:$0xff]
        %v323 = vld [vmem:[%s266 + $0x38] sm:$0xff]
        %v324 = vld [vmem:[%s266 + $0x40] sm:$0xff]
        %v325 = vld [vmem:[%s266 + $0x48] sm:$0xff]
        %v326 = vld [vmem:[%s266 + $0x50] sm:$0xff]
        %v327 = vld [vmem:[%s266 + $0x58] sm:$0xff]
        %v328 = vld [vmem:[%s266 + $0x60] sm:$0xff]
        %v329 = vld [vmem:[%s266 + $0x68] sm:$0xff]
        %v330 = vld [vmem:[%s266 + $0x70] sm:$0xff]
        %v331 = vld [vmem:[%s266 + $0x78] sm:$0xff]
        %v332 = vpack.c.bf16 %v317, %v316
        %v333 = vpack.c.bf16 %v319, %v318
        %v334 = vpack.c.bf16 %v321, %v320
        %v335 = vpack.c.bf16 %v323, %v322
        %v336 = vpack.c.bf16 %v325, %v324
        %v337 = vpack.c.bf16 %v327, %v326
        %v338 = vpack.c.bf16 %v329, %v328
        %v339 = vpack.c.bf16 %v331, %v330
        %v341 = vlaneseq
        %v342 = vshrl.u32 %v341, 7
        %v343 = vsub.s32 0, %v342
        %v344 = vrot.slane %v315, %v343
        %v345 = vlaneseq
        %v346 = vshrl.u32 %v345, 7
        %v347 = vsub.s32 1, %v346
        %v348 = vrot.slane %v315, %v347
        %v355 = vunpack.c.l.b16 %v311
        %v356 = vunpack.c.h.b16 %v311
        %v357 = vunpack.c.l.b16 %v312
        %v358 = vunpack.c.h.b16 %v312
        %v359 = vunpack.c.l.b16 %v313
        %v360 = vunpack.c.h.b16 %v313
        %v361 = vunpack.c.l.b16 %v314
        %v362 = vunpack.c.h.b16 %v314
        %v363 = vpack.c.b16 %v357, %v355
        %v364 = vpack.c.b16 %v358, %v356
        %v365 = vpack.c.b16 %v361, %v359
        %v366 = vpack.c.b16 %v362, %v360
        %vm371 = vcmask 261120
        %v373 = vsel %vm371, %v332, 0
        %v376 = vsel %vm371, %v333, 0
        %v379 = vsel %vm371, %v334, 0
        %v382 = vsel %vm371, %v335, 0
        %v385 = vsel %vm371, %v336, 0
        %v388 = vsel %vm371, %v337, 0
        %v391 = vsel %vm371, %v338, 0
        %v394 = vsel %vm371, %v339, 0
        %396 = vmatprep.subr.bf16.mxu0 0
        %397 = vmatpush1.bf16.msra.mxu0 0
        %398 = vmatprep.subr.bf16.mxu0 0
        %399 = vmatpush1.bf16.msra.mxu0 0
        %400 = vmatprep.subr.bf16.mxu0 0
        %401 = vmatpush1.bf16.msra.mxu0 0
        %402 = vmatprep.subr.bf16.mxu0 0
        %403 = vmatpush1.bf16.msra.mxu0 0
        %404 = vmatprep.subr.bf16.mxu0 0
        %405 = vmatpush1.bf16.msra.mxu0 0
        %406 = vmatprep.subr.bf16.mxu0 0
        %407 = vmatpush1.bf16.msra.mxu0 0
        %408 = vmatprep.subr.bf16.mxu0 %v366
        %409 = vmatpush1.bf16.msra.mxu0 %v365
        %410 = vmatprep.subr.bf16.mxu0 %v364
        %411 = vmatpush1.bf16.msra.mxu0 %v363
        %412 = vmatprep.subr.bf16.mxu0 0
        %413 = vmatpush2.bf16.msra.mxu0 0
        %414 = vmatprep.subr.bf16.mxu0 0
        %415 = vmatpush2.bf16.msra.mxu0 0
        %416 = vmatprep.subr.bf16.mxu0 0
        %417 = vmatpush2.bf16.msra.mxu0 0
        %418 = vmatprep.subr.bf16.mxu0 0
        %419 = vmatpush2.bf16.msra.mxu0 0
        %420 = vmatprep.subr.bf16.mxu0 0
        %421 = vmatpush2.bf16.msra.mxu0 0
        %422 = vmatprep.subr.bf16.mxu0 0
        %423 = vmatpush2.bf16.msra.mxu0 0
        %424 = vmatprep.subr.bf16.mxu0 0
        %425 = vmatpush2.bf16.msra.mxu0 0
        %426 = vmatprep.subr.bf16.mxu0 0
        %427 = vmatpush2.bf16.msra.mxu0 0
        %428 = vmatprep.mubr.bf16.mxu0 0
        %429 = vmatmul.mubr.bf16.gmra.mxu0 %v373
        %v430 = vpop.f32.mrf.mxu0
        %v431 = vadd.f32 %v344, %v430
        %v432 = vpop.f32.mrf.mxu0
        %v433 = vadd.f32 %v348, %v432
        %v434 = vpop.f32.mrf.mxu0
        %v435 = vadd.f32 %v344, %v434
        %v436 = vpop.f32.mrf.mxu0
        %v437 = vadd.f32 %v348, %v436
        %438 = vmatprep.mubr.bf16.mxu0 0
        %439 = vmatmul.mubr.bf16.gmra.mxu0 %v376
        %v440 = vpop.f32.mrf.mxu0
        %v441 = vadd.f32 %v344, %v440
        %v442 = vpop.f32.mrf.mxu0
        %v443 = vadd.f32 %v348, %v442
        %v444 = vpop.f32.mrf.mxu0
        %v445 = vadd.f32 %v344, %v444
        %v446 = vpop.f32.mrf.mxu0
        %v447 = vadd.f32 %v348, %v446
        %448 = vmatprep.mubr.bf16.mxu0 0
        %449 = vmatmul.mubr.bf16.gmra.mxu0 %v379
        %v450 = vpop.f32.mrf.mxu0
        %v451 = vadd.f32 %v344, %v450
        %v452 = vpop.f32.mrf.mxu0
        %v453 = vadd.f32 %v348, %v452
        %v454 = vpop.f32.mrf.mxu0
        %v455 = vadd.f32 %v344, %v454
        %v456 = vpop.f32.mrf.mxu0
        %v457 = vadd.f32 %v348, %v456
        %458 = vmatprep.mubr.bf16.mxu0 0
        %459 = vmatmul.mubr.bf16.gmra.mxu0 %v382
        %v460 = vpop.f32.mrf.mxu0
        %v461 = vadd.f32 %v344, %v460
        %v462 = vpop.f32.mrf.mxu0
        %v463 = vadd.f32 %v348, %v462
        %v464 = vpop.f32.mrf.mxu0
        %v465 = vadd.f32 %v344, %v464
        %v466 = vpop.f32.mrf.mxu0
        %v467 = vadd.f32 %v348, %v466
        %468 = vmatprep.mubr.bf16.mxu0 0
        %469 = vmatmul.mubr.bf16.gmra.mxu0 %v385
        %v470 = vpop.f32.mrf.mxu0
        %v471 = vadd.f32 %v344, %v470
        %v472 = vpop.f32.mrf.mxu0
        %v473 = vadd.f32 %v348, %v472
        %v474 = vpop.f32.mrf.mxu0
        %v475 = vadd.f32 %v344, %v474
        %v476 = vpop.f32.mrf.mxu0
        %v477 = vadd.f32 %v348, %v476
        %478 = vmatprep.mubr.bf16.mxu0 0
        %479 = vmatmul.mubr.bf16.gmra.mxu0 %v388
        %v480 = vpop.f32.mrf.mxu0
        %v481 = vadd.f32 %v344, %v480
        %v482 = vpop.f32.mrf.mxu0
        %v483 = vadd.f32 %v348, %v482
        %v484 = vpop.f32.mrf.mxu0
        %v485 = vadd.f32 %v344, %v484
        %v486 = vpop.f32.mrf.mxu0
        %v487 = vadd.f32 %v348, %v486
        %488 = vmatprep.mubr.bf16.mxu0 0
        %489 = vmatmul.mubr.bf16.gmra.mxu0 %v391
        %v490 = vpop.f32.mrf.mxu0
        %v491 = vadd.f32 %v344, %v490
        %v492 = vpop.f32.mrf.mxu0
        %v493 = vadd.f32 %v348, %v492
        %v494 = vpop.f32.mrf.mxu0
        %v495 = vadd.f32 %v344, %v494
        %v496 = vpop.f32.mrf.mxu0
        %v497 = vadd.f32 %v348, %v496
        %498 = vmatprep.mubr.bf16.mxu0 0
        %499 = vmatmul.mubr.bf16.gmra.mxu0 %v394
        %v500 = vpop.f32.mrf.mxu0
        %v501 = vadd.f32 %v344, %v500
        %v502 = vpop.f32.mrf.mxu0
        %v503 = vadd.f32 %v348, %v502
        %v504 = vpop.f32.mrf.mxu0
        %v505 = vadd.f32 %v344, %v504
        %v506 = vpop.f32.mrf.mxu0
        %v507 = vadd.f32 %v348, %v506
        %508 = vdwg.mxu0
        %v509 = vmax.f32 %v431, 0.0
        %v510 = vmax.f32 %v433, 0.0
        %v511 = vmax.f32 %v435, 0.0
        %v512 = vmax.f32 %v437, 0.0
        %v513 = vmax.f32 %v441, 0.0
        %v514 = vmax.f32 %v443, 0.0
        %v515 = vmax.f32 %v445, 0.0
        %v516 = vmax.f32 %v447, 0.0
        %v517 = vmax.f32 %v451, 0.0
        %v518 = vmax.f32 %v453, 0.0
        %v519 = vmax.f32 %v455, 0.0
        %v520 = vmax.f32 %v457, 0.0
        %v521 = vmax.f32 %v461, 0.0
        %v522 = vmax.f32 %v463, 0.0
        %v523 = vmax.f32 %v465, 0.0
        %v524 = vmax.f32 %v467, 0.0
        %v525 = vmax.f32 %v471, 0.0
        %v526 = vmax.f32 %v473, 0.0
        %v527 = vmax.f32 %v475, 0.0
        %v528 = vmax.f32 %v477, 0.0
        %v529 = vmax.f32 %v481, 0.0
        %v530 = vmax.f32 %v483, 0.0
        %v531 = vmax.f32 %v485, 0.0
        %v532 = vmax.f32 %v487, 0.0
        %v533 = vmax.f32 %v491, 0.0
        %v534 = vmax.f32 %v493, 0.0
        %v535 = vmax.f32 %v495, 0.0
        %v536 = vmax.f32 %v497, 0.0
        %v537 = vmax.f32 %v501, 0.0
        %v538 = vmax.f32 %v503, 0.0
        %v539 = vmax.f32 %v505, 0.0
        %v540 = vmax.f32 %v507, 0.0
        %v541 = vmin.f32 %v509, 6.0
        %v542 = vmin.f32 %v510, 6.0
        %v543 = vmin.f32 %v511, 6.0
        %v544 = vmin.f32 %v512, 6.0
        %v545 = vmin.f32 %v513, 6.0
        %v546 = vmin.f32 %v514, 6.0
        %v547 = vmin.f32 %v515, 6.0
        %v548 = vmin.f32 %v516, 6.0
        %v549 = vmin.f32 %v517, 6.0
        %v550 = vmin.f32 %v518, 6.0
        %v551 = vmin.f32 %v519, 6.0
        %v552 = vmin.f32 %v520, 6.0
        %v553 = vmin.f32 %v521, 6.0
        %v554 = vmin.f32 %v522, 6.0
        %v555 = vmin.f32 %v523, 6.0
        %v556 = vmin.f32 %v524, 6.0
        %v557 = vmin.f32 %v525, 6.0
        %v558 = vmin.f32 %v526, 6.0
        %v559 = vmin.f32 %v527, 6.0
        %v560 = vmin.f32 %v528, 6.0
        %v561 = vmin.f32 %v529, 6.0
        %v562 = vmin.f32 %v530, 6.0
        %v563 = vmin.f32 %v531, 6.0
        %v564 = vmin.f32 %v532, 6.0
        %v565 = vmin.f32 %v533, 6.0
        %v566 = vmin.f32 %v534, 6.0
        %v567 = vmin.f32 %v535, 6.0
        %v568 = vmin.f32 %v536, 6.0
        %v569 = vmin.f32 %v537, 6.0
        %v570 = vmin.f32 %v538, 6.0
        %v571 = vmin.f32 %v539, 6.0
        %v572 = vmin.f32 %v540, 6.0
        %v573 = vpack.c.bf16 %v543, %v541
        %v574 = vpack.c.bf16 %v544, %v542
        %v575 = vpack.c.bf16 %v547, %v545
        %v576 = vpack.c.bf16 %v548, %v546
        %v577 = vpack.c.bf16 %v551, %v549
        %v578 = vpack.c.bf16 %v552, %v550
        %v579 = vpack.c.bf16 %v555, %v553
        %v580 = vpack.c.bf16 %v556, %v554
        %v581 = vpack.c.bf16 %v559, %v557
        %v582 = vpack.c.bf16 %v560, %v558
        %v583 = vpack.c.bf16 %v563, %v561
        %v584 = vpack.c.bf16 %v564, %v562
        %v585 = vpack.c.bf16 %v567, %v565
        %v586 = vpack.c.bf16 %v568, %v566
        %v587 = vpack.c.bf16 %v571, %v569
        %v588 = vpack.c.bf16 %v572, %v570
        %v590 = vshrl.u32 %v573, 16
        %v592 = vrot.slane %v590, 7
        %v593 = vshll.u32 %v573, 16
        %v595 = vor.u32 %v592, %v593
        %v597 = vshrl.u32 %v574, 16
        %v599 = vrot.slane %v597, 7
        %v600 = vshll.u32 %v574, 16
        %v602 = vor.u32 %v599, %v600
        %v604 = vshrl.u32 %v575, 16
        %v606 = vrot.slane %v604, 7
        %v607 = vshll.u32 %v575, 16
        %v609 = vor.u32 %v606, %v607
        %v611 = vshrl.u32 %v576, 16
        %v613 = vrot.slane %v611, 7
        %v614 = vshll.u32 %v576, 16
        %v616 = vor.u32 %v613, %v614
        %v618 = vshrl.u32 %v577, 16
        %v620 = vrot.slane %v618, 7
        %v621 = vshll.u32 %v577, 16
        %v623 = vor.u32 %v620, %v621
        %v625 = vshrl.u32 %v578, 16
        %v627 = vrot.slane %v625, 7
        %v628 = vshll.u32 %v578, 16
        %v630 = vor.u32 %v627, %v628
        %v632 = vshrl.u32 %v579, 16
        %v634 = vrot.slane %v632, 7
        %v635 = vshll.u32 %v579, 16
        %v637 = vor.u32 %v634, %v635
        %v639 = vshrl.u32 %v580, 16
        %v641 = vrot.slane %v639, 7
        %v642 = vshll.u32 %v580, 16
        %v644 = vor.u32 %v641, %v642
        %v646 = vshrl.u32 %v581, 16
        %v648 = vrot.slane %v646, 7
        %v649 = vshll.u32 %v581, 16
        %v651 = vor.u32 %v648, %v649
        %v653 = vshrl.u32 %v582, 16
        %v655 = vrot.slane %v653, 7
        %v656 = vshll.u32 %v582, 16
        %v658 = vor.u32 %v655, %v656
        %v660 = vshrl.u32 %v583, 16
        %v662 = vrot.slane %v660, 7
        %v663 = vshll.u32 %v583, 16
        %v665 = vor.u32 %v662, %v663
        %v667 = vshrl.u32 %v584, 16
        %v669 = vrot.slane %v667, 7
        %v670 = vshll.u32 %v584, 16
        %v672 = vor.u32 %v669, %v670
        %v674 = vshrl.u32 %v585, 16
        %v676 = vrot.slane %v674, 7
        %v677 = vshll.u32 %v585, 16
        %v679 = vor.u32 %v676, %v677
        %v681 = vshrl.u32 %v586, 16
        %v683 = vrot.slane %v681, 7
        %v684 = vshll.u32 %v586, 16
        %v686 = vor.u32 %v683, %v684
        %v688 = vshrl.u32 %v587, 16
        %v690 = vrot.slane %v688, 7
        %v691 = vshll.u32 %v587, 16
        %v693 = vor.u32 %v690, %v691
        %v695 = vshrl.u32 %v588, 16
        %v697 = vrot.slane %v695, 7
        %v698 = vshll.u32 %v588, 16
        %v700 = vor.u32 %v697, %v698
        %vm733 = vcmask 1040384
        %vm734 = vsmask.f32 256
        %vm735 = vmand %vm733, %vm734
        %v736 = vsel %vm735, 0, %v595
        %v737 = vsel %vm735, 0, %v602
        %v738 = vsel %vm735, 0, %v609
        %v739 = vsel %vm735, 0, %v616
        %v740 = vsel %vm735, 0, %v623
        %v741 = vsel %vm735, 0, %v630
        %v742 = vsel %vm735, 0, %v637
        %v743 = vsel %vm735, 0, %v644
        %v744 = vsel %vm735, 0, %v651
        %v745 = vsel %vm735, 0, %v658
        %v746 = vsel %vm735, 0, %v665
        %v747 = vsel %vm735, 0, %v672
        %v748 = vsel %vm735, 0, %v679
        %v749 = vsel %vm735, 0, %v686
        %v750 = vsel %vm735, 0, %v693
        %v751 = vsel %vm735, 0, %v700
        %v752 = vsel %vm735, %v592, 0
        %v753 = vsel %vm735, %v599, 0
        %v754 = vsel %vm735, %v606, 0
        %v755 = vsel %vm735, %v613, 0
        %v756 = vsel %vm735, %v620, 0
        %v757 = vsel %vm735, %v627, 0
        %v758 = vsel %vm735, %v634, 0
        %v759 = vsel %vm735, %v641, 0
        %v760 = vsel %vm735, %v648, 0
        %v761 = vsel %vm735, %v655, 0
        %v762 = vsel %vm735, %v662, 0
        %v763 = vsel %vm735, %v669, 0
        %v764 = vsel %vm735, %v676, 0
        %v765 = vsel %vm735, %v683, 0
        %v766 = vsel %vm735, %v690, 0
        %v767 = vsel %vm735, %v697, 0
        %v800 = vunpack.c.l.b16 %v736
        %v801 = vunpack.c.l.b16 %v737
        %v802 = vunpack.c.h.b16 %v736
        %v803 = vunpack.c.h.b16 %v737
        %v804 = vunpack.c.l.b16 %v752
        %v805 = vunpack.c.l.b16 %v753
        %v806 = vunpack.c.l.b16 %v738
        %v807 = vunpack.c.l.b16 %v739
        %v808 = vunpack.c.h.b16 %v738
        %v809 = vunpack.c.h.b16 %v739
        %v810 = vunpack.c.l.b16 %v754
        %v811 = vunpack.c.l.b16 %v755
        %v812 = vunpack.c.l.b16 %v740
        %v813 = vunpack.c.l.b16 %v741
        %v814 = vunpack.c.h.b16 %v740
        %v815 = vunpack.c.h.b16 %v741
        %v816 = vunpack.c.l.b16 %v756
        %v817 = vunpack.c.l.b16 %v757
        %v818 = vunpack.c.l.b16 %v742
        %v819 = vunpack.c.l.b16 %v743
        %v820 = vunpack.c.h.b16 %v742
        %v821 = vunpack.c.h.b16 %v743
        %v822 = vunpack.c.l.b16 %v758
        %v823 = vunpack.c.l.b16 %v759
        %v824 = vunpack.c.l.b16 %v744
        %v825 = vunpack.c.l.b16 %v745
        %v826 = vunpack.c.h.b16 %v744
        %v827 = vunpack.c.h.b16 %v745
        %v828 = vunpack.c.l.b16 %v760
        %v829 = vunpack.c.l.b16 %v761
        %v830 = vunpack.c.l.b16 %v746
        %v831 = vunpack.c.l.b16 %v747
        %v832 = vunpack.c.h.b16 %v746
        %v833 = vunpack.c.h.b16 %v747
        %v834 = vunpack.c.l.b16 %v762
        %v835 = vunpack.c.l.b16 %v763
        %v836 = vunpack.c.l.b16 %v748
        %v837 = vunpack.c.l.b16 %v749
        %v838 = vunpack.c.h.b16 %v748
        %v839 = vunpack.c.h.b16 %v749
        %v840 = vunpack.c.l.b16 %v764
        %v841 = vunpack.c.l.b16 %v765
        %v842 = vunpack.c.l.b16 %v750
        %v843 = vunpack.c.l.b16 %v751
        %v844 = vunpack.c.h.b16 %v750
        %v845 = vunpack.c.h.b16 %v751
        %v846 = vunpack.c.l.b16 %v766
        %v847 = vunpack.c.l.b16 %v767
        %v848 = vpack.c.b16 %v801, %v800
        %v849 = vpack.c.b16 %v803, %v802
        %v850 = vpack.c.b16 %v805, %v804
        %v851 = vpack.c.b16 %v807, %v806
        %v852 = vpack.c.b16 %v809, %v808
        %v853 = vpack.c.b16 %v811, %v810
        %v854 = vpack.c.b16 %v813, %v812
        %v855 = vpack.c.b16 %v815, %v814
        %v856 = vpack.c.b16 %v817, %v816
        %v857 = vpack.c.b16 %v819, %v818
        %v858 = vpack.c.b16 %v821, %v820
        %v859 = vpack.c.b16 %v823, %v822
        %v860 = vpack.c.b16 %v825, %v824
        %v861 = vpack.c.b16 %v827, %v826
        %v862 = vpack.c.b16 %v829, %v828
        %v863 = vpack.c.b16 %v831, %v830
        %v864 = vpack.c.b16 %v833, %v832
        %v865 = vpack.c.b16 %v835, %v834
        %v866 = vpack.c.b16 %v837, %v836
        %v867 = vpack.c.b16 %v839, %v838
        %v868 = vpack.c.b16 %v841, %v840
        %v869 = vpack.c.b16 %v843, %v842
        %v870 = vpack.c.b16 %v845, %v844
        %v871 = vpack.c.b16 %v847, %v846
        %s896 = scalar_lea.vmem [#allocation2], 24
        %897 = vst.msk [vmem:[%s896] sm:$0xff] %vm300, %v848
        %898 = vst.msk [vmem:[%s896 + $0x8] sm:$0xff] %vm300, %v849
        %899 = vst.msk [vmem:[%s896 + $0x10] sm:$0x11] %vm305, %v850
        %900 = vst.msk [vmem:[%s896 + $0x18] sm:$0xff] %vm300, %v851
        %901 = vst.msk [vmem:[%s896 + $0x20] sm:$0xff] %vm300, %v852
        %902 = vst.msk [vmem:[%s896 + $0x28] sm:$0x11] %vm305, %v853
        %903 = vst.msk [vmem:[%s896 + $0x30] sm:$0xff] %vm300, %v854
        %904 = vst.msk [vmem:[%s896 + $0x38] sm:$0xff] %vm300, %v855
        %905 = vst.msk [vmem:[%s896 + $0x40] sm:$0x11] %vm305, %v856
        %906 = vst.msk [vmem:[%s896 + $0x48] sm:$0xff] %vm300, %v857
        %907 = vst.msk [vmem:[%s896 + $0x50] sm:$0xff] %vm300, %v858
        %908 = vst.msk [vmem:[%s896 + $0x58] sm:$0x11] %vm305, %v859
        %909 = vst.msk [vmem:[%s896 + $0x60] sm:$0xff] %vm300, %v860
        %910 = vst.msk [vmem:[%s896 + $0x68] sm:$0xff] %vm300, %v861
        %911 = vst.msk [vmem:[%s896 + $0x70] sm:$0x11] %vm305, %v862
        %912 = vst.msk [vmem:[%s896 + $0x78] sm:$0xff] %vm300, %v863
        %913 = vst.msk [vmem:[%s896 + $0x80] sm:$0xff] %vm300, %v864
        %914 = vst.msk [vmem:[%s896 + $0x88] sm:$0x11] %vm305, %v865
        %915 = vst.msk [vmem:[%s896 + $0x90] sm:$0xff] %vm300, %v866
        %916 = vst.msk [vmem:[%s896 + $0x98] sm:$0xff] %vm300, %v867
        %917 = vst.msk [vmem:[%s896 + $0xa0] sm:$0x11] %vm305, %v868
        %918 = vst.msk [vmem:[%s896 + $0xa8] sm:$0xff] %vm300, %v869
        %919 = vst.msk [vmem:[%s896 + $0xb0] sm:$0xff] %vm300, %v870
        %920 = vst.msk [vmem:[%s896 + $0xb8] sm:$0x11] %vm305, %v871
        %v921 = vld [vmem:[%s266 + $0x80] sm:$0xff]
        %v922 = vld [vmem:[%s266 + $0x88] sm:$0xff]
        %v923 = vld [vmem:[%s266 + $0x90] sm:$0xff]
        %v924 = vld [vmem:[%s266 + $0x98] sm:$0xff]
        %v925 = vld [vmem:[%s266 + $0xa0] sm:$0xff]
        %v926 = vld [vmem:[%s266 + $0xa8] sm:$0xff]
        %v927 = vld [vmem:[%s266 + $0xb0] sm:$0xff]
        %v928 = vld [vmem:[%s266 + $0xb8] sm:$0xff]
        %v929 = vld [vmem:[%s266 + $0xc0] sm:$0xff]
        %v930 = vld [vmem:[%s266 + $0xc8] sm:$0xff]
        %v931 = vld [vmem:[%s266 + $0xd0] sm:$0xff]
        %v932 = vld [vmem:[%s266 + $0xd8] sm:$0xff]
        %v933 = vld [vmem:[%s266 + $0xe0] sm:$0xff]
        %v934 = vld [vmem:[%s266 + $0xe8] sm:$0xff]
        %v935 = vld [vmem:[%s266 + $0xf0] sm:$0xff]
        %v936 = vld [vmem:[%s266 + $0xf8] sm:$0xff]
        %v937 = vpack.c.bf16 %v922, %v921
        %v938 = vpack.c.bf16 %v924, %v923
        %v939 = vpack.c.bf16 %v926, %v925
        %v940 = vpack.c.bf16 %v928, %v927
        %v941 = vpack.c.bf16 %v930, %v929
        %v942 = vpack.c.bf16 %v932, %v931
        %v943 = vpack.c.bf16 %v934, %v933
        %v944 = vpack.c.bf16 %v936, %v935
        %v946 = vsel %vm371, %v937, 0
        %v949 = vsel %vm371, %v938, 0
        %v952 = vsel %vm371, %v939, 0
        %v955 = vsel %vm371, %v940, 0
        %v958 = vsel %vm371, %v941, 0
        %v961 = vsel %vm371, %v942, 0
        %v964 = vsel %vm371, %v943, 0
        %v967 = vsel %vm371, %v944, 0
        %969 = vmatprep.subr.bf16.mxu0 0
        %970 = vmatpush1.bf16.msra.mxu0 0
        %971 = vmatprep.subr.bf16.mxu0 0
        %972 = vmatpush1.bf16.msra.mxu0 0
        %973 = vmatprep.subr.bf16.mxu0 0
        %974 = vmatpush1.bf16.msra.mxu0 0
        %975 = vmatprep.subr.bf16.mxu0 0
        %976 = vmatpush1.bf16.msra.mxu0 0
        %977 = vmatprep.subr.bf16.mxu0 0
        %978 = vmatpush1.bf16.msra.mxu0 0
        %979 = vmatprep.subr.bf16.mxu0 0
        %980 = vmatpush1.bf16.msra.mxu0 0
        %981 = vmatprep.subr.bf16.mxu0 %v366
        %982 = vmatpush1.bf16.msra.mxu0 %v365
        %983 = vmatprep.subr.bf16.mxu0 %v364
        %984 = vmatpush1.bf16.msra.mxu0 %v363
        %985 = vmatprep.subr.bf16.mxu0 0
        %986 = vmatpush2.bf16.msra.mxu0 0
        %987 = vmatprep.subr.bf16.mxu0 0
        %988 = vmatpush2.bf16.msra.mxu0 0
        %989 = vmatprep.subr.bf16.mxu0 0
        %990 = vmatpush2.bf16.msra.mxu0 0
        %991 = vmatprep.subr.bf16.mxu0 0
        %992 = vmatpush2.bf16.msra.mxu0 0
        %993 = vmatprep.subr.bf16.mxu0 0
        %994 = vmatpush2.bf16.msra.mxu0 0
        %995 = vmatprep.subr.bf16.mxu0 0
        %996 = vmatpush2.bf16.msra.mxu0 0
        %997 = vmatprep.subr.bf16.mxu0 0
        %998 = vmatpush2.bf16.msra.mxu0 0
        %999 = vmatprep.subr.bf16.mxu0 0
        %1000 = vmatpush2.bf16.msra.mxu0 0
        %1001 = vmatprep.mubr.bf16.mxu0 0
        %1002 = vmatmul.mubr.bf16.gmra.mxu0 %v946
        %v1003 = vpop.f32.mrf.mxu0
        %v1004 = vadd.f32 %v344, %v1003
        %v1005 = vpop.f32.mrf.mxu0
        %v1006 = vadd.f32 %v348, %v1005
        %v1007 = vpop.f32.mrf.mxu0
        %v1008 = vadd.f32 %v344, %v1007
        %v1009 = vpop.f32.mrf.mxu0
        %v1010 = vadd.f32 %v348, %v1009
        %1011 = vmatprep.mubr.bf16.mxu0 0
        %1012 = vmatmul.mubr.bf16.gmra.mxu0 %v949
        %v1013 = vpop.f32.mrf.mxu0
        %v1014 = vadd.f32 %v344, %v1013
        %v1015 = vpop.f32.mrf.mxu0
        %v1016 = vadd.f32 %v348, %v1015
        %v1017 = vpop.f32.mrf.mxu0
        %v1018 = vadd.f32 %v344, %v1017
        %v1019 = vpop.f32.mrf.mxu0
        %v1020 = vadd.f32 %v348, %v1019
        %1021 = vmatprep.mubr.bf16.mxu0 0
        %1022 = vmatmul.mubr.bf16.gmra.mxu0 %v952
        %v1023 = vpop.f32.mrf.mxu0
        %v1024 = vadd.f32 %v344, %v1023
        %v1025 = vpop.f32.mrf.mxu0
        %v1026 = vadd.f32 %v348, %v1025
        %v1027 = vpop.f32.mrf.mxu0
        %v1028 = vadd.f32 %v344, %v1027
        %v1029 = vpop.f32.mrf.mxu0
        %v1030 = vadd.f32 %v348, %v1029
        %1031 = vmatprep.mubr.bf16.mxu0 0
        %1032 = vmatmul.mubr.bf16.gmra.mxu0 %v955
        %v1033 = vpop.f32.mrf.mxu0
        %v1034 = vadd.f32 %v344, %v1033
        %v1035 = vpop.f32.mrf.mxu0
        %v1036 = vadd.f32 %v348, %v1035
        %v1037 = vpop.f32.mrf.mxu0
        %v1038 = vadd.f32 %v344, %v1037
        %v1039 = vpop.f32.mrf.mxu0
        %v1040 = vadd.f32 %v348, %v1039
        %1041 = vmatprep.mubr.bf16.mxu0 0
        %1042 = vmatmul.mubr.bf16.gmra.mxu0 %v958
        %v1043 = vpop.f32.mrf.mxu0
        %v1044 = vadd.f32 %v344, %v1043
        %v1045 = vpop.f32.mrf.mxu0
        %v1046 = vadd.f32 %v348, %v1045
        %v1047 = vpop.f32.mrf.mxu0
        %v1048 = vadd.f32 %v344, %v1047
        %v1049 = vpop.f32.mrf.mxu0
        %v1050 = vadd.f32 %v348, %v1049
        %1051 = vmatprep.mubr.bf16.mxu0 0
        %1052 = vmatmul.mubr.bf16.gmra.mxu0 %v961
        %v1053 = vpop.f32.mrf.mxu0
        %v1054 = vadd.f32 %v344, %v1053
        %v1055 = vpop.f32.mrf.mxu0
        %v1056 = vadd.f32 %v348, %v1055
        %v1057 = vpop.f32.mrf.mxu0
        %v1058 = vadd.f32 %v344, %v1057
        %v1059 = vpop.f32.mrf.mxu0
        %v1060 = vadd.f32 %v348, %v1059
        %1061 = vmatprep.mubr.bf16.mxu0 0
        %1062 = vmatmul.mubr.bf16.gmra.mxu0 %v964
        %v1063 = vpop.f32.mrf.mxu0
        %v1064 = vadd.f32 %v344, %v1063
        %v1065 = vpop.f32.mrf.mxu0
        %v1066 = vadd.f32 %v348, %v1065
        %v1067 = vpop.f32.mrf.mxu0
        %v1068 = vadd.f32 %v344, %v1067
        %v1069 = vpop.f32.mrf.mxu0
        %v1070 = vadd.f32 %v348, %v1069
        %1071 = vmatprep.mubr.bf16.mxu0 0
        %1072 = vmatmul.mubr.bf16.gmra.mxu0 %v967
        %v1073 = vpop.f32.mrf.mxu0
        %v1074 = vadd.f32 %v344, %v1073
        %v1075 = vpop.f32.mrf.mxu0
        %v1076 = vadd.f32 %v348, %v1075
        %v1077 = vpop.f32.mrf.mxu0
        %v1078 = vadd.f32 %v344, %v1077
        %v1079 = vpop.f32.mrf.mxu0
        %v1080 = vadd.f32 %v348, %v1079
        %1081 = vdwg.mxu0
        %v1082 = vmax.f32 %v1004, 0.0
        %v1083 = vmax.f32 %v1006, 0.0
        %v1084 = vmax.f32 %v1008, 0.0
        %v1085 = vmax.f32 %v1010, 0.0
        %v1086 = vmax.f32 %v1014, 0.0
        %v1087 = vmax.f32 %v1016, 0.0
        %v1088 = vmax.f32 %v1018, 0.0
        %v1089 = vmax.f32 %v1020, 0.0
        %v1090 = vmax.f32 %v1024, 0.0
        %v1091 = vmax.f32 %v1026, 0.0
        %v1092 = vmax.f32 %v1028, 0.0
        %v1093 = vmax.f32 %v1030, 0.0
        %v1094 = vmax.f32 %v1034, 0.0
        %v1095 = vmax.f32 %v1036, 0.0
        %v1096 = vmax.f32 %v1038, 0.0
        %v1097 = vmax.f32 %v1040, 0.0
        %v1098 = vmax.f32 %v1044, 0.0
        %v1099 = vmax.f32 %v1046, 0.0
        %v1100 = vmax.f32 %v1048, 0.0
        %v1101 = vmax.f32 %v1050, 0.0
        %v1102 = vmax.f32 %v1054, 0.0
        %v1103 = vmax.f32 %v1056, 0.0
        %v1104 = vmax.f32 %v1058, 0.0
        %v1105 = vmax.f32 %v1060, 0.0
        %v1106 = vmax.f32 %v1064, 0.0
        %v1107 = vmax.f32 %v1066, 0.0
        %v1108 = vmax.f32 %v1068, 0.0
        %v1109 = vmax.f32 %v1070, 0.0
        %v1110 = vmax.f32 %v1074, 0.0
        %v1111 = vmax.f32 %v1076, 0.0
        %v1112 = vmax.f32 %v1078, 0.0
        %v1113 = vmax.f32 %v1080, 0.0
        %v1114 = vmin.f32 %v1082, 6.0
        %v1115 = vmin.f32 %v1083, 6.0
        %v1116 = vmin.f32 %v1084, 6.0
        %v1117 = vmin.f32 %v1085, 6.0
        %v1118 = vmin.f32 %v1086, 6.0
        %v1119 = vmin.f32 %v1087, 6.0
        %v1120 = vmin.f32 %v1088, 6.0
        %v1121 = vmin.f32 %v1089, 6.0
        %v1122 = vmin.f32 %v1090, 6.0
        %v1123 = vmin.f32 %v1091, 6.0
        %v1124 = vmin.f32 %v1092, 6.0
        %v1125 = vmin.f32 %v1093, 6.0
        %v1126 = vmin.f32 %v1094, 6.0
        %v1127 = vmin.f32 %v1095, 6.0
        %v1128 = vmin.f32 %v1096, 6.0
        %v1129 = vmin.f32 %v1097, 6.0
        %v1130 = vmin.f32 %v1098, 6.0
        %v1131 = vmin.f32 %v1099, 6.0
        %v1132 = vmin.f32 %v1100, 6.0
        %v1133 = vmin.f32 %v1101, 6.0
        %v1134 = vmin.f32 %v1102, 6.0
        %v1135 = vmin.f32 %v1103, 6.0
        %v1136 = vmin.f32 %v1104, 6.0
        %v1137 = vmin.f32 %v1105, 6.0
        %v1138 = vmin.f32 %v1106, 6.0
        %v1139 = vmin.f32 %v1107, 6.0
        %v1140 = vmin.f32 %v1108, 6.0
        %v1141 = vmin.f32 %v1109, 6.0
        %v1142 = vmin.f32 %v1110, 6.0
        %v1143 = vmin.f32 %v1111, 6.0
        %v1144 = vmin.f32 %v1112, 6.0
        %v1145 = vmin.f32 %v1113, 6.0
        %v1146 = vpack.c.bf16 %v1116, %v1114
        %v1147 = vpack.c.bf16 %v1117, %v1115
        %v1148 = vpack.c.bf16 %v1120, %v1118
        %v1149 = vpack.c.bf16 %v1121, %v1119
        %v1150 = vpack.c.bf16 %v1124, %v1122
        %v1151 = vpack.c.bf16 %v1125, %v1123
        %v1152 = vpack.c.bf16 %v1128, %v1126
        %v1153 = vpack.c.bf16 %v1129, %v1127
        %v1154 = vpack.c.bf16 %v1132, %v1130
        %v1155 = vpack.c.bf16 %v1133, %v1131
        %v1156 = vpack.c.bf16 %v1136, %v1134
        %v1157 = vpack.c.bf16 %v1137, %v1135
        %v1158 = vpack.c.bf16 %v1140, %v1138
        %v1159 = vpack.c.bf16 %v1141, %v1139
        %v1160 = vpack.c.bf16 %v1144, %v1142
        %v1161 = vpack.c.bf16 %v1145, %v1143
        %v1163 = vshrl.u32 %v1146, 16
        %v1165 = vrot.slane %v1163, 7
        %v1166 = vshll.u32 %v1146, 16
        %v1168 = vor.u32 %v1165, %v1166
        %v1170 = vshrl.u32 %v1147, 16
        %v1172 = vrot.slane %v1170, 7
        %v1173 = vshll.u32 %v1147, 16
        %v1175 = vor.u32 %v1172, %v1173
        %v1177 = vshrl.u32 %v1148, 16
        %v1179 = vrot.slane %v1177, 7
        %v1180 = vshll.u32 %v1148, 16
        %v1182 = vor.u32 %v1179, %v1180
        %v1184 = vshrl.u32 %v1149, 16
        %v1186 = vrot.slane %v1184, 7
        %v1187 = vshll.u32 %v1149, 16
        %v1189 = vor.u32 %v1186, %v1187
        %v1191 = vshrl.u32 %v1150, 16
        %v1193 = vrot.slane %v1191, 7
        %v1194 = vshll.u32 %v1150, 16
        %v1196 = vor.u32 %v1193, %v1194
        %v1198 = vshrl.u32 %v1151, 16
        %v1200 = vrot.slane %v1198, 7
        %v1201 = vshll.u32 %v1151, 16
        %v1203 = vor.u32 %v1200, %v1201
        %v1205 = vshrl.u32 %v1152, 16
        %v1207 = vrot.slane %v1205, 7
        %v1208 = vshll.u32 %v1152, 16
        %v1210 = vor.u32 %v1207, %v1208
        %v1212 = vshrl.u32 %v1153, 16
        %v1214 = vrot.slane %v1212, 7
        %v1215 = vshll.u32 %v1153, 16
        %v1217 = vor.u32 %v1214, %v1215
        %v1219 = vshrl.u32 %v1154, 16
        %v1221 = vrot.slane %v1219, 7
        %v1222 = vshll.u32 %v1154, 16
        %v1224 = vor.u32 %v1221, %v1222
        %v1226 = vshrl.u32 %v1155, 16
        %v1228 = vrot.slane %v1226, 7
        %v1229 = vshll.u32 %v1155, 16
        %v1231 = vor.u32 %v1228, %v1229
        %v1233 = vshrl.u32 %v1156, 16
        %v1235 = vrot.slane %v1233, 7
        %v1236 = vshll.u32 %v1156, 16
        %v1238 = vor.u32 %v1235, %v1236
        %v1240 = vshrl.u32 %v1157, 16
        %v1242 = vrot.slane %v1240, 7
        %v1243 = vshll.u32 %v1157, 16
        %v1245 = vor.u32 %v1242, %v1243
        %v1247 = vshrl.u32 %v1158, 16
        %v1249 = vrot.slane %v1247, 7
        %v1250 = vshll.u32 %v1158, 16
        %v1252 = vor.u32 %v1249, %v1250
        %v1254 = vshrl.u32 %v1159, 16
        %v1256 = vrot.slane %v1254, 7
        %v1257 = vshll.u32 %v1159, 16
        %v1259 = vor.u32 %v1256, %v1257
        %v1261 = vshrl.u32 %v1160, 16
        %v1263 = vrot.slane %v1261, 7
        %v1264 = vshll.u32 %v1160, 16
        %v1266 = vor.u32 %v1263, %v1264
        %v1268 = vshrl.u32 %v1161, 16
        %v1270 = vrot.slane %v1268, 7
        %v1271 = vshll.u32 %v1161, 16
        %v1273 = vor.u32 %v1270, %v1271
        %v1306 = vsel %vm735, 0, %v1168
        %v1307 = vsel %vm735, 0, %v1175
        %v1308 = vsel %vm735, 0, %v1182
        %v1309 = vsel %vm735, 0, %v1189
        %v1310 = vsel %vm735, 0, %v1196
        %v1311 = vsel %vm735, 0, %v1203
        %v1312 = vsel %vm735, 0, %v1210
        %v1313 = vsel %vm735, 0, %v1217
        %v1314 = vsel %vm735, 0, %v1224
        %v1315 = vsel %vm735, 0, %v1231
        %v1316 = vsel %vm735, 0, %v1238
        %v1317 = vsel %vm735, 0, %v1245
        %v1318 = vsel %vm735, 0, %v1252
        %v1319 = vsel %vm735, 0, %v1259
        %v1320 = vsel %vm735, 0, %v1266
        %v1321 = vsel %vm735, 0, %v1273
        %v1322 = vsel %vm735, %v1165, 0
        %v1323 = vsel %vm735, %v1172, 0
        %v1324 = vsel %vm735, %v1179, 0
        %v1325 = vsel %vm735, %v1186, 0
        %v1326 = vsel %vm735, %v1193, 0
        %v1327 = vsel %vm735, %v1200, 0
        %v1328 = vsel %vm735, %v1207, 0
        %v1329 = vsel %vm735, %v1214, 0
        %v1330 = vsel %vm735, %v1221, 0
        %v1331 = vsel %vm735, %v1228, 0
        %v1332 = vsel %vm735, %v1235, 0
        %v1333 = vsel %vm735, %v1242, 0
        %v1334 = vsel %vm735, %v1249, 0
        %v1335 = vsel %vm735, %v1256, 0
        %v1336 = vsel %vm735, %v1263, 0
        %v1337 = vsel %vm735, %v1270, 0
        %v1370 = vunpack.c.l.b16 %v1306
        %v1371 = vunpack.c.l.b16 %v1307
        %v1372 = vunpack.c.h.b16 %v1306
        %v1373 = vunpack.c.h.b16 %v1307
        %v1374 = vunpack.c.l.b16 %v1322
        %v1375 = vunpack.c.l.b16 %v1323
        %v1376 = vunpack.c.l.b16 %v1308
        %v1377 = vunpack.c.l.b16 %v1309
        %v1378 = vunpack.c.h.b16 %v1308
        %v1379 = vunpack.c.h.b16 %v1309
        %v1380 = vunpack.c.l.b16 %v1324
        %v1381 = vunpack.c.l.b16 %v1325
        %v1382 = vunpack.c.l.b16 %v1310
        %v1383 = vunpack.c.l.b16 %v1311
        %v1384 = vunpack.c.h.b16 %v1310
        %v1385 = vunpack.c.h.b16 %v1311
        %v1386 = vunpack.c.l.b16 %v1326
        %v1387 = vunpack.c.l.b16 %v1327
        %v1388 = vunpack.c.l.b16 %v1312
        %v1389 = vunpack.c.l.b16 %v1313
        %v1390 = vunpack.c.h.b16 %v1312
        %v1391 = vunpack.c.h.b16 %v1313
        %v1392 = vunpack.c.l.b16 %v1328
        %v1393 = vunpack.c.l.b16 %v1329
        %v1394 = vunpack.c.l.b16 %v1314
        %v1395 = vunpack.c.l.b16 %v1315
        %v1396 = vunpack.c.h.b16 %v1314
        %v1397 = vunpack.c.h.b16 %v1315
        %v1398 = vunpack.c.l.b16 %v1330
        %v1399 = vunpack.c.l.b16 %v1331
        %v1400 = vunpack.c.l.b16 %v1316
        %v1401 = vunpack.c.l.b16 %v1317
        %v1402 = vunpack.c.h.b16 %v1316
        %v1403 = vunpack.c.h.b16 %v1317
        %v1404 = vunpack.c.l.b16 %v1332
        %v1405 = vunpack.c.l.b16 %v1333
        %v1406 = vunpack.c.l.b16 %v1318
        %v1407 = vunpack.c.l.b16 %v1319
        %v1408 = vunpack.c.h.b16 %v1318
        %v1409 = vunpack.c.h.b16 %v1319
        %v1410 = vunpack.c.l.b16 %v1334
        %v1411 = vunpack.c.l.b16 %v1335
        %v1412 = vunpack.c.l.b16 %v1320
        %v1413 = vunpack.c.l.b16 %v1321
        %v1414 = vunpack.c.h.b16 %v1320
        %v1415 = vunpack.c.h.b16 %v1321
        %v1416 = vunpack.c.l.b16 %v1336
        %v1417 = vunpack.c.l.b16 %v1337
        %v1418 = vpack.c.b16 %v1371, %v1370
        %v1419 = vpack.c.b16 %v1373, %v1372
        %v1420 = vpack.c.b16 %v1375, %v1374
        %v1421 = vpack.c.b16 %v1377, %v1376
        %v1422 = vpack.c.b16 %v1379, %v1378
        %v1423 = vpack.c.b16 %v1381, %v1380
        %v1424 = vpack.c.b16 %v1383, %v1382
        %v1425 = vpack.c.b16 %v1385, %v1384
        %v1426 = vpack.c.b16 %v1387, %v1386
        %v1427 = vpack.c.b16 %v1389, %v1388
        %v1428 = vpack.c.b16 %v1391, %v1390
        %v1429 = vpack.c.b16 %v1393, %v1392
        %v1430 = vpack.c.b16 %v1395, %v1394
        %v1431 = vpack.c.b16 %v1397, %v1396
        %v1432 = vpack.c.b16 %v1399, %v1398
        %v1433 = vpack.c.b16 %v1401, %v1400
        %v1434 = vpack.c.b16 %v1403, %v1402
        %v1435 = vpack.c.b16 %v1405, %v1404
        %v1436 = vpack.c.b16 %v1407, %v1406
        %v1437 = vpack.c.b16 %v1409, %v1408
        %v1438 = vpack.c.b16 %v1411, %v1410
        %v1439 = vpack.c.b16 %v1413, %v1412
        %v1440 = vpack.c.b16 %v1415, %v1414
        %v1441 = vpack.c.b16 %v1417, %v1416
        %s1466 = scalar_lea.vmem [#allocation2], 216
        %1467 = vst.msk [vmem:[%s1466] sm:$0xff] %vm300, %v1418
        %1468 = vst.msk [vmem:[%s1466 + $0x8] sm:$0xff] %vm300, %v1419
        %1469 = vst.msk [vmem:[%s1466 + $0x10] sm:$0x11] %vm305, %v1420
        %1470 = vst.msk [vmem:[%s1466 + $0x18] sm:$0xff] %vm300, %v1421
        %1471 = vst.msk [vmem:[%s1466 + $0x20] sm:$0xff] %vm300, %v1422
        %1472 = vst.msk [vmem:[%s1466 + $0x28] sm:$0x11] %vm305, %v1423
        %1473 = vst.msk [vmem:[%s1466 + $0x30] sm:$0xff] %vm300, %v1424
        %1474 = vst.msk [vmem:[%s1466 + $0x38] sm:$0xff] %vm300, %v1425
        %1475 = vst.msk [vmem:[%s1466 + $0x40] sm:$0x11] %vm305, %v1426
        %1476 = vst.msk [vmem:[%s1466 + $0x48] sm:$0xff] %vm300, %v1427
        %1477 = vst.msk [vmem:[%s1466 + $0x50] sm:$0xff] %vm300, %v1428
        %1478 = vst.msk [vmem:[%s1466 + $0x58] sm:$0x11] %vm305, %v1429
        %1479 = vst.msk [vmem:[%s1466 + $0x60] sm:$0xff] %vm300, %v1430
        %1480 = vst.msk [vmem:[%s1466 + $0x68] sm:$0xff] %vm300, %v1431
        %1481 = vst.msk [vmem:[%s1466 + $0x70] sm:$0x11] %vm305, %v1432
        %1482 = vst.msk [vmem:[%s1466 + $0x78] sm:$0xff] %vm300, %v1433
        %1483 = vst.msk [vmem:[%s1466 + $0x80] sm:$0xff] %vm300, %v1434
        %1484 = vst.msk [vmem:[%s1466 + $0x88] sm:$0x11] %vm305, %v1435
        %1485 = vst.msk [vmem:[%s1466 + $0x90] sm:$0xff] %vm300, %v1436
        %1486 = vst.msk [vmem:[%s1466 + $0x98] sm:$0xff] %vm300, %v1437
        %1487 = vst.msk [vmem:[%s1466 + $0xa0] sm:$0x11] %vm305, %v1438
        %1488 = vst.msk [vmem:[%s1466 + $0xa8] sm:$0xff] %vm300, %v1439
        %1489 = vst.msk [vmem:[%s1466 + $0xb0] sm:$0xff] %vm300, %v1440
        %1490 = vst.msk [vmem:[%s1466 + $0xb8] sm:$0x11] %vm305, %v1441
        %v1491 = vld [vmem:[%s4] sm:$0x3]
        %v1492 = vld [vmem:[%s3] ss:$8 sm:$0x3]
        %s1493 = scalar_lea.vmem %s3, 1
        %v1494 = vld [vmem:[%s1493] ss:$8 sm:$0x3]
        %s1495 = scalar_lea.vmem %s3, 2
        %v1496 = vld [vmem:[%s1495] ss:$8 sm:$0x3]
        %s1497 = scalar_lea.vmem %s3, 3
        %v1498 = vld [vmem:[%s1497] ss:$8 sm:$0x3]
        %s1499 = scalar_lea.vmem %s3, 4
        %v1500 = vld [vmem:[%s1499] ss:$8 sm:$0x3]
        %s1501 = scalar_lea.vmem %s3, 5
        %v1502 = vld [vmem:[%s1501] ss:$8 sm:$0x3]
        %s1503 = scalar_lea.vmem %s3, 6
        %v1504 = vld [vmem:[%s1503] ss:$8 sm:$0x3]
        %s1505 = scalar_lea.vmem %s3, 7
        %v1506 = vld [vmem:[%s1505] ss:$8 sm:$0x3]
        %s1507 = scalar_lea.vmem %s3, 16
        %v1508 = vld [vmem:[%s1507] ss:$8 sm:$0x3]
        %v1509 = vld [vmem:[#allocation2] sm:$0xff]
        %v1510 = vld [vmem:[#allocation2 + $0x8] sm:$0xff]
        %v1511 = vld [vmem:[#allocation2 + $0x10] sm:$0x11]
        %v1512 = vld [vmem:[#allocation2 + $0x18] sm:$0xff]
        %v1513 = vld [vmem:[#allocation2 + $0x20] sm:$0xff]
        %v1514 = vld [vmem:[#allocation2 + $0x28] sm:$0x11]
        %v1515 = vld [vmem:[#allocation2 + $0x30] sm:$0xff]
        %v1516 = vld [vmem:[#allocation2 + $0x38] sm:$0xff]
        %v1517 = vld [vmem:[#allocation2 + $0x40] sm:$0x11]
        %v1518 = vld [vmem:[#allocation2 + $0x48] sm:$0xff]
        %v1519 = vld [vmem:[#allocation2 + $0x50] sm:$0xff]
        %v1520 = vld [vmem:[#allocation2 + $0x58] sm:$0x11]
        %v1521 = vld [vmem:[#allocation2 + $0x60] sm:$0xff]
        %v1522 = vld [vmem:[#allocation2 + $0x68] sm:$0xff]
        %v1523 = vld [vmem:[#allocation2 + $0x70] sm:$0x11]
        %v1524 = vld [vmem:[#allocation2 + $0x78] sm:$0xff]
        %v1525 = vld [vmem:[#allocation2 + $0x80] sm:$0xff]
        %v1526 = vld [vmem:[#allocation2 + $0x88] sm:$0x11]
        %v1527 = vld [vmem:[#allocation2 + $0x90] sm:$0xff]
        %v1528 = vld [vmem:[#allocation2 + $0x98] sm:$0xff]
        %v1529 = vld [vmem:[#allocation2 + $0xa0] sm:$0x11]
        %v1530 = vld [vmem:[#allocation2 + $0xa8] sm:$0xff]
        %v1531 = vld [vmem:[#allocation2 + $0xb0] sm:$0xff]
        %v1532 = vld [vmem:[#allocation2 + $0xb8] sm:$0x11]
        %v1533 = vunpack.c.l.bf16 %v1509
        %v1534 = vunpack.c.h.bf16 %v1509
        %v1535 = vunpack.c.l.bf16 %v1510
        %v1536 = vunpack.c.h.bf16 %v1510
        %v1537 = vunpack.c.l.bf16 %v1512
        %v1538 = vunpack.c.h.bf16 %v1512
        %v1539 = vunpack.c.l.bf16 %v1513
        %v1540 = vunpack.c.h.bf16 %v1513
        %v1541 = vunpack.c.l.bf16 %v1515
        %v1542 = vunpack.c.h.bf16 %v1515
        %v1543 = vunpack.c.l.bf16 %v1516
        %v1544 = vunpack.c.h.bf16 %v1516
        %v1545 = vunpack.c.l.bf16 %v1518
        %v1546 = vunpack.c.h.bf16 %v1518
        %v1547 = vunpack.c.l.bf16 %v1519
        %v1548 = vunpack.c.h.bf16 %v1519
        %v1549 = vunpack.c.l.bf16 %v1521
        %v1550 = vunpack.c.h.bf16 %v1521
        %v1551 = vunpack.c.l.bf16 %v1522
        %v1552 = vunpack.c.h.bf16 %v1522
        %v1553 = vunpack.c.l.bf16 %v1524
        %v1554 = vunpack.c.h.bf16 %v1524
        %v1555 = vunpack.c.l.bf16 %v1525
        %v1556 = vunpack.c.h.bf16 %v1525
        %v1557 = vunpack.c.l.bf16 %v1527
        %v1558 = vunpack.c.h.bf16 %v1527
        %v1559 = vunpack.c.l.bf16 %v1528
        %v1560 = vunpack.c.h.bf16 %v1528
        %v1561 = vunpack.c.l.bf16 %v1530
        %v1562 = vunpack.c.h.bf16 %v1530
        %v1563 = vunpack.c.l.bf16 %v1531
        %v1564 = vunpack.c.h.bf16 %v1531
        %v1566 = vlaneseq
        %v1567 = vshrl.u32 %v1566, 7
        %v1568 = vsub.s32 0, %v1567
        %v1569 = vrot.slane %v1492, %v1568
        %v1570 = vlaneseq
        %v1571 = vshrl.u32 %v1570, 7
        %v1572 = vsub.s32 1, %v1571
        %v1573 = vrot.slane %v1492, %v1572
        %v1576 = vmul.f32 %v1533, %v1569
        %v1577 = vmul.f32 %v1534, %v1573
        %v1578 = vmul.f32 %v1535, %v1569
        %v1579 = vmul.f32 %v1536, %v1573
        %v1580 = vmul.f32 %v1537, %v1569
        %v1581 = vmul.f32 %v1538, %v1573
        %v1582 = vmul.f32 %v1539, %v1569
        %v1583 = vmul.f32 %v1540, %v1573
        %v1584 = vmul.f32 %v1541, %v1569
        %v1585 = vmul.f32 %v1542, %v1573
        %v1586 = vmul.f32 %v1543, %v1569
        %v1587 = vmul.f32 %v1544, %v1573
        %v1588 = vmul.f32 %v1545, %v1569
        %v1589 = vmul.f32 %v1546, %v1573
        %v1590 = vmul.f32 %v1547, %v1569
        %v1591 = vmul.f32 %v1548, %v1573
        %v1592 = vmul.f32 %v1549, %v1569
        %v1593 = vmul.f32 %v1550, %v1573
        %v1594 = vmul.f32 %v1551, %v1569
        %v1595 = vmul.f32 %v1552, %v1573
        %v1596 = vmul.f32 %v1553, %v1569
        %v1597 = vmul.f32 %v1554, %v1573
        %v1598 = vmul.f32 %v1555, %v1569
        %v1599 = vmul.f32 %v1556, %v1573
        %v1600 = vmul.f32 %v1557, %v1569
        %v1601 = vmul.f32 %v1558, %v1573
        %v1602 = vmul.f32 %v1559, %v1569
        %v1603 = vmul.f32 %v1560, %v1573
        %v1604 = vmul.f32 %v1561, %v1569
        %v1605 = vmul.f32 %v1562, %v1573
        %v1606 = vmul.f32 %v1563, %v1569
        %v1607 = vmul.f32 %v1564, %v1573
        %v1608 = vadd.f32 %v1576, 0.0
        %v1609 = vadd.f32 %v1577, 0.0
        %v1610 = vadd.f32 %v1578, 0.0
        %v1611 = vadd.f32 %v1579, 0.0
        %v1612 = vadd.f32 %v1580, 0.0
        %v1613 = vadd.f32 %v1581, 0.0
        %v1614 = vadd.f32 %v1582, 0.0
        %v1615 = vadd.f32 %v1583, 0.0
        %v1616 = vadd.f32 %v1584, 0.0
        %v1617 = vadd.f32 %v1585, 0.0
        %v1618 = vadd.f32 %v1586, 0.0
        %v1619 = vadd.f32 %v1587, 0.0
        %v1620 = vadd.f32 %v1588, 0.0
        %v1621 = vadd.f32 %v1589, 0.0
        %v1622 = vadd.f32 %v1590, 0.0
        %v1623 = vadd.f32 %v1591, 0.0
        %v1624 = vadd.f32 %v1592, 0.0
        %v1625 = vadd.f32 %v1593, 0.0
        %v1626 = vadd.f32 %v1594, 0.0
        %v1627 = vadd.f32 %v1595, 0.0
        %v1628 = vadd.f32 %v1596, 0.0
        %v1629 = vadd.f32 %v1597, 0.0
        %v1630 = vadd.f32 %v1598, 0.0
        %v1631 = vadd.f32 %v1599, 0.0
        %v1632 = vadd.f32 %v1600, 0.0
        %v1633 = vadd.f32 %v1601, 0.0
        %v1634 = vadd.f32 %v1602, 0.0
        %v1635 = vadd.f32 %v1603, 0.0
        %v1636 = vadd.f32 %v1604, 0.0
        %v1637 = vadd.f32 %v1605, 0.0
        %v1638 = vadd.f32 %v1606, 0.0
        %v1639 = vadd.f32 %v1607, 0.0
        %v1640 = vunpack.c.l.bf16 %v1511
        %v1641 = vunpack.c.h.bf16 %v1511
        %v1642 = vunpack.c.l.bf16 %v1514
        %v1643 = vunpack.c.h.bf16 %v1514
        %v1644 = vunpack.c.l.bf16 %v1517
        %v1645 = vunpack.c.h.bf16 %v1517
        %v1646 = vunpack.c.l.bf16 %v1520
        %v1647 = vunpack.c.h.bf16 %v1520
        %v1648 = vunpack.c.l.bf16 %v1523
        %v1649 = vunpack.c.h.bf16 %v1523
        %v1650 = vunpack.c.l.bf16 %v1526
        %v1651 = vunpack.c.h.bf16 %v1526
        %v1652 = vunpack.c.l.bf16 %v1529
        %v1653 = vunpack.c.h.bf16 %v1529
        %v1654 = vunpack.c.l.bf16 %v1532
        %v1655 = vunpack.c.h.bf16 %v1532
        %v1657 = vlaneseq
        %v1658 = vshrl.u32 %v1657, 7
        %v1659 = vsub.s32 0, %v1658
        %v1660 = vrot.slane %v1494, %v1659
        %v1661 = vlaneseq
        %v1662 = vshrl.u32 %v1661, 7
        %v1663 = vsub.s32 1, %v1662
        %v1664 = vrot.slane %v1494, %v1663
        %v1667 = vmul.f32 %v1533, %v1660
        %v1668 = vmul.f32 %v1534, %v1664
        %v1669 = vmul.f32 %v1535, %v1660
        %v1670 = vmul.f32 %v1536, %v1664
        %v1671 = vmul.f32 %v1640, %v1660
        %v1672 = vmul.f32 %v1641, %v1664
        %v1673 = vmul.f32 %v1537, %v1660
        %v1674 = vmul.f32 %v1538, %v1664
        %v1675 = vmul.f32 %v1539, %v1660
        %v1676 = vmul.f32 %v1540, %v1664
        %v1677 = vmul.f32 %v1642, %v1660
        %v1678 = vmul.f32 %v1643, %v1664
        %v1679 = vmul.f32 %v1541, %v1660
        %v1680 = vmul.f32 %v1542, %v1664
        %v1681 = vmul.f32 %v1543, %v1660
        %v1682 = vmul.f32 %v1544, %v1664
        %v1683 = vmul.f32 %v1644, %v1660
        %v1684 = vmul.f32 %v1645, %v1664
        %v1685 = vmul.f32 %v1545, %v1660
        %v1686 = vmul.f32 %v1546, %v1664
        %v1687 = vmul.f32 %v1547, %v1660
        %v1688 = vmul.f32 %v1548, %v1664
        %v1689 = vmul.f32 %v1646, %v1660
        %v1690 = vmul.f32 %v1647, %v1664
        %v1691 = vmul.f32 %v1549, %v1660
        %v1692 = vmul.f32 %v1550, %v1664
        %v1693 = vmul.f32 %v1551, %v1660
        %v1694 = vmul.f32 %v1552, %v1664
        %v1695 = vmul.f32 %v1648, %v1660
        %v1696 = vmul.f32 %v1649, %v1664
        %v1697 = vmul.f32 %v1553, %v1660
        %v1698 = vmul.f32 %v1554, %v1664
        %v1699 = vmul.f32 %v1555, %v1660
        %v1700 = vmul.f32 %v1556, %v1664
        %v1701 = vmul.f32 %v1650, %v1660
        %v1702 = vmul.f32 %v1651, %v1664
        %v1703 = vmul.f32 %v1557, %v1660
        %v1704 = vmul.f32 %v1558, %v1664
        %v1705 = vmul.f32 %v1559, %v1660
        %v1706 = vmul.f32 %v1560, %v1664
        %v1707 = vmul.f32 %v1652, %v1660
        %v1708 = vmul.f32 %v1653, %v1664
        %v1709 = vmul.f32 %v1561, %v1660
        %v1710 = vmul.f32 %v1562, %v1664
        %v1711 = vmul.f32 %v1563, %v1660
        %v1712 = vmul.f32 %v1564, %v1664
        %v1713 = vmul.f32 %v1654, %v1660
        %v1714 = vmul.f32 %v1655, %v1664
        %vm1763 = vcmask 1046528
        %v1764 = vrot.slane %v1667, 1
        %v1765 = vrot.slane %v1669, 1
        %v1766 = vsel %vm1763, %v1764, %v1765
        %v1767 = vrot.slane %v1668, 1
        %v1768 = vrot.slane %v1670, 1
        %v1769 = vsel %vm1763, %v1767, %v1768
        %v1770 = vrot.slane %v1671, 1
        %v1771 = vsel %vm1763, %v1765, %v1770
        %v1772 = vrot.slane %v1672, 1
        %v1773 = vsel %vm1763, %v1768, %v1772
        %v1774 = vrot.slane %v1673, 1
        %v1775 = vrot.slane %v1675, 1
        %v1776 = vsel %vm1763, %v1774, %v1775
        %v1777 = vrot.slane %v1674, 1
        %v1778 = vrot.slane %v1676, 1
        %v1779 = vsel %vm1763, %v1777, %v1778
        %v1780 = vrot.slane %v1677, 1
        %v1781 = vsel %vm1763, %v1775, %v1780
        %v1782 = vrot.slane %v1678, 1
        %v1783 = vsel %vm1763, %v1778, %v1782
        %v1784 = vrot.slane %v1679, 1
        %v1785 = vrot.slane %v1681, 1
        %v1786 = vsel %vm1763, %v1784, %v1785
        %v1787 = vrot.slane %v1680, 1
        %v1788 = vrot.slane %v1682, 1
        %v1789 = vsel %vm1763, %v1787, %v1788
        %v1790 = vrot.slane %v1683, 1
        %v1791 = vsel %vm1763, %v1785, %v1790
        %v1792 = vrot.slane %v1684, 1
        %v1793 = vsel %vm1763, %v1788, %v1792
        %v1794 = vrot.slane %v1685, 1
        %v1795 = vrot.slane %v1687, 1
        %v1796 = vsel %vm1763, %v1794, %v1795
        %v1797 = vrot.slane %v1686, 1
        %v1798 = vrot.slane %v1688, 1
        %v1799 = vsel %vm1763, %v1797, %v1798
        %v1800 = vrot.slane %v1689, 1
        %v1801 = vsel %vm1763, %v1795, %v1800
        %v1802 = vrot.slane %v1690, 1
        %v1803 = vsel %vm1763, %v1798, %v1802
        %v1804 = vrot.slane %v1691, 1
        %v1805 = vrot.slane %v1693, 1
        %v1806 = vsel %vm1763, %v1804, %v1805
        %v1807 = vrot.slane %v1692, 1
        %v1808 = vrot.slane %v1694, 1
        %v1809 = vsel %vm1763, %v1807, %v1808
        %v1810 = vrot.slane %v1695, 1
        %v1811 = vsel %vm1763, %v1805, %v1810
        %v1812 = vrot.slane %v1696, 1
        %v1813 = vsel %vm1763, %v1808, %v1812
        %v1814 = vrot.slane %v1697, 1
        %v1815 = vrot.slane %v1699, 1
        %v1816 = vsel %vm1763, %v1814, %v1815
        %v1817 = vrot.slane %v1698, 1
        %v1818 = vrot.slane %v1700, 1
        %v1819 = vsel %vm1763, %v1817, %v1818
        %v1820 = vrot.slane %v1701, 1
        %v1821 = vsel %vm1763, %v1815, %v1820
        %v1822 = vrot.slane %v1702, 1
        %v1823 = vsel %vm1763, %v1818, %v1822
        %v1824 = vrot.slane %v1703, 1
        %v1825 = vrot.slane %v1705, 1
        %v1826 = vsel %vm1763, %v1824, %v1825
        %v1827 = vrot.slane %v1704, 1
        %v1828 = vrot.slane %v1706, 1
        %v1829 = vsel %vm1763, %v1827, %v1828
        %v1830 = vrot.slane %v1707, 1
        %v1831 = vsel %vm1763, %v1825, %v1830
        %v1832 = vrot.slane %v1708, 1
        %v1833 = vsel %vm1763, %v1828, %v1832
        %v1834 = vrot.slane %v1709, 1
        %v1835 = vrot.slane %v1711, 1
        %v1836 = vsel %vm1763, %v1834, %v1835
        %v1837 = vrot.slane %v1710, 1
        %v1838 = vrot.slane %v1712, 1
        %v1839 = vsel %vm1763, %v1837, %v1838
        %v1840 = vrot.slane %v1713, 1
        %v1841 = vsel %vm1763, %v1835, %v1840
        %v1842 = vrot.slane %v1714, 1
        %v1843 = vsel %vm1763, %v1838, %v1842
        %v1876 = vadd.f32 %v1608, %v1766
        %v1877 = vadd.f32 %v1609, %v1769
        %v1878 = vadd.f32 %v1610, %v1771
        %v1879 = vadd.f32 %v1611, %v1773
        %v1880 = vadd.f32 %v1612, %v1776
        %v1881 = vadd.f32 %v1613, %v1779
        %v1882 = vadd.f32 %v1614, %v1781
        %v1883 = vadd.f32 %v1615, %v1783
        %v1884 = vadd.f32 %v1616, %v1786
        %v1885 = vadd.f32 %v1617, %v1789
        %v1886 = vadd.f32 %v1618, %v1791
        %v1887 = vadd.f32 %v1619, %v1793
        %v1888 = vadd.f32 %v1620, %v1796
        %v1889 = vadd.f32 %v1621, %v1799
        %v1890 = vadd.f32 %v1622, %v1801
        %v1891 = vadd.f32 %v1623, %v1803
        %v1892 = vadd.f32 %v1624, %v1806
        %v1893 = vadd.f32 %v1625, %v1809
        %v1894 = vadd.f32 %v1626, %v1811
        %v1895 = vadd.f32 %v1627, %v1813
        %v1896 = vadd.f32 %v1628, %v1816
        %v1897 = vadd.f32 %v1629, %v1819
        %v1898 = vadd.f32 %v1630, %v1821
        %v1899 = vadd.f32 %v1631, %v1823
        %v1900 = vadd.f32 %v1632, %v1826
        %v1901 = vadd.f32 %v1633, %v1829
        %v1902 = vadd.f32 %v1634, %v1831
        %v1903 = vadd.f32 %v1635, %v1833
        %v1904 = vadd.f32 %v1636, %v1836
        %v1905 = vadd.f32 %v1637, %v1839
        %v1906 = vadd.f32 %v1638, %v1841
        %v1907 = vadd.f32 %v1639, %v1843
        %v1909 = vlaneseq
        %v1910 = vshrl.u32 %v1909, 7
        %v1911 = vsub.s32 0, %v1910
        %v1912 = vrot.slane %v1496, %v1911
        %v1913 = vlaneseq
        %v1914 = vshrl.u32 %v1913, 7
        %v1915 = vsub.s32 1, %v1914
        %v1916 = vrot.slane %v1496, %v1915
        %v1919 = vmul.f32 %v1533, %v1912
        %v1920 = vmul.f32 %v1534, %v1916
        %v1921 = vmul.f32 %v1535, %v1912
        %v1922 = vmul.f32 %v1536, %v1916
        %v1923 = vmul.f32 %v1640, %v1912
        %v1924 = vmul.f32 %v1641, %v1916
        %v1925 = vmul.f32 %v1537, %v1912
        %v1926 = vmul.f32 %v1538, %v1916
        %v1927 = vmul.f32 %v1539, %v1912
        %v1928 = vmul.f32 %v1540, %v1916
        %v1929 = vmul.f32 %v1642, %v1912
        %v1930 = vmul.f32 %v1643, %v1916
        %v1931 = vmul.f32 %v1541, %v1912
        %v1932 = vmul.f32 %v1542, %v1916
        %v1933 = vmul.f32 %v1543, %v1912
        %v1934 = vmul.f32 %v1544, %v1916
        %v1935 = vmul.f32 %v1644, %v1912
        %v1936 = vmul.f32 %v1645, %v1916
        %v1937 = vmul.f32 %v1545, %v1912
        %v1938 = vmul.f32 %v1546, %v1916
        %v1939 = vmul.f32 %v1547, %v1912
        %v1940 = vmul.f32 %v1548, %v1916
        %v1941 = vmul.f32 %v1646, %v1912
        %v1942 = vmul.f32 %v1647, %v1916
        %v1943 = vmul.f32 %v1549, %v1912
        %v1944 = vmul.f32 %v1550, %v1916
        %v1945 = vmul.f32 %v1551, %v1912
        %v1946 = vmul.f32 %v1552, %v1916
        %v1947 = vmul.f32 %v1648, %v1912
        %v1948 = vmul.f32 %v1649, %v1916
        %v1949 = vmul.f32 %v1553, %v1912
        %v1950 = vmul.f32 %v1554, %v1916
        %v1951 = vmul.f32 %v1555, %v1912
        %v1952 = vmul.f32 %v1556, %v1916
        %v1953 = vmul.f32 %v1650, %v1912
        %v1954 = vmul.f32 %v1651, %v1916
        %v1955 = vmul.f32 %v1557, %v1912
        %v1956 = vmul.f32 %v1558, %v1916
        %v1957 = vmul.f32 %v1559, %v1912
        %v1958 = vmul.f32 %v1560, %v1916
        %v1959 = vmul.f32 %v1652, %v1912
        %v1960 = vmul.f32 %v1653, %v1916
        %v1961 = vmul.f32 %v1561, %v1912
        %v1962 = vmul.f32 %v1562, %v1916
        %v1963 = vmul.f32 %v1563, %v1912
        %v1964 = vmul.f32 %v1564, %v1916
        %v1965 = vmul.f32 %v1654, %v1912
        %v1966 = vmul.f32 %v1655, %v1916
        %vm2015 = vcmask 1045504
        %v2016 = vrot.slane %v1919, 2
        %v2017 = vrot.slane %v1921, 2
        %v2018 = vsel %vm2015, %v2016, %v2017
        %v2019 = vrot.slane %v1920, 2
        %v2020 = vrot.slane %v1922, 2
        %v2021 = vsel %vm2015, %v2019, %v2020
        %v2022 = vrot.slane %v1923, 2
        %v2023 = vsel %vm2015, %v2017, %v2022
        %v2024 = vrot.slane %v1924, 2
        %v2025 = vsel %vm2015, %v2020, %v2024
        %v2026 = vrot.slane %v1925, 2
        %v2027 = vrot.slane %v1927, 2
        %v2028 = vsel %vm2015, %v2026, %v2027
        %v2029 = vrot.slane %v1926, 2
        %v2030 = vrot.slane %v1928, 2
        %v2031 = vsel %vm2015, %v2029, %v2030
        %v2032 = vrot.slane %v1929, 2
        %v2033 = vsel %vm2015, %v2027, %v2032
        %v2034 = vrot.slane %v1930, 2
        %v2035 = vsel %vm2015, %v2030, %v2034
        %v2036 = vrot.slane %v1931, 2
        %v2037 = vrot.slane %v1933, 2
        %v2038 = vsel %vm2015, %v2036, %v2037
        %v2039 = vrot.slane %v1932, 2
        %v2040 = vrot.slane %v1934, 2
        %v2041 = vsel %vm2015, %v2039, %v2040
        %v2042 = vrot.slane %v1935, 2
        %v2043 = vsel %vm2015, %v2037, %v2042
        %v2044 = vrot.slane %v1936, 2
        %v2045 = vsel %vm2015, %v2040, %v2044
        %v2046 = vrot.slane %v1937, 2
        %v2047 = vrot.slane %v1939, 2
        %v2048 = vsel %vm2015, %v2046, %v2047
        %v2049 = vrot.slane %v1938, 2
        %v2050 = vrot.slane %v1940, 2
        %v2051 = vsel %vm2015, %v2049, %v2050
        %v2052 = vrot.slane %v1941, 2
        %v2053 = vsel %vm2015, %v2047, %v2052
        %v2054 = vrot.slane %v1942, 2
        %v2055 = vsel %vm2015, %v2050, %v2054
        %v2056 = vrot.slane %v1943, 2
        %v2057 = vrot.slane %v1945, 2
        %v2058 = vsel %vm2015, %v2056, %v2057
        %v2059 = vrot.slane %v1944, 2
        %v2060 = vrot.slane %v1946, 2
        %v2061 = vsel %vm2015, %v2059, %v2060
        %v2062 = vrot.slane %v1947, 2
        %v2063 = vsel %vm2015, %v2057, %v2062
        %v2064 = vrot.slane %v1948, 2
        %v2065 = vsel %vm2015, %v2060, %v2064
        %v2066 = vrot.slane %v1949, 2
        %v2067 = vrot.slane %v1951, 2
        %v2068 = vsel %vm2015, %v2066, %v2067
        %v2069 = vrot.slane %v1950, 2
        %v2070 = vrot.slane %v1952, 2
        %v2071 = vsel %vm2015, %v2069, %v2070
        %v2072 = vrot.slane %v1953, 2
        %v2073 = vsel %vm2015, %v2067, %v2072
        %v2074 = vrot.slane %v1954, 2
        %v2075 = vsel %vm2015, %v2070, %v2074
        %v2076 = vrot.slane %v1955, 2
        %v2077 = vrot.slane %v1957, 2
        %v2078 = vsel %vm2015, %v2076, %v2077
        %v2079 = vrot.slane %v1956, 2
        %v2080 = vrot.slane %v1958, 2
        %v2081 = vsel %vm2015, %v2079, %v2080
        %v2082 = vrot.slane %v1959, 2
        %v2083 = vsel %vm2015, %v2077, %v2082
        %v2084 = vrot.slane %v1960, 2
        %v2085 = vsel %vm2015, %v2080, %v2084
        %v2086 = vrot.slane %v1961, 2
        %v2087 = vrot.slane %v1963, 2
        %v2088 = vsel %vm2015, %v2086, %v2087
        %v2089 = vrot.slane %v1962, 2
        %v2090 = vrot.slane %v1964, 2
        %v2091 = vsel %vm2015, %v2089, %v2090
        %v2092 = vrot.slane %v1965, 2
        %v2093 = vsel %vm2015, %v2087, %v2092
        %v2094 = vrot.slane %v1966, 2
        %v2095 = vsel %vm2015, %v2090, %v2094
        %v2128 = vadd.f32 %v1876, %v2018
        %v2129 = vadd.f32 %v1877, %v2021
        %v2130 = vadd.f32 %v1878, %v2023
        %v2131 = vadd.f32 %v1879, %v2025
        %v2132 = vadd.f32 %v1880, %v2028
        %v2133 = vadd.f32 %v1881, %v2031
        %v2134 = vadd.f32 %v1882, %v2033
        %v2135 = vadd.f32 %v1883, %v2035
        %v2136 = vadd.f32 %v1884, %v2038
        %v2137 = vadd.f32 %v1885, %v2041
        %v2138 = vadd.f32 %v1886, %v2043
        %v2139 = vadd.f32 %v1887, %v2045
        %v2140 = vadd.f32 %v1888, %v2048
        %v2141 = vadd.f32 %v1889, %v2051
        %v2142 = vadd.f32 %v1890, %v2053
        %v2143 = vadd.f32 %v1891, %v2055
        %v2144 = vadd.f32 %v1892, %v2058
        %v2145 = vadd.f32 %v1893, %v2061
        %v2146 = vadd.f32 %v1894, %v2063
        %v2147 = vadd.f32 %v1895, %v2065
        %v2148 = vadd.f32 %v1896, %v2068
        %v2149 = vadd.f32 %v1897, %v2071
        %v2150 = vadd.f32 %v1898, %v2073
        %v2151 = vadd.f32 %v1899, %v2075
        %v2152 = vadd.f32 %v1900, %v2078
        %v2153 = vadd.f32 %v1901, %v2081
        %v2154 = vadd.f32 %v1902, %v2083
        %v2155 = vadd.f32 %v1903, %v2085
        %v2156 = vadd.f32 %v1904, %v2088
        %v2157 = vadd.f32 %v1905, %v2091
        %v2158 = vadd.f32 %v1906, %v2093
        %v2159 = vadd.f32 %v1907, %v2095
        %v2160 = vld [vmem:[%s896] sm:$0xff]
        %v2161 = vld [vmem:[%s896 + $0x8] sm:$0xff]
        %v2162 = vld [vmem:[%s896 + $0x10] sm:$0x11]
        %v2163 = vld [vmem:[%s896 + $0x18] sm:$0xff]
        %v2164 = vld [vmem:[%s896 + $0x20] sm:$0xff]
        %v2165 = vld [vmem:[%s896 + $0x28] sm:$0x11]
        %v2166 = vld [vmem:[%s896 + $0x30] sm:$0xff]
        %v2167 = vld [vmem:[%s896 + $0x38] sm:$0xff]
        %v2168 = vld [vmem:[%s896 + $0x40] sm:$0x11]
        %v2169 = vld [vmem:[%s896 + $0x48] sm:$0xff]
        %v2170 = vld [vmem:[%s896 + $0x50] sm:$0xff]
        %v2171 = vld [vmem:[%s896 + $0x58] sm:$0x11]
        %v2172 = vld [vmem:[%s896 + $0x60] sm:$0xff]
        %v2173 = vld [vmem:[%s896 + $0x68] sm:$0xff]
        %v2174 = vld [vmem:[%s896 + $0x70] sm:$0x11]
        %v2175 = vld [vmem:[%s896 + $0x78] sm:$0xff]
        %v2176 = vld [vmem:[%s896 + $0x80] sm:$0xff]
        %v2177 = vld [vmem:[%s896 + $0x88] sm:$0x11]
        %v2178 = vld [vmem:[%s896 + $0x90] sm:$0xff]
        %v2179 = vld [vmem:[%s896 + $0x98] sm:$0xff]
        %v2180 = vld [vmem:[%s896 + $0xa0] sm:$0x11]
        %v2181 = vld [vmem:[%s896 + $0xa8] sm:$0xff]
        %v2182 = vld [vmem:[%s896 + $0xb0] sm:$0xff]
        %v2183 = vld [vmem:[%s896 + $0xb8] sm:$0x11]
        %v2184 = vunpack.c.l.bf16 %v2160
        %v2185 = vunpack.c.h.bf16 %v2160
        %v2186 = vunpack.c.l.bf16 %v2161
        %v2187 = vunpack.c.h.bf16 %v2161
        %v2188 = vunpack.c.l.bf16 %v2163
        %v2189 = vunpack.c.h.bf16 %v2163
        %v2190 = vunpack.c.l.bf16 %v2164
        %v2191 = vunpack.c.h.bf16 %v2164
        %v2192 = vunpack.c.l.bf16 %v2166
        %v2193 = vunpack.c.h.bf16 %v2166
        %v2194 = vunpack.c.l.bf16 %v2167
        %v2195 = vunpack.c.h.bf16 %v2167
        %v2196 = vunpack.c.l.bf16 %v2169
        %v2197 = vunpack.c.h.bf16 %v2169
        %v2198 = vunpack.c.l.bf16 %v2170
        %v2199 = vunpack.c.h.bf16 %v2170
        %v2200 = vunpack.c.l.bf16 %v2172
        %v2201 = vunpack.c.h.bf16 %v2172
        %v2202 = vunpack.c.l.bf16 %v2173
        %v2203 = vunpack.c.h.bf16 %v2173
        %v2204 = vunpack.c.l.bf16 %v2175
        %v2205 = vunpack.c.h.bf16 %v2175
        %v2206 = vunpack.c.l.bf16 %v2176
        %v2207 = vunpack.c.h.bf16 %v2176
        %v2208 = vunpack.c.l.bf16 %v2178
        %v2209 = vunpack.c.h.bf16 %v2178
        %v2210 = vunpack.c.l.bf16 %v2179
        %v2211 = vunpack.c.h.bf16 %v2179
        %v2212 = vunpack.c.l.bf16 %v2181
        %v2213 = vunpack.c.h.bf16 %v2181
        %v2214 = vunpack.c.l.bf16 %v2182
        %v2215 = vunpack.c.h.bf16 %v2182
        %v2217 = vlaneseq
        %v2218 = vshrl.u32 %v2217, 7
        %v2219 = vsub.s32 0, %v2218
        %v2220 = vrot.slane %v1498, %v2219
        %v2221 = vlaneseq
        %v2222 = vshrl.u32 %v2221, 7
        %v2223 = vsub.s32 1, %v2222
        %v2224 = vrot.slane %v1498, %v2223
        %v2227 = vmul.f32 %v2184, %v2220
        %v2228 = vmul.f32 %v2185, %v2224
        %v2229 = vmul.f32 %v2186, %v2220
        %v2230 = vmul.f32 %v2187, %v2224
        %v2231 = vmul.f32 %v2188, %v2220
        %v2232 = vmul.f32 %v2189, %v2224
        %v2233 = vmul.f32 %v2190, %v2220
        %v2234 = vmul.f32 %v2191, %v2224
        %v2235 = vmul.f32 %v2192, %v2220
        %v2236 = vmul.f32 %v2193, %v2224
        %v2237 = vmul.f32 %v2194, %v2220
        %v2238 = vmul.f32 %v2195, %v2224
        %v2239 = vmul.f32 %v2196, %v2220
        %v2240 = vmul.f32 %v2197, %v2224
        %v2241 = vmul.f32 %v2198, %v2220
        %v2242 = vmul.f32 %v2199, %v2224
        %v2243 = vmul.f32 %v2200, %v2220
        %v2244 = vmul.f32 %v2201, %v2224
        %v2245 = vmul.f32 %v2202, %v2220
        %v2246 = vmul.f32 %v2203, %v2224
        %v2247 = vmul.f32 %v2204, %v2220
        %v2248 = vmul.f32 %v2205, %v2224
        %v2249 = vmul.f32 %v2206, %v2220
        %v2250 = vmul.f32 %v2207, %v2224
        %v2251 = vmul.f32 %v2208, %v2220
        %v2252 = vmul.f32 %v2209, %v2224
        %v2253 = vmul.f32 %v2210, %v2220
        %v2254 = vmul.f32 %v2211, %v2224
        %v2255 = vmul.f32 %v2212, %v2220
        %v2256 = vmul.f32 %v2213, %v2224
        %v2257 = vmul.f32 %v2214, %v2220
        %v2258 = vmul.f32 %v2215, %v2224
        %v2259 = vadd.f32 %v2128, %v2227
        %v2260 = vadd.f32 %v2129, %v2228
        %v2261 = vadd.f32 %v2130, %v2229
        %v2262 = vadd.f32 %v2131, %v2230
        %v2263 = vadd.f32 %v2132, %v2231
        %v2264 = vadd.f32 %v2133, %v2232
        %v2265 = vadd.f32 %v2134, %v2233
        %v2266 = vadd.f32 %v2135, %v2234
        %v2267 = vadd.f32 %v2136, %v2235
        %v2268 = vadd.f32 %v2137, %v2236
        %v2269 = vadd.f32 %v2138, %v2237
        %v2270 = vadd.f32 %v2139, %v2238
        %v2271 = vadd.f32 %v2140, %v2239
        %v2272 = vadd.f32 %v2141, %v2240
        %v2273 = vadd.f32 %v2142, %v2241
        %v2274 = vadd.f32 %v2143, %v2242
        %v2275 = vadd.f32 %v2144, %v2243
        %v2276 = vadd.f32 %v2145, %v2244
        %v2277 = vadd.f32 %v2146, %v2245
        %v2278 = vadd.f32 %v2147, %v2246
        %v2279 = vadd.f32 %v2148, %v2247
        %v2280 = vadd.f32 %v2149, %v2248
        %v2281 = vadd.f32 %v2150, %v2249
        %v2282 = vadd.f32 %v2151, %v2250
        %v2283 = vadd.f32 %v2152, %v2251
        %v2284 = vadd.f32 %v2153, %v2252
        %v2285 = vadd.f32 %v2154, %v2253
        %v2286 = vadd.f32 %v2155, %v2254
        %v2287 = vadd.f32 %v2156, %v2255
        %v2288 = vadd.f32 %v2157, %v2256
        %v2289 = vadd.f32 %v2158, %v2257
        %v2290 = vadd.f32 %v2159, %v2258
        %v2291 = vunpack.c.l.bf16 %v2162
        %v2292 = vunpack.c.h.bf16 %v2162
        %v2293 = vunpack.c.l.bf16 %v2165
        %v2294 = vunpack.c.h.bf16 %v2165
        %v2295 = vunpack.c.l.bf16 %v2168
        %v2296 = vunpack.c.h.bf16 %v2168
        %v2297 = vunpack.c.l.bf16 %v2171
        %v2298 = vunpack.c.h.bf16 %v2171
        %v2299 = vunpack.c.l.bf16 %v2174
        %v2300 = vunpack.c.h.bf16 %v2174
        %v2301 = vunpack.c.l.bf16 %v2177
        %v2302 = vunpack.c.h.bf16 %v2177
        %v2303 = vunpack.c.l.bf16 %v2180
        %v2304 = vunpack.c.h.bf16 %v2180
        %v2305 = vunpack.c.l.bf16 %v2183
        %v2306 = vunpack.c.h.bf16 %v2183
        %v2308 = vlaneseq
        %v2309 = vshrl.u32 %v2308, 7
        %v2310 = vsub.s32 0, %v2309
        %v2311 = vrot.slane %v1500, %v2310
        %v2312 = vlaneseq
        %v2313 = vshrl.u32 %v2312, 7
        %v2314 = vsub.s32 1, %v2313
        %v2315 = vrot.slane %v1500, %v2314
        %v2318 = vmul.f32 %v2184, %v2311
        %v2319 = vmul.f32 %v2185, %v2315
        %v2320 = vmul.f32 %v2186, %v2311
        %v2321 = vmul.f32 %v2187, %v2315
        %v2322 = vmul.f32 %v2291, %v2311
        %v2323 = vmul.f32 %v2292, %v2315
        %v2324 = vmul.f32 %v2188, %v2311
        %v2325 = vmul.f32 %v2189, %v2315
        %v2326 = vmul.f32 %v2190, %v2311
        %v2327 = vmul.f32 %v2191, %v2315
        %v2328 = vmul.f32 %v2293, %v2311
        %v2329 = vmul.f32 %v2294, %v2315
        %v2330 = vmul.f32 %v2192, %v2311
        %v2331 = vmul.f32 %v2193, %v2315
        %v2332 = vmul.f32 %v2194, %v2311
        %v2333 = vmul.f32 %v2195, %v2315
        %v2334 = vmul.f32 %v2295, %v2311
        %v2335 = vmul.f32 %v2296, %v2315
        %v2336 = vmul.f32 %v2196, %v2311
        %v2337 = vmul.f32 %v2197, %v2315
        %v2338 = vmul.f32 %v2198, %v2311
        %v2339 = vmul.f32 %v2199, %v2315
        %v2340 = vmul.f32 %v2297, %v2311
        %v2341 = vmul.f32 %v2298, %v2315
        %v2342 = vmul.f32 %v2200, %v2311
        %v2343 = vmul.f32 %v2201, %v2315
        %v2344 = vmul.f32 %v2202, %v2311
        %v2345 = vmul.f32 %v2203, %v2315
        %v2346 = vmul.f32 %v2299, %v2311
        %v2347 = vmul.f32 %v2300, %v2315
        %v2348 = vmul.f32 %v2204, %v2311
        %v2349 = vmul.f32 %v2205, %v2315
        %v2350 = vmul.f32 %v2206, %v2311
        %v2351 = vmul.f32 %v2207, %v2315
        %v2352 = vmul.f32 %v2301, %v2311
        %v2353 = vmul.f32 %v2302, %v2315
        %v2354 = vmul.f32 %v2208, %v2311
        %v2355 = vmul.f32 %v2209, %v2315
        %v2356 = vmul.f32 %v2210, %v2311
        %v2357 = vmul.f32 %v2211, %v2315
        %v2358 = vmul.f32 %v2303, %v2311
        %v2359 = vmul.f32 %v2304, %v2315
        %v2360 = vmul.f32 %v2212, %v2311
        %v2361 = vmul.f32 %v2213, %v2315
        %v2362 = vmul.f32 %v2214, %v2311
        %v2363 = vmul.f32 %v2215, %v2315
        %v2364 = vmul.f32 %v2305, %v2311
        %v2365 = vmul.f32 %v2306, %v2315
        %v2414 = vrot.slane %v2318, 1
        %v2415 = vrot.slane %v2320, 1
        %v2416 = vsel %vm1763, %v2414, %v2415
        %v2417 = vrot.slane %v2319, 1
        %v2418 = vrot.slane %v2321, 1
        %v2419 = vsel %vm1763, %v2417, %v2418
        %v2420 = vrot.slane %v2322, 1
        %v2421 = vsel %vm1763, %v2415, %v2420
        %v2422 = vrot.slane %v2323, 1
        %v2423 = vsel %vm1763, %v2418, %v2422
        %v2424 = vrot.slane %v2324, 1
        %v2425 = vrot.slane %v2326, 1
        %v2426 = vsel %vm1763, %v2424, %v2425
        %v2427 = vrot.slane %v2325, 1
        %v2428 = vrot.slane %v2327, 1
        %v2429 = vsel %vm1763, %v2427, %v2428
        %v2430 = vrot.slane %v2328, 1
        %v2431 = vsel %vm1763, %v2425, %v2430
        %v2432 = vrot.slane %v2329, 1
        %v2433 = vsel %vm1763, %v2428, %v2432
        %v2434 = vrot.slane %v2330, 1
        %v2435 = vrot.slane %v2332, 1
        %v2436 = vsel %vm1763, %v2434, %v2435
        %v2437 = vrot.slane %v2331, 1
        %v2438 = vrot.slane %v2333, 1
        %v2439 = vsel %vm1763, %v2437, %v2438
        %v2440 = vrot.slane %v2334, 1
        %v2441 = vsel %vm1763, %v2435, %v2440
        %v2442 = vrot.slane %v2335, 1
        %v2443 = vsel %vm1763, %v2438, %v2442
        %v2444 = vrot.slane %v2336, 1
        %v2445 = vrot.slane %v2338, 1
        %v2446 = vsel %vm1763, %v2444, %v2445
        %v2447 = vrot.slane %v2337, 1
        %v2448 = vrot.slane %v2339, 1
        %v2449 = vsel %vm1763, %v2447, %v2448
        %v2450 = vrot.slane %v2340, 1
        %v2451 = vsel %vm1763, %v2445, %v2450
        %v2452 = vrot.slane %v2341, 1
        %v2453 = vsel %vm1763, %v2448, %v2452
        %v2454 = vrot.slane %v2342, 1
        %v2455 = vrot.slane %v2344, 1
        %v2456 = vsel %vm1763, %v2454, %v2455
        %v2457 = vrot.slane %v2343, 1
        %v2458 = vrot.slane %v2345, 1
        %v2459 = vsel %vm1763, %v2457, %v2458
        %v2460 = vrot.slane %v2346, 1
        %v2461 = vsel %vm1763, %v2455, %v2460
        %v2462 = vrot.slane %v2347, 1
        %v2463 = vsel %vm1763, %v2458, %v2462
        %v2464 = vrot.slane %v2348, 1
        %v2465 = vrot.slane %v2350, 1
        %v2466 = vsel %vm1763, %v2464, %v2465
        %v2467 = vrot.slane %v2349, 1
        %v2468 = vrot.slane %v2351, 1
        %v2469 = vsel %vm1763, %v2467, %v2468
        %v2470 = vrot.slane %v2352, 1
        %v2471 = vsel %vm1763, %v2465, %v2470
        %v2472 = vrot.slane %v2353, 1
        %v2473 = vsel %vm1763, %v2468, %v2472
        %v2474 = vrot.slane %v2354, 1
        %v2475 = vrot.slane %v2356, 1
        %v2476 = vsel %vm1763, %v2474, %v2475
        %v2477 = vrot.slane %v2355, 1
        %v2478 = vrot.slane %v2357, 1
        %v2479 = vsel %vm1763, %v2477, %v2478
        %v2480 = vrot.slane %v2358, 1
        %v2481 = vsel %vm1763, %v2475, %v2480
        %v2482 = vrot.slane %v2359, 1
        %v2483 = vsel %vm1763, %v2478, %v2482
        %v2484 = vrot.slane %v2360, 1
        %v2485 = vrot.slane %v2362, 1
        %v2486 = vsel %vm1763, %v2484, %v2485
        %v2487 = vrot.slane %v2361, 1
        %v2488 = vrot.slane %v2363, 1
        %v2489 = vsel %vm1763, %v2487, %v2488
        %v2490 = vrot.slane %v2364, 1
        %v2491 = vsel %vm1763, %v2485, %v2490
        %v2492 = vrot.slane %v2365, 1
        %v2493 = vsel %vm1763, %v2488, %v2492
        %v2526 = vadd.f32 %v2259, %v2416
        %v2527 = vadd.f32 %v2260, %v2419
        %v2528 = vadd.f32 %v2261, %v2421
        %v2529 = vadd.f32 %v2262, %v2423
        %v2530 = vadd.f32 %v2263, %v2426
        %v2531 = vadd.f32 %v2264, %v2429
        %v2532 = vadd.f32 %v2265, %v2431
        %v2533 = vadd.f32 %v2266, %v2433
        %v2534 = vadd.f32 %v2267, %v2436
        %v2535 = vadd.f32 %v2268, %v2439
        %v2536 = vadd.f32 %v2269, %v2441
        %v2537 = vadd.f32 %v2270, %v2443
        %v2538 = vadd.f32 %v2271, %v2446
        %v2539 = vadd.f32 %v2272, %v2449
        %v2540 = vadd.f32 %v2273, %v2451
        %v2541 = vadd.f32 %v2274, %v2453
        %v2542 = vadd.f32 %v2275, %v2456
        %v2543 = vadd.f32 %v2276, %v2459
        %v2544 = vadd.f32 %v2277, %v2461
        %v2545 = vadd.f32 %v2278, %v2463
        %v2546 = vadd.f32 %v2279, %v2466
        %v2547 = vadd.f32 %v2280, %v2469
        %v2548 = vadd.f32 %v2281, %v2471
        %v2549 = vadd.f32 %v2282, %v2473
        %v2550 = vadd.f32 %v2283, %v2476
        %v2551 = vadd.f32 %v2284, %v2479
        %v2552 = vadd.f32 %v2285, %v2481
        %v2553 = vadd.f32 %v2286, %v2483
        %v2554 = vadd.f32 %v2287, %v2486
        %v2555 = vadd.f32 %v2288, %v2489
        %v2556 = vadd.f32 %v2289, %v2491
        %v2557 = vadd.f32 %v2290, %v2493
        %v2559 = vlaneseq
        %v2560 = vshrl.u32 %v2559, 7
        %v2561 = vsub.s32 0, %v2560
        %v2562 = vrot.slane %v1502, %v2561
        %v2563 = vlaneseq
        %v2564 = vshrl.u32 %v2563, 7
        %v2565 = vsub.s32 1, %v2564
        %v2566 = vrot.slane %v1502, %v2565
        %v2569 = vmul.f32 %v2184, %v2562
        %v2570 = vmul.f32 %v2185, %v2566
        %v2571 = vmul.f32 %v2186, %v2562
        %v2572 = vmul.f32 %v2187, %v2566
        %v2573 = vmul.f32 %v2291, %v2562
        %v2574 = vmul.f32 %v2292, %v2566
        %v2575 = vmul.f32 %v2188, %v2562
        %v2576 = vmul.f32 %v2189, %v2566
        %v2577 = vmul.f32 %v2190, %v2562
        %v2578 = vmul.f32 %v2191, %v2566
        %v2579 = vmul.f32 %v2293, %v2562
        %v2580 = vmul.f32 %v2294, %v2566
        %v2581 = vmul.f32 %v2192, %v2562
        %v2582 = vmul.f32 %v2193, %v2566
        %v2583 = vmul.f32 %v2194, %v2562
        %v2584 = vmul.f32 %v2195, %v2566
        %v2585 = vmul.f32 %v2295, %v2562
        %v2586 = vmul.f32 %v2296, %v2566
        %v2587 = vmul.f32 %v2196, %v2562
        %v2588 = vmul.f32 %v2197, %v2566
        %v2589 = vmul.f32 %v2198, %v2562
        %v2590 = vmul.f32 %v2199, %v2566
        %v2591 = vmul.f32 %v2297, %v2562
        %v2592 = vmul.f32 %v2298, %v2566
        %v2593 = vmul.f32 %v2200, %v2562
        %v2594 = vmul.f32 %v2201, %v2566
        %v2595 = vmul.f32 %v2202, %v2562
        %v2596 = vmul.f32 %v2203, %v2566
        %v2597 = vmul.f32 %v2299, %v2562
        %v2598 = vmul.f32 %v2300, %v2566
        %v2599 = vmul.f32 %v2204, %v2562
        %v2600 = vmul.f32 %v2205, %v2566
        %v2601 = vmul.f32 %v2206, %v2562
        %v2602 = vmul.f32 %v2207, %v2566
        %v2603 = vmul.f32 %v2301, %v2562
        %v2604 = vmul.f32 %v2302, %v2566
        %v2605 = vmul.f32 %v2208, %v2562
        %v2606 = vmul.f32 %v2209, %v2566
        %v2607 = vmul.f32 %v2210, %v2562
        %v2608 = vmul.f32 %v2211, %v2566
        %v2609 = vmul.f32 %v2303, %v2562
        %v2610 = vmul.f32 %v2304, %v2566
        %v2611 = vmul.f32 %v2212, %v2562
        %v2612 = vmul.f32 %v2213, %v2566
        %v2613 = vmul.f32 %v2214, %v2562
        %v2614 = vmul.f32 %v2215, %v2566
        %v2615 = vmul.f32 %v2305, %v2562
        %v2616 = vmul.f32 %v2306, %v2566
        %v2665 = vrot.slane %v2569, 2
        %v2666 = vrot.slane %v2571, 2
        %v2667 = vsel %vm2015, %v2665, %v2666
        %v2668 = vrot.slane %v2570, 2
        %v2669 = vrot.slane %v2572, 2
        %v2670 = vsel %vm2015, %v2668, %v2669
        %v2671 = vrot.slane %v2573, 2
        %v2672 = vsel %vm2015, %v2666, %v2671
        %v2673 = vrot.slane %v2574, 2
        %v2674 = vsel %vm2015, %v2669, %v2673
        %v2675 = vrot.slane %v2575, 2
        %v2676 = vrot.slane %v2577, 2
        %v2677 = vsel %vm2015, %v2675, %v2676
        %v2678 = vrot.slane %v2576, 2
        %v2679 = vrot.slane %v2578, 2
        %v2680 = vsel %vm2015, %v2678, %v2679
        %v2681 = vrot.slane %v2579, 2
        %v2682 = vsel %vm2015, %v2676, %v2681
        %v2683 = vrot.slane %v2580, 2
        %v2684 = vsel %vm2015, %v2679, %v2683
        %v2685 = vrot.slane %v2581, 2
        %v2686 = vrot.slane %v2583, 2
        %v2687 = vsel %vm2015, %v2685, %v2686
        %v2688 = vrot.slane %v2582, 2
        %v2689 = vrot.slane %v2584, 2
        %v2690 = vsel %vm2015, %v2688, %v2689
        %v2691 = vrot.slane %v2585, 2
        %v2692 = vsel %vm2015, %v2686, %v2691
        %v2693 = vrot.slane %v2586, 2
        %v2694 = vsel %vm2015, %v2689, %v2693
        %v2695 = vrot.slane %v2587, 2
        %v2696 = vrot.slane %v2589, 2
        %v2697 = vsel %vm2015, %v2695, %v2696
        %v2698 = vrot.slane %v2588, 2
        %v2699 = vrot.slane %v2590, 2
        %v2700 = vsel %vm2015, %v2698, %v2699
        %v2701 = vrot.slane %v2591, 2
        %v2702 = vsel %vm2015, %v2696, %v2701
        %v2703 = vrot.slane %v2592, 2
        %v2704 = vsel %vm2015, %v2699, %v2703
        %v2705 = vrot.slane %v2593, 2
        %v2706 = vrot.slane %v2595, 2
        %v2707 = vsel %vm2015, %v2705, %v2706
        %v2708 = vrot.slane %v2594, 2
        %v2709 = vrot.slane %v2596, 2
        %v2710 = vsel %vm2015, %v2708, %v2709
        %v2711 = vrot.slane %v2597, 2
        %v2712 = vsel %vm2015, %v2706, %v2711
        %v2713 = vrot.slane %v2598, 2
        %v2714 = vsel %vm2015, %v2709, %v2713
        %v2715 = vrot.slane %v2599, 2
        %v2716 = vrot.slane %v2601, 2
        %v2717 = vsel %vm2015, %v2715, %v2716
        %v2718 = vrot.slane %v2600, 2
        %v2719 = vrot.slane %v2602, 2
        %v2720 = vsel %vm2015, %v2718, %v2719
        %v2721 = vrot.slane %v2603, 2
        %v2722 = vsel %vm2015, %v2716, %v2721
        %v2723 = vrot.slane %v2604, 2
        %v2724 = vsel %vm2015, %v2719, %v2723
        %v2725 = vrot.slane %v2605, 2
        %v2726 = vrot.slane %v2607, 2
        %v2727 = vsel %vm2015, %v2725, %v2726
        %v2728 = vrot.slane %v2606, 2
        %v2729 = vrot.slane %v2608, 2
        %v2730 = vsel %vm2015, %v2728, %v2729
        %v2731 = vrot.slane %v2609, 2
        %v2732 = vsel %vm2015, %v2726, %v2731
        %v2733 = vrot.slane %v2610, 2
        %v2734 = vsel %vm2015, %v2729, %v2733
        %v2735 = vrot.slane %v2611, 2
        %v2736 = vrot.slane %v2613, 2
        %v2737 = vsel %vm2015, %v2735, %v2736
        %v2738 = vrot.slane %v2612, 2
        %v2739 = vrot.slane %v2614, 2
        %v2740 = vsel %vm2015, %v2738, %v2739
        %v2741 = vrot.slane %v2615, 2
        %v2742 = vsel %vm2015, %v2736, %v2741
        %v2743 = vrot.slane %v2616, 2
        %v2744 = vsel %vm2015, %v2739, %v2743
        %v2777 = vadd.f32 %v2526, %v2667
        %v2778 = vadd.f32 %v2527, %v2670
        %v2779 = vadd.f32 %v2528, %v2672
        %v2780 = vadd.f32 %v2529, %v2674
        %v2781 = vadd.f32 %v2530, %v2677
        %v2782 = vadd.f32 %v2531, %v2680
        %v2783 = vadd.f32 %v2532, %v2682
        %v2784 = vadd.f32 %v2533, %v2684
        %v2785 = vadd.f32 %v2534, %v2687
        %v2786 = vadd.f32 %v2535, %v2690
        %v2787 = vadd.f32 %v2536, %v2692
        %v2788 = vadd.f32 %v2537, %v2694
        %v2789 = vadd.f32 %v2538, %v2697
        %v2790 = vadd.f32 %v2539, %v2700
        %v2791 = vadd.f32 %v2540, %v2702
        %v2792 = vadd.f32 %v2541, %v2704
        %v2793 = vadd.f32 %v2542, %v2707
        %v2794 = vadd.f32 %v2543, %v2710
        %v2795 = vadd.f32 %v2544, %v2712
        %v2796 = vadd.f32 %v2545, %v2714
        %v2797 = vadd.f32 %v2546, %v2717
        %v2798 = vadd.f32 %v2547, %v2720
        %v2799 = vadd.f32 %v2548, %v2722
        %v2800 = vadd.f32 %v2549, %v2724
        %v2801 = vadd.f32 %v2550, %v2727
        %v2802 = vadd.f32 %v2551, %v2730
        %v2803 = vadd.f32 %v2552, %v2732
        %v2804 = vadd.f32 %v2553, %v2734
        %v2805 = vadd.f32 %v2554, %v2737
        %v2806 = vadd.f32 %v2555, %v2740
        %v2807 = vadd.f32 %v2556, %v2742
        %v2808 = vadd.f32 %v2557, %v2744
        %s2809 = scalar_lea.vmem [#allocation2], 48
        %v2810 = vld [vmem:[%s2809] sm:$0xff]
        %v2811 = vld [vmem:[%s2809 + $0x8] sm:$0xff]
        %v2812 = vld [vmem:[%s2809 + $0x10] sm:$0x11]
        %v2813 = vld [vmem:[%s2809 + $0x18] sm:$0xff]
        %v2814 = vld [vmem:[%s2809 + $0x20] sm:$0xff]
        %v2815 = vld [vmem:[%s2809 + $0x28] sm:$0x11]
        %v2816 = vld [vmem:[%s2809 + $0x30] sm:$0xff]
        %v2817 = vld [vmem:[%s2809 + $0x38] sm:$0xff]
        %v2818 = vld [vmem:[%s2809 + $0x40] sm:$0x11]
        %v2819 = vld [vmem:[%s2809 + $0x48] sm:$0xff]
        %v2820 = vld [vmem:[%s2809 + $0x50] sm:$0xff]
        %v2821 = vld [vmem:[%s2809 + $0x58] sm:$0x11]
        %v2822 = vld [vmem:[%s2809 + $0x60] sm:$0xff]
        %v2823 = vld [vmem:[%s2809 + $0x68] sm:$0xff]
        %v2824 = vld [vmem:[%s2809 + $0x70] sm:$0x11]
        %v2825 = vld [vmem:[%s2809 + $0x78] sm:$0xff]
        %v2826 = vld [vmem:[%s2809 + $0x80] sm:$0xff]
        %v2827 = vld [vmem:[%s2809 + $0x88] sm:$0x11]
        %v2828 = vld [vmem:[%s2809 + $0x90] sm:$0xff]
        %v2829 = vld [vmem:[%s2809 + $0x98] sm:$0xff]
        %v2830 = vld [vmem:[%s2809 + $0xa0] sm:$0x11]
        %v2831 = vld [vmem:[%s2809 + $0xa8] sm:$0xff]
        %v2832 = vld [vmem:[%s2809 + $0xb0] sm:$0xff]
        %v2833 = vld [vmem:[%s2809 + $0xb8] sm:$0x11]
        %v2834 = vunpack.c.l.bf16 %v2810
        %v2835 = vunpack.c.h.bf16 %v2810
        %v2836 = vunpack.c.l.bf16 %v2811
        %v2837 = vunpack.c.h.bf16 %v2811
        %v2838 = vunpack.c.l.bf16 %v2813
        %v2839 = vunpack.c.h.bf16 %v2813
        %v2840 = vunpack.c.l.bf16 %v2814
        %v2841 = vunpack.c.h.bf16 %v2814
        %v2842 = vunpack.c.l.bf16 %v2816
        %v2843 = vunpack.c.h.bf16 %v2816
        %v2844 = vunpack.c.l.bf16 %v2817
        %v2845 = vunpack.c.h.bf16 %v2817
        %v2846 = vunpack.c.l.bf16 %v2819
        %v2847 = vunpack.c.h.bf16 %v2819
        %v2848 = vunpack.c.l.bf16 %v2820
        %v2849 = vunpack.c.h.bf16 %v2820
        %v2850 = vunpack.c.l.bf16 %v2822
        %v2851 = vunpack.c.h.bf16 %v2822
        %v2852 = vunpack.c.l.bf16 %v2823
        %v2853 = vunpack.c.h.bf16 %v2823
        %v2854 = vunpack.c.l.bf16 %v2825
        %v2855 = vunpack.c.h.bf16 %v2825
        %v2856 = vunpack.c.l.bf16 %v2826
        %v2857 = vunpack.c.h.bf16 %v2826
        %v2858 = vunpack.c.l.bf16 %v2828
        %v2859 = vunpack.c.h.bf16 %v2828
        %v2860 = vunpack.c.l.bf16 %v2829
        %v2861 = vunpack.c.h.bf16 %v2829
        %v2862 = vunpack.c.l.bf16 %v2831
        %v2863 = vunpack.c.h.bf16 %v2831
        %v2864 = vunpack.c.l.bf16 %v2832
        %v2865 = vunpack.c.h.bf16 %v2832
        %v2867 = vlaneseq
        %v2868 = vshrl.u32 %v2867, 7
        %v2869 = vsub.s32 0, %v2868
        %v2870 = vrot.slane %v1504, %v2869
        %v2871 = vlaneseq
        %v2872 = vshrl.u32 %v2871, 7
        %v2873 = vsub.s32 1, %v2872
        %v2874 = vrot.slane %v1504, %v2873
        %v2877 = vmul.f32 %v2834, %v2870
        %v2878 = vmul.f32 %v2835, %v2874
        %v2879 = vmul.f32 %v2836, %v2870
        %v2880 = vmul.f32 %v2837, %v2874
        %v2881 = vmul.f32 %v2838, %v2870
        %v2882 = vmul.f32 %v2839, %v2874
        %v2883 = vmul.f32 %v2840, %v2870
        %v2884 = vmul.f32 %v2841, %v2874
        %v2885 = vmul.f32 %v2842, %v2870
        %v2886 = vmul.f32 %v2843, %v2874
        %v2887 = vmul.f32 %v2844, %v2870
        %v2888 = vmul.f32 %v2845, %v2874
        %v2889 = vmul.f32 %v2846, %v2870
        %v2890 = vmul.f32 %v2847, %v2874
        %v2891 = vmul.f32 %v2848, %v2870
        %v2892 = vmul.f32 %v2849, %v2874
        %v2893 = vmul.f32 %v2850, %v2870
        %v2894 = vmul.f32 %v2851, %v2874
        %v2895 = vmul.f32 %v2852, %v2870
        %v2896 = vmul.f32 %v2853, %v2874
        %v2897 = vmul.f32 %v2854, %v2870
        %v2898 = vmul.f32 %v2855, %v2874
        %v2899 = vmul.f32 %v2856, %v2870
        %v2900 = vmul.f32 %v2857, %v2874
        %v2901 = vmul.f32 %v2858, %v2870
        %v2902 = vmul.f32 %v2859, %v2874
        %v2903 = vmul.f32 %v2860, %v2870
        %v2904 = vmul.f32 %v2861, %v2874
        %v2905 = vmul.f32 %v2862, %v2870
        %v2906 = vmul.f32 %v2863, %v2874
        %v2907 = vmul.f32 %v2864, %v2870
        %v2908 = vmul.f32 %v2865, %v2874
        %v2909 = vadd.f32 %v2777, %v2877
        %v2910 = vadd.f32 %v2778, %v2878
        %v2911 = vadd.f32 %v2779, %v2879
        %v2912 = vadd.f32 %v2780, %v2880
        %v2913 = vadd.f32 %v2781, %v2881
        %v2914 = vadd.f32 %v2782, %v2882
        %v2915 = vadd.f32 %v2783, %v2883
        %v2916 = vadd.f32 %v2784, %v2884
        %v2917 = vadd.f32 %v2785, %v2885
        %v2918 = vadd.f32 %v2786, %v2886
        %v2919 = vadd.f32 %v2787, %v2887
        %v2920 = vadd.f32 %v2788, %v2888
        %v2921 = vadd.f32 %v2789, %v2889
        %v2922 = vadd.f32 %v2790, %v2890
        %v2923 = vadd.f32 %v2791, %v2891
        %v2924 = vadd.f32 %v2792, %v2892
        %v2925 = vadd.f32 %v2793, %v2893
        %v2926 = vadd.f32 %v2794, %v2894
        %v2927 = vadd.f32 %v2795, %v2895
        %v2928 = vadd.f32 %v2796, %v2896
        %v2929 = vadd.f32 %v2797, %v2897
        %v2930 = vadd.f32 %v2798, %v2898
        %v2931 = vadd.f32 %v2799, %v2899
        %v2932 = vadd.f32 %v2800, %v2900
        %v2933 = vadd.f32 %v2801, %v2901
        %v2934 = vadd.f32 %v2802, %v2902
        %v2935 = vadd.f32 %v2803, %v2903
        %v2936 = vadd.f32 %v2804, %v2904
        %v2937 = vadd.f32 %v2805, %v2905
        %v2938 = vadd.f32 %v2806, %v2906
        %v2939 = vadd.f32 %v2807, %v2907
        %v2940 = vadd.f32 %v2808, %v2908
        %v2941 = vunpack.c.l.bf16 %v2812
        %v2942 = vunpack.c.h.bf16 %v2812
        %v2943 = vunpack.c.l.bf16 %v2815
        %v2944 = vunpack.c.h.bf16 %v2815
        %v2945 = vunpack.c.l.bf16 %v2818
        %v2946 = vunpack.c.h.bf16 %v2818
        %v2947 = vunpack.c.l.bf16 %v2821
        %v2948 = vunpack.c.h.bf16 %v2821
        %v2949 = vunpack.c.l.bf16 %v2824
        %v2950 = vunpack.c.h.bf16 %v2824
        %v2951 = vunpack.c.l.bf16 %v2827
        %v2952 = vunpack.c.h.bf16 %v2827
        %v2953 = vunpack.c.l.bf16 %v2830
        %v2954 = vunpack.c.h.bf16 %v2830
        %v2955 = vunpack.c.l.bf16 %v2833
        %v2956 = vunpack.c.h.bf16 %v2833
        %v2958 = vlaneseq
        %v2959 = vshrl.u32 %v2958, 7
        %v2960 = vsub.s32 0, %v2959
        %v2961 = vrot.slane %v1506, %v2960
        %v2962 = vlaneseq
        %v2963 = vshrl.u32 %v2962, 7
        %v2964 = vsub.s32 1, %v2963
        %v2965 = vrot.slane %v1506, %v2964
        %v2968 = vmul.f32 %v2834, %v2961
        %v2969 = vmul.f32 %v2835, %v2965
        %v2970 = vmul.f32 %v2836, %v2961
        %v2971 = vmul.f32 %v2837, %v2965
        %v2972 = vmul.f32 %v2941, %v2961
        %v2973 = vmul.f32 %v2942, %v2965
        %v2974 = vmul.f32 %v2838, %v2961
        %v2975 = vmul.f32 %v2839, %v2965
        %v2976 = vmul.f32 %v2840, %v2961
        %v2977 = vmul.f32 %v2841, %v2965
        %v2978 = vmul.f32 %v2943, %v2961
        %v2979 = vmul.f32 %v2944, %v2965
        %v2980 = vmul.f32 %v2842, %v2961
        %v2981 = vmul.f32 %v2843, %v2965
        %v2982 = vmul.f32 %v2844, %v2961
        %v2983 = vmul.f32 %v2845, %v2965
        %v2984 = vmul.f32 %v2945, %v2961
        %v2985 = vmul.f32 %v2946, %v2965
        %v2986 = vmul.f32 %v2846, %v2961
        %v2987 = vmul.f32 %v2847, %v2965
        %v2988 = vmul.f32 %v2848, %v2961
        %v2989 = vmul.f32 %v2849, %v2965
        %v2990 = vmul.f32 %v2947, %v2961
        %v2991 = vmul.f32 %v2948, %v2965
        %v2992 = vmul.f32 %v2850, %v2961
        %v2993 = vmul.f32 %v2851, %v2965
        %v2994 = vmul.f32 %v2852, %v2961
        %v2995 = vmul.f32 %v2853, %v2965
        %v2996 = vmul.f32 %v2949, %v2961
        %v2997 = vmul.f32 %v2950, %v2965
        %v2998 = vmul.f32 %v2854, %v2961
        %v2999 = vmul.f32 %v2855, %v2965
        %v3000 = vmul.f32 %v2856, %v2961
        %v3001 = vmul.f32 %v2857, %v2965
        %v3002 = vmul.f32 %v2951, %v2961
        %v3003 = vmul.f32 %v2952, %v2965
        %v3004 = vmul.f32 %v2858, %v2961
        %v3005 = vmul.f32 %v2859, %v2965
        %v3006 = vmul.f32 %v2860, %v2961
        %v3007 = vmul.f32 %v2861, %v2965
        %v3008 = vmul.f32 %v2953, %v2961
        %v3009 = vmul.f32 %v2954, %v2965
        %v3010 = vmul.f32 %v2862, %v2961
        %v3011 = vmul.f32 %v2863, %v2965
        %v3012 = vmul.f32 %v2864, %v2961
        %v3013 = vmul.f32 %v2865, %v2965
        %v3014 = vmul.f32 %v2955, %v2961
        %v3015 = vmul.f32 %v2956, %v2965
        %v3064 = vrot.slane %v2968, 1
        %v3065 = vrot.slane %v2970, 1
        %v3066 = vsel %vm1763, %v3064, %v3065
        %v3067 = vrot.slane %v2969, 1
        %v3068 = vrot.slane %v2971, 1
        %v3069 = vsel %vm1763, %v3067, %v3068
        %v3070 = vrot.slane %v2972, 1
        %v3071 = vsel %vm1763, %v3065, %v3070
        %v3072 = vrot.slane %v2973, 1
        %v3073 = vsel %vm1763, %v3068, %v3072
        %v3074 = vrot.slane %v2974, 1
        %v3075 = vrot.slane %v2976, 1
        %v3076 = vsel %vm1763, %v3074, %v3075
        %v3077 = vrot.slane %v2975, 1
        %v3078 = vrot.slane %v2977, 1
        %v3079 = vsel %vm1763, %v3077, %v3078
        %v3080 = vrot.slane %v2978, 1
        %v3081 = vsel %vm1763, %v3075, %v3080
        %v3082 = vrot.slane %v2979, 1
        %v3083 = vsel %vm1763, %v3078, %v3082
        %v3084 = vrot.slane %v2980, 1
        %v3085 = vrot.slane %v2982, 1
        %v3086 = vsel %vm1763, %v3084, %v3085
        %v3087 = vrot.slane %v2981, 1
        %v3088 = vrot.slane %v2983, 1
        %v3089 = vsel %vm1763, %v3087, %v3088
        %v3090 = vrot.slane %v2984, 1
        %v3091 = vsel %vm1763, %v3085, %v3090
        %v3092 = vrot.slane %v2985, 1
        %v3093 = vsel %vm1763, %v3088, %v3092
        %v3094 = vrot.slane %v2986, 1
        %v3095 = vrot.slane %v2988, 1
        %v3096 = vsel %vm1763, %v3094, %v3095
        %v3097 = vrot.slane %v2987, 1
        %v3098 = vrot.slane %v2989, 1
        %v3099 = vsel %vm1763, %v3097, %v3098
        %v3100 = vrot.slane %v2990, 1
        %v3101 = vsel %vm1763, %v3095, %v3100
        %v3102 = vrot.slane %v2991, 1
        %v3103 = vsel %vm1763, %v3098, %v3102
        %v3104 = vrot.slane %v2992, 1
        %v3105 = vrot.slane %v2994, 1
        %v3106 = vsel %vm1763, %v3104, %v3105
        %v3107 = vrot.slane %v2993, 1
        %v3108 = vrot.slane %v2995, 1
        %v3109 = vsel %vm1763, %v3107, %v3108
        %v3110 = vrot.slane %v2996, 1
        %v3111 = vsel %vm1763, %v3105, %v3110
        %v3112 = vrot.slane %v2997, 1
        %v3113 = vsel %vm1763, %v3108, %v3112
        %v3114 = vrot.slane %v2998, 1
        %v3115 = vrot.slane %v3000, 1
        %v3116 = vsel %vm1763, %v3114, %v3115
        %v3117 = vrot.slane %v2999, 1
        %v3118 = vrot.slane %v3001, 1
        %v3119 = vsel %vm1763, %v3117, %v3118
        %v3120 = vrot.slane %v3002, 1
        %v3121 = vsel %vm1763, %v3115, %v3120
        %v3122 = vrot.slane %v3003, 1
        %v3123 = vsel %vm1763, %v3118, %v3122
        %v3124 = vrot.slane %v3004, 1
        %v3125 = vrot.slane %v3006, 1
        %v3126 = vsel %vm1763, %v3124, %v3125
        %v3127 = vrot.slane %v3005, 1
        %v3128 = vrot.slane %v3007, 1
        %v3129 = vsel %vm1763, %v3127, %v3128
        %v3130 = vrot.slane %v3008, 1
        %v3131 = vsel %vm1763, %v3125, %v3130
        %v3132 = vrot.slane %v3009, 1
        %v3133 = vsel %vm1763, %v3128, %v3132
        %v3134 = vrot.slane %v3010, 1
        %v3135 = vrot.slane %v3012, 1
        %v3136 = vsel %vm1763, %v3134, %v3135
        %v3137 = vrot.slane %v3011, 1
        %v3138 = vrot.slane %v3013, 1
        %v3139 = vsel %vm1763, %v3137, %v3138
        %v3140 = vrot.slane %v3014, 1
        %v3141 = vsel %vm1763, %v3135, %v3140
        %v3142 = vrot.slane %v3015, 1
        %v3143 = vsel %vm1763, %v3138, %v3142
        %v3176 = vadd.f32 %v2909, %v3066
        %v3177 = vadd.f32 %v2910, %v3069
        %v3178 = vadd.f32 %v2911, %v3071
        %v3179 = vadd.f32 %v2912, %v3073
        %v3180 = vadd.f32 %v2913, %v3076
        %v3181 = vadd.f32 %v2914, %v3079
        %v3182 = vadd.f32 %v2915, %v3081
        %v3183 = vadd.f32 %v2916, %v3083
        %v3184 = vadd.f32 %v2917, %v3086
        %v3185 = vadd.f32 %v2918, %v3089
        %v3186 = vadd.f32 %v2919, %v3091
        %v3187 = vadd.f32 %v2920, %v3093
        %v3188 = vadd.f32 %v2921, %v3096
        %v3189 = vadd.f32 %v2922, %v3099
        %v3190 = vadd.f32 %v2923, %v3101
        %v3191 = vadd.f32 %v2924, %v3103
        %v3192 = vadd.f32 %v2925, %v3106
        %v3193 = vadd.f32 %v2926, %v3109
        %v3194 = vadd.f32 %v2927, %v3111
        %v3195 = vadd.f32 %v2928, %v3113
        %v3196 = vadd.f32 %v2929, %v3116
        %v3197 = vadd.f32 %v2930, %v3119
        %v3198 = vadd.f32 %v2931, %v3121
        %v3199 = vadd.f32 %v2932, %v3123
        %v3200 = vadd.f32 %v2933, %v3126
        %v3201 = vadd.f32 %v2934, %v3129
        %v3202 = vadd.f32 %v2935, %v3131
        %v3203 = vadd.f32 %v2936, %v3133
        %v3204 = vadd.f32 %v2937, %v3136
        %v3205 = vadd.f32 %v2938, %v3139
        %v3206 = vadd.f32 %v2939, %v3141
        %v3207 = vadd.f32 %v2940, %v3143
        %v3209 = vlaneseq
        %v3210 = vshrl.u32 %v3209, 7
        %v3211 = vsub.s32 0, %v3210
        %v3212 = vrot.slane %v1508, %v3211
        %v3213 = vlaneseq
        %v3214 = vshrl.u32 %v3213, 7
        %v3215 = vsub.s32 1, %v3214
        %v3216 = vrot.slane %v1508, %v3215
        %v3219 = vmul.f32 %v2834, %v3212
        %v3220 = vmul.f32 %v2835, %v3216
        %v3221 = vmul.f32 %v2836, %v3212
        %v3222 = vmul.f32 %v2837, %v3216
        %v3223 = vmul.f32 %v2941, %v3212
        %v3224 = vmul.f32 %v2942, %v3216
        %v3225 = vmul.f32 %v2838, %v3212
        %v3226 = vmul.f32 %v2839, %v3216
        %v3227 = vmul.f32 %v2840, %v3212
        %v3228 = vmul.f32 %v2841, %v3216
        %v3229 = vmul.f32 %v2943, %v3212
        %v3230 = vmul.f32 %v2944, %v3216
        %v3231 = vmul.f32 %v2842, %v3212
        %v3232 = vmul.f32 %v2843, %v3216
        %v3233 = vmul.f32 %v2844, %v3212
        %v3234 = vmul.f32 %v2845, %v3216
        %v3235 = vmul.f32 %v2945, %v3212
        %v3236 = vmul.f32 %v2946, %v3216
        %v3237 = vmul.f32 %v2846, %v3212
        %v3238 = vmul.f32 %v2847, %v3216
        %v3239 = vmul.f32 %v2848, %v3212
        %v3240 = vmul.f32 %v2849, %v3216
        %v3241 = vmul.f32 %v2947, %v3212
        %v3242 = vmul.f32 %v2948, %v3216
        %v3243 = vmul.f32 %v2850, %v3212
        %v3244 = vmul.f32 %v2851, %v3216
        %v3245 = vmul.f32 %v2852, %v3212
        %v3246 = vmul.f32 %v2853, %v3216
        %v3247 = vmul.f32 %v2949, %v3212
        %v3248 = vmul.f32 %v2950, %v3216
        %v3249 = vmul.f32 %v2854, %v3212
        %v3250 = vmul.f32 %v2855, %v3216
        %v3251 = vmul.f32 %v2856, %v3212
        %v3252 = vmul.f32 %v2857, %v3216
        %v3253 = vmul.f32 %v2951, %v3212
        %v3254 = vmul.f32 %v2952, %v3216
        %v3255 = vmul.f32 %v2858, %v3212
        %v3256 = vmul.f32 %v2859, %v3216
        %v3257 = vmul.f32 %v2860, %v3212
        %v3258 = vmul.f32 %v2861, %v3216
        %v3259 = vmul.f32 %v2953, %v3212
        %v3260 = vmul.f32 %v2954, %v3216
        %v3261 = vmul.f32 %v2862, %v3212
        %v3262 = vmul.f32 %v2863, %v3216
        %v3263 = vmul.f32 %v2864, %v3212
        %v3264 = vmul.f32 %v2865, %v3216
        %v3265 = vmul.f32 %v2955, %v3212
        %v3266 = vmul.f32 %v2956, %v3216
        %v3315 = vrot.slane %v3219, 2
        %v3316 = vrot.slane %v3221, 2
        %v3317 = vsel %vm2015, %v3315, %v3316
        %v3318 = vrot.slane %v3220, 2
        %v3319 = vrot.slane %v3222, 2
        %v3320 = vsel %vm2015, %v3318, %v3319
        %v3321 = vrot.slane %v3223, 2
        %v3322 = vsel %vm2015, %v3316, %v3321
        %v3323 = vrot.slane %v3224, 2
        %v3324 = vsel %vm2015, %v3319, %v3323
        %v3325 = vrot.slane %v3225, 2
        %v3326 = vrot.slane %v3227, 2
        %v3327 = vsel %vm2015, %v3325, %v3326
        %v3328 = vrot.slane %v3226, 2
        %v3329 = vrot.slane %v3228, 2
        %v3330 = vsel %vm2015, %v3328, %v3329
        %v3331 = vrot.slane %v3229, 2
        %v3332 = vsel %vm2015, %v3326, %v3331
        %v3333 = vrot.slane %v3230, 2
        %v3334 = vsel %vm2015, %v3329, %v3333
        %v3335 = vrot.slane %v3231, 2
        %v3336 = vrot.slane %v3233, 2
        %v3337 = vsel %vm2015, %v3335, %v3336
        %v3338 = vrot.slane %v3232, 2
        %v3339 = vrot.slane %v3234, 2
        %v3340 = vsel %vm2015, %v3338, %v3339
        %v3341 = vrot.slane %v3235, 2
        %v3342 = vsel %vm2015, %v3336, %v3341
        %v3343 = vrot.slane %v3236, 2
        %v3344 = vsel %vm2015, %v3339, %v3343
        %v3345 = vrot.slane %v3237, 2
        %v3346 = vrot.slane %v3239, 2
        %v3347 = vsel %vm2015, %v3345, %v3346
        %v3348 = vrot.slane %v3238, 2
        %v3349 = vrot.slane %v3240, 2
        %v3350 = vsel %vm2015, %v3348, %v3349
        %v3351 = vrot.slane %v3241, 2
        %v3352 = vsel %vm2015, %v3346, %v3351
        %v3353 = vrot.slane %v3242, 2
        %v3354 = vsel %vm2015, %v3349, %v3353
        %v3355 = vrot.slane %v3243, 2
        %v3356 = vrot.slane %v3245, 2
        %v3357 = vsel %vm2015, %v3355, %v3356
        %v3358 = vrot.slane %v3244, 2
        %v3359 = vrot.slane %v3246, 2
        %v3360 = vsel %vm2015, %v3358, %v3359
        %v3361 = vrot.slane %v3247, 2
        %v3362 = vsel %vm2015, %v3356, %v3361
        %v3363 = vrot.slane %v3248, 2
        %v3364 = vsel %vm2015, %v3359, %v3363
        %v3365 = vrot.slane %v3249, 2
        %v3366 = vrot.slane %v3251, 2
        %v3367 = vsel %vm2015, %v3365, %v3366
        %v3368 = vrot.slane %v3250, 2
        %v3369 = vrot.slane %v3252, 2
        %v3370 = vsel %vm2015, %v3368, %v3369
        %v3371 = vrot.slane %v3253, 2
        %v3372 = vsel %vm2015, %v3366, %v3371
        %v3373 = vrot.slane %v3254, 2
        %v3374 = vsel %vm2015, %v3369, %v3373
        %v3375 = vrot.slane %v3255, 2
        %v3376 = vrot.slane %v3257, 2
        %v3377 = vsel %vm2015, %v3375, %v3376
        %v3378 = vrot.slane %v3256, 2
        %v3379 = vrot.slane %v3258, 2
        %v3380 = vsel %vm2015, %v3378, %v3379
        %v3381 = vrot.slane %v3259, 2
        %v3382 = vsel %vm2015, %v3376, %v3381
        %v3383 = vrot.slane %v3260, 2
        %v3384 = vsel %vm2015, %v3379, %v3383
        %v3385 = vrot.slane %v3261, 2
        %v3386 = vrot.slane %v3263, 2
        %v3387 = vsel %vm2015, %v3385, %v3386
        %v3388 = vrot.slane %v3262, 2
        %v3389 = vrot.slane %v3264, 2
        %v3390 = vsel %vm2015, %v3388, %v3389
        %v3391 = vrot.slane %v3265, 2
        %v3392 = vsel %vm2015, %v3386, %v3391
        %v3393 = vrot.slane %v3266, 2
        %v3394 = vsel %vm2015, %v3389, %v3393
        %v3427 = vadd.f32 %v3176, %v3317
        %v3428 = vadd.f32 %v3177, %v3320
        %v3429 = vadd.f32 %v3178, %v3322
        %v3430 = vadd.f32 %v3179, %v3324
        %v3431 = vadd.f32 %v3180, %v3327
        %v3432 = vadd.f32 %v3181, %v3330
        %v3433 = vadd.f32 %v3182, %v3332
        %v3434 = vadd.f32 %v3183, %v3334
        %v3435 = vadd.f32 %v3184, %v3337
        %v3436 = vadd.f32 %v3185, %v3340
        %v3437 = vadd.f32 %v3186, %v3342
        %v3438 = vadd.f32 %v3187, %v3344
        %v3439 = vadd.f32 %v3188, %v3347
        %v3440 = vadd.f32 %v3189, %v3350
        %v3441 = vadd.f32 %v3190, %v3352
        %v3442 = vadd.f32 %v3191, %v3354
        %v3443 = vadd.f32 %v3192, %v3357
        %v3444 = vadd.f32 %v3193, %v3360
        %v3445 = vadd.f32 %v3194, %v3362
        %v3446 = vadd.f32 %v3195, %v3364
        %v3447 = vadd.f32 %v3196, %v3367
        %v3448 = vadd.f32 %v3197, %v3370
        %v3449 = vadd.f32 %v3198, %v3372
        %v3450 = vadd.f32 %v3199, %v3374
        %v3451 = vadd.f32 %v3200, %v3377
        %v3452 = vadd.f32 %v3201, %v3380
        %v3453 = vadd.f32 %v3202, %v3382
        %v3454 = vadd.f32 %v3203, %v3384
        %v3455 = vadd.f32 %v3204, %v3387
        %v3456 = vadd.f32 %v3205, %v3390
        %v3457 = vadd.f32 %v3206, %v3392
        %v3458 = vadd.f32 %v3207, %v3394
        %v3460 = vlaneseq
        %v3461 = vshrl.u32 %v3460, 7
        %v3462 = vsub.s32 0, %v3461
        %v3463 = vrot.slane %v1491, %v3462
        %v3464 = vlaneseq
        %v3465 = vshrl.u32 %v3464, 7
        %v3466 = vsub.s32 1, %v3465
        %v3467 = vrot.slane %v1491, %v3466
        %v3470 = vadd.f32 %v3427, %v3463
        %v3471 = vadd.f32 %v3428, %v3467
        %v3472 = vadd.f32 %v3429, %v3463
        %v3473 = vadd.f32 %v3430, %v3467
        %v3474 = vadd.f32 %v3431, %v3463
        %v3475 = vadd.f32 %v3432, %v3467
        %v3476 = vadd.f32 %v3433, %v3463
        %v3477 = vadd.f32 %v3434, %v3467
        %v3478 = vadd.f32 %v3435, %v3463
        %v3479 = vadd.f32 %v3436, %v3467
        %v3480 = vadd.f32 %v3437, %v3463
        %v3481 = vadd.f32 %v3438, %v3467
        %v3482 = vadd.f32 %v3439, %v3463
        %v3483 = vadd.f32 %v3440, %v3467
        %v3484 = vadd.f32 %v3441, %v3463
        %v3485 = vadd.f32 %v3442, %v3467
        %v3486 = vadd.f32 %v3443, %v3463
        %v3487 = vadd.f32 %v3444, %v3467
        %v3488 = vadd.f32 %v3445, %v3463
        %v3489 = vadd.f32 %v3446, %v3467
        %v3490 = vadd.f32 %v3447, %v3463
        %v3491 = vadd.f32 %v3448, %v3467
        %v3492 = vadd.f32 %v3449, %v3463
        %v3493 = vadd.f32 %v3450, %v3467
        %v3494 = vadd.f32 %v3451, %v3463
        %v3495 = vadd.f32 %v3452, %v3467
        %v3496 = vadd.f32 %v3453, %v3463
        %v3497 = vadd.f32 %v3454, %v3467
        %v3498 = vadd.f32 %v3455, %v3463
        %v3499 = vadd.f32 %v3456, %v3467
        %v3500 = vadd.f32 %v3457, %v3463
        %v3501 = vadd.f32 %v3458, %v3467
        %v3502 = vmax.f32 %v3470, 0.0
        %v3503 = vmax.f32 %v3471, 0.0
        %v3504 = vmax.f32 %v3472, 0.0
        %v3505 = vmax.f32 %v3473, 0.0
        %v3506 = vmax.f32 %v3474, 0.0
        %v3507 = vmax.f32 %v3475, 0.0
        %v3508 = vmax.f32 %v3476, 0.0
        %v3509 = vmax.f32 %v3477, 0.0
        %v3510 = vmax.f32 %v3478, 0.0
        %v3511 = vmax.f32 %v3479, 0.0
        %v3512 = vmax.f32 %v3480, 0.0
        %v3513 = vmax.f32 %v3481, 0.0
        %v3514 = vmax.f32 %v3482, 0.0
        %v3515 = vmax.f32 %v3483, 0.0
        %v3516 = vmax.f32 %v3484, 0.0
        %v3517 = vmax.f32 %v3485, 0.0
        %v3518 = vmax.f32 %v3486, 0.0
        %v3519 = vmax.f32 %v3487, 0.0
        %v3520 = vmax.f32 %v3488, 0.0
        %v3521 = vmax.f32 %v3489, 0.0
        %v3522 = vmax.f32 %v3490, 0.0
        %v3523 = vmax.f32 %v3491, 0.0
        %v3524 = vmax.f32 %v3492, 0.0
        %v3525 = vmax.f32 %v3493, 0.0
        %v3526 = vmax.f32 %v3494, 0.0
        %v3527 = vmax.f32 %v3495, 0.0
        %v3528 = vmax.f32 %v3496, 0.0
        %v3529 = vmax.f32 %v3497, 0.0
        %v3530 = vmax.f32 %v3498, 0.0
        %v3531 = vmax.f32 %v3499, 0.0
        %v3532 = vmax.f32 %v3500, 0.0
        %v3533 = vmax.f32 %v3501, 0.0
        %v3534 = vmin.f32 %v3502, 6.0
        %v3535 = vmin.f32 %v3503, 6.0
        %v3536 = vmin.f32 %v3504, 6.0
        %v3537 = vmin.f32 %v3505, 6.0
        %v3538 = vmin.f32 %v3506, 6.0
        %v3539 = vmin.f32 %v3507, 6.0
        %v3540 = vmin.f32 %v3508, 6.0
        %v3541 = vmin.f32 %v3509, 6.0
        %v3542 = vmin.f32 %v3510, 6.0
        %v3543 = vmin.f32 %v3511, 6.0
        %v3544 = vmin.f32 %v3512, 6.0
        %v3545 = vmin.f32 %v3513, 6.0
        %v3546 = vmin.f32 %v3514, 6.0
        %v3547 = vmin.f32 %v3515, 6.0
        %v3548 = vmin.f32 %v3516, 6.0
        %v3549 = vmin.f32 %v3517, 6.0
        %v3550 = vmin.f32 %v3518, 6.0
        %v3551 = vmin.f32 %v3519, 6.0
        %v3552 = vmin.f32 %v3520, 6.0
        %v3553 = vmin.f32 %v3521, 6.0
        %v3554 = vmin.f32 %v3522, 6.0
        %v3555 = vmin.f32 %v3523, 6.0
        %v3556 = vmin.f32 %v3524, 6.0
        %v3557 = vmin.f32 %v3525, 6.0
        %v3558 = vmin.f32 %v3526, 6.0
        %v3559 = vmin.f32 %v3527, 6.0
        %v3560 = vmin.f32 %v3528, 6.0
        %v3561 = vmin.f32 %v3529, 6.0
        %v3562 = vmin.f32 %v3530, 6.0
        %v3563 = vmin.f32 %v3531, 6.0
        %v3564 = vmin.f32 %v3532, 6.0
        %v3565 = vmin.f32 %v3533, 6.0
        %v3566 = vpack.c.bf16 %v3536, %v3534
        %v3567 = vpack.c.bf16 %v3537, %v3535
        %v3568 = vpack.c.bf16 %v3540, %v3538
        %v3569 = vpack.c.bf16 %v3541, %v3539
        %v3570 = vpack.c.bf16 %v3544, %v3542
        %v3571 = vpack.c.bf16 %v3545, %v3543
        %v3572 = vpack.c.bf16 %v3548, %v3546
        %v3573 = vpack.c.bf16 %v3549, %v3547
        %v3574 = vpack.c.bf16 %v3552, %v3550
        %v3575 = vpack.c.bf16 %v3553, %v3551
        %v3576 = vpack.c.bf16 %v3556, %v3554
        %v3577 = vpack.c.bf16 %v3557, %v3555
        %v3578 = vpack.c.bf16 %v3560, %v3558
        %v3579 = vpack.c.bf16 %v3561, %v3559
        %v3580 = vpack.c.bf16 %v3564, %v3562
        %v3581 = vpack.c.bf16 %v3565, %v3563
        %v3598 = vunpack.c.l.b16 %v3566
        %v3599 = vunpack.c.l.b16 %v3567
        %v3600 = vunpack.c.h.b16 %v3566
        %v3601 = vunpack.c.h.b16 %v3567
        %v3602 = vunpack.c.l.b16 %v3568
        %v3603 = vunpack.c.l.b16 %v3569
        %v3604 = vunpack.c.h.b16 %v3568
        %v3605 = vunpack.c.h.b16 %v3569
        %v3606 = vunpack.c.l.b16 %v3570
        %v3607 = vunpack.c.l.b16 %v3571
        %v3608 = vunpack.c.h.b16 %v3570
        %v3609 = vunpack.c.h.b16 %v3571
        %v3610 = vunpack.c.l.b16 %v3572
        %v3611 = vunpack.c.l.b16 %v3573
        %v3612 = vunpack.c.h.b16 %v3572
        %v3613 = vunpack.c.h.b16 %v3573
        %v3614 = vunpack.c.l.b16 %v3574
        %v3615 = vunpack.c.l.b16 %v3575
        %v3616 = vunpack.c.h.b16 %v3574
        %v3617 = vunpack.c.h.b16 %v3575
        %v3618 = vunpack.c.l.b16 %v3576
        %v3619 = vunpack.c.l.b16 %v3577
        %v3620 = vunpack.c.h.b16 %v3576
        %v3621 = vunpack.c.h.b16 %v3577
        %v3622 = vunpack.c.l.b16 %v3578
        %v3623 = vunpack.c.l.b16 %v3579
        %v3624 = vunpack.c.h.b16 %v3578
        %v3625 = vunpack.c.h.b16 %v3579
        %v3626 = vunpack.c.l.b16 %v3580
        %v3627 = vunpack.c.l.b16 %v3581
        %v3628 = vunpack.c.h.b16 %v3580
        %v3629 = vunpack.c.h.b16 %v3581
        %v3630 = vpack.c.b16 %v3599, %v3598
        %v3631 = vpack.c.b16 %v3601, %v3600
        %v3632 = vpack.c.b16 %v3603, %v3602
        %v3633 = vpack.c.b16 %v3605, %v3604
        %v3634 = vpack.c.b16 %v3607, %v3606
        %v3635 = vpack.c.b16 %v3609, %v3608
        %v3636 = vpack.c.b16 %v3611, %v3610
        %v3637 = vpack.c.b16 %v3613, %v3612
        %v3638 = vpack.c.b16 %v3615, %v3614
        %v3639 = vpack.c.b16 %v3617, %v3616
        %v3640 = vpack.c.b16 %v3619, %v3618
        %v3641 = vpack.c.b16 %v3621, %v3620
        %v3642 = vpack.c.b16 %v3623, %v3622
        %v3643 = vpack.c.b16 %v3625, %v3624
        %v3644 = vpack.c.b16 %v3627, %v3626
        %v3645 = vpack.c.b16 %v3629, %v3628
        %3662 = vst.msk [vmem:[#allocation3] sm:$0xff] %vm300, %v3630
        %3663 = vst.msk [vmem:[#allocation3 + $0x8] sm:$0xff] %vm300, %v3631
        %3664 = vst.msk [vmem:[#allocation3 + $0x10] sm:$0xff] %vm300, %v3632
        %3665 = vst.msk [vmem:[#allocation3 + $0x18] sm:$0xff] %vm300, %v3633
        %3666 = vst.msk [vmem:[#allocation3 + $0x20] sm:$0xff] %vm300, %v3634
        %3667 = vst.msk [vmem:[#allocation3 + $0x28] sm:$0xff] %vm300, %v3635
        %3668 = vst.msk [vmem:[#allocation3 + $0x30] sm:$0xff] %vm300, %v3636
        %3669 = vst.msk [vmem:[#allocation3 + $0x38] sm:$0xff] %vm300, %v3637
        %3670 = vst.msk [vmem:[#allocation3 + $0x40] sm:$0xff] %vm300, %v3638
        %3671 = vst.msk [vmem:[#allocation3 + $0x48] sm:$0xff] %vm300, %v3639
        %3672 = vst.msk [vmem:[#allocation3 + $0x50] sm:$0xff] %vm300, %v3640
        %3673 = vst.msk [vmem:[#allocation3 + $0x58] sm:$0xff] %vm300, %v3641
        %3674 = vst.msk [vmem:[#allocation3 + $0x60] sm:$0xff] %vm300, %v3642
        %3675 = vst.msk [vmem:[#allocation3 + $0x68] sm:$0xff] %vm300, %v3643
        %3676 = vst.msk [vmem:[#allocation3 + $0x70] sm:$0xff] %vm300, %v3644
        %3677 = vst.msk [vmem:[#allocation3 + $0x78] sm:$0xff] %vm300, %v3645
        %s3678 = scalar_lea.vmem [#allocation2], 192
        %v3679 = vld [vmem:[%s3678] sm:$0xff]
        %v3680 = vld [vmem:[%s3678 + $0x8] sm:$0xff]
        %v3681 = vld [vmem:[%s3678 + $0x10] sm:$0x11]
        %v3682 = vld [vmem:[%s3678 + $0x18] sm:$0xff]
        %v3683 = vld [vmem:[%s3678 + $0x20] sm:$0xff]
        %v3684 = vld [vmem:[%s3678 + $0x28] sm:$0x11]
        %v3685 = vld [vmem:[%s3678 + $0x30] sm:$0xff]
        %v3686 = vld [vmem:[%s3678 + $0x38] sm:$0xff]
        %v3687 = vld [vmem:[%s3678 + $0x40] sm:$0x11]
        %v3688 = vld [vmem:[%s3678 + $0x48] sm:$0xff]
        %v3689 = vld [vmem:[%s3678 + $0x50] sm:$0xff]
        %v3690 = vld [vmem:[%s3678 + $0x58] sm:$0x11]
        %v3691 = vld [vmem:[%s3678 + $0x60] sm:$0xff]
        %v3692 = vld [vmem:[%s3678 + $0x68] sm:$0xff]
        %v3693 = vld [vmem:[%s3678 + $0x70] sm:$0x11]
        %v3694 = vld [vmem:[%s3678 + $0x78] sm:$0xff]
        %v3695 = vld [vmem:[%s3678 + $0x80] sm:$0xff]
        %v3696 = vld [vmem:[%s3678 + $0x88] sm:$0x11]
        %v3697 = vld [vmem:[%s3678 + $0x90] sm:$0xff]
        %v3698 = vld [vmem:[%s3678 + $0x98] sm:$0xff]
        %v3699 = vld [vmem:[%s3678 + $0xa0] sm:$0x11]
        %v3700 = vld [vmem:[%s3678 + $0xa8] sm:$0xff]
        %v3701 = vld [vmem:[%s3678 + $0xb0] sm:$0xff]
        %v3702 = vld [vmem:[%s3678 + $0xb8] sm:$0x11]
        %v3703 = vunpack.c.l.bf16 %v3679
        %v3704 = vunpack.c.h.bf16 %v3679
        %v3705 = vunpack.c.l.bf16 %v3680
        %v3706 = vunpack.c.h.bf16 %v3680
        %v3707 = vunpack.c.l.bf16 %v3682
        %v3708 = vunpack.c.h.bf16 %v3682
        %v3709 = vunpack.c.l.bf16 %v3683
        %v3710 = vunpack.c.h.bf16 %v3683
        %v3711 = vunpack.c.l.bf16 %v3685
        %v3712 = vunpack.c.h.bf16 %v3685
        %v3713 = vunpack.c.l.bf16 %v3686
        %v3714 = vunpack.c.h.bf16 %v3686
        %v3715 = vunpack.c.l.bf16 %v3688
        %v3716 = vunpack.c.h.bf16 %v3688
        %v3717 = vunpack.c.l.bf16 %v3689
        %v3718 = vunpack.c.h.bf16 %v3689
        %v3719 = vunpack.c.l.bf16 %v3691
        %v3720 = vunpack.c.h.bf16 %v3691
        %v3721 = vunpack.c.l.bf16 %v3692
        %v3722 = vunpack.c.h.bf16 %v3692
        %v3723 = vunpack.c.l.bf16 %v3694
        %v3724 = vunpack.c.h.bf16 %v3694
        %v3725 = vunpack.c.l.bf16 %v3695
        %v3726 = vunpack.c.h.bf16 %v3695
        %v3727 = vunpack.c.l.bf16 %v3697
        %v3728 = vunpack.c.h.bf16 %v3697
        %v3729 = vunpack.c.l.bf16 %v3698
        %v3730 = vunpack.c.h.bf16 %v3698
        %v3731 = vunpack.c.l.bf16 %v3700
        %v3732 = vunpack.c.h.bf16 %v3700
        %v3733 = vunpack.c.l.bf16 %v3701
        %v3734 = vunpack.c.h.bf16 %v3701
        %v3735 = vmul.f32 %v3703, %v1569
        %v3736 = vmul.f32 %v3704, %v1573
        %v3737 = vmul.f32 %v3705, %v1569
        %v3738 = vmul.f32 %v3706, %v1573
        %v3739 = vmul.f32 %v3707, %v1569
        %v3740 = vmul.f32 %v3708, %v1573
        %v3741 = vmul.f32 %v3709, %v1569
        %v3742 = vmul.f32 %v3710, %v1573
        %v3743 = vmul.f32 %v3711, %v1569
        %v3744 = vmul.f32 %v3712, %v1573
        %v3745 = vmul.f32 %v3713, %v1569
        %v3746 = vmul.f32 %v3714, %v1573
        %v3747 = vmul.f32 %v3715, %v1569
        %v3748 = vmul.f32 %v3716, %v1573
        %v3749 = vmul.f32 %v3717, %v1569
        %v3750 = vmul.f32 %v3718, %v1573
        %v3751 = vmul.f32 %v3719, %v1569
        %v3752 = vmul.f32 %v3720, %v1573
        %v3753 = vmul.f32 %v3721, %v1569
        %v3754 = vmul.f32 %v3722, %v1573
        %v3755 = vmul.f32 %v3723, %v1569
        %v3756 = vmul.f32 %v3724, %v1573
        %v3757 = vmul.f32 %v3725, %v1569
        %v3758 = vmul.f32 %v3726, %v1573
        %v3759 = vmul.f32 %v3727, %v1569
        %v3760 = vmul.f32 %v3728, %v1573
        %v3761 = vmul.f32 %v3729, %v1569
        %v3762 = vmul.f32 %v3730, %v1573
        %v3763 = vmul.f32 %v3731, %v1569
        %v3764 = vmul.f32 %v3732, %v1573
        %v3765 = vmul.f32 %v3733, %v1569
        %v3766 = vmul.f32 %v3734, %v1573
        %v3767 = vadd.f32 %v3735, 0.0
        %v3768 = vadd.f32 %v3736, 0.0
        %v3769 = vadd.f32 %v3737, 0.0
        %v3770 = vadd.f32 %v3738, 0.0
        %v3771 = vadd.f32 %v3739, 0.0
        %v3772 = vadd.f32 %v3740, 0.0
        %v3773 = vadd.f32 %v3741, 0.0
        %v3774 = vadd.f32 %v3742, 0.0
        %v3775 = vadd.f32 %v3743, 0.0
        %v3776 = vadd.f32 %v3744, 0.0
        %v3777 = vadd.f32 %v3745, 0.0
        %v3778 = vadd.f32 %v3746, 0.0
        %v3779 = vadd.f32 %v3747, 0.0
        %v3780 = vadd.f32 %v3748, 0.0
        %v3781 = vadd.f32 %v3749, 0.0
        %v3782 = vadd.f32 %v3750, 0.0
        %v3783 = vadd.f32 %v3751, 0.0
        %v3784 = vadd.f32 %v3752, 0.0
        %v3785 = vadd.f32 %v3753, 0.0
        %v3786 = vadd.f32 %v3754, 0.0
        %v3787 = vadd.f32 %v3755, 0.0
        %v3788 = vadd.f32 %v3756, 0.0
        %v3789 = vadd.f32 %v3757, 0.0
        %v3790 = vadd.f32 %v3758, 0.0
        %v3791 = vadd.f32 %v3759, 0.0
        %v3792 = vadd.f32 %v3760, 0.0
        %v3793 = vadd.f32 %v3761, 0.0
        %v3794 = vadd.f32 %v3762, 0.0
        %v3795 = vadd.f32 %v3763, 0.0
        %v3796 = vadd.f32 %v3764, 0.0
        %v3797 = vadd.f32 %v3765, 0.0
        %v3798 = vadd.f32 %v3766, 0.0
        %v3799 = vunpack.c.l.bf16 %v3681
        %v3800 = vunpack.c.h.bf16 %v3681
        %v3801 = vunpack.c.l.bf16 %v3684
        %v3802 = vunpack.c.h.bf16 %v3684
        %v3803 = vunpack.c.l.bf16 %v3687
        %v3804 = vunpack.c.h.bf16 %v3687
        %v3805 = vunpack.c.l.bf16 %v3690
        %v3806 = vunpack.c.h.bf16 %v3690
        %v3807 = vunpack.c.l.bf16 %v3693
        %v3808 = vunpack.c.h.bf16 %v3693
        %v3809 = vunpack.c.l.bf16 %v3696
        %v3810 = vunpack.c.h.bf16 %v3696
        %v3811 = vunpack.c.l.bf16 %v3699
        %v3812 = vunpack.c.h.bf16 %v3699
        %v3813 = vunpack.c.l.bf16 %v3702
        %v3814 = vunpack.c.h.bf16 %v3702
        %v3815 = vmul.f32 %v3703, %v1660
        %v3816 = vmul.f32 %v3704, %v1664
        %v3817 = vmul.f32 %v3705, %v1660
        %v3818 = vmul.f32 %v3706, %v1664
        %v3819 = vmul.f32 %v3799, %v1660
        %v3820 = vmul.f32 %v3800, %v1664
        %v3821 = vmul.f32 %v3707, %v1660
        %v3822 = vmul.f32 %v3708, %v1664
        %v3823 = vmul.f32 %v3709, %v1660
        %v3824 = vmul.f32 %v3710, %v1664
        %v3825 = vmul.f32 %v3801, %v1660
        %v3826 = vmul.f32 %v3802, %v1664
        %v3827 = vmul.f32 %v3711, %v1660
        %v3828 = vmul.f32 %v3712, %v1664
        %v3829 = vmul.f32 %v3713, %v1660
        %v3830 = vmul.f32 %v3714, %v1664
        %v3831 = vmul.f32 %v3803, %v1660
        %v3832 = vmul.f32 %v3804, %v1664
        %v3833 = vmul.f32 %v3715, %v1660
        %v3834 = vmul.f32 %v3716, %v1664
        %v3835 = vmul.f32 %v3717, %v1660
        %v3836 = vmul.f32 %v3718, %v1664
        %v3837 = vmul.f32 %v3805, %v1660
        %v3838 = vmul.f32 %v3806, %v1664
        %v3839 = vmul.f32 %v3719, %v1660
        %v3840 = vmul.f32 %v3720, %v1664
        %v3841 = vmul.f32 %v3721, %v1660
        %v3842 = vmul.f32 %v3722, %v1664
        %v3843 = vmul.f32 %v3807, %v1660
        %v3844 = vmul.f32 %v3808, %v1664
        %v3845 = vmul.f32 %v3723, %v1660
        %v3846 = vmul.f32 %v3724, %v1664
        %v3847 = vmul.f32 %v3725, %v1660
        %v3848 = vmul.f32 %v3726, %v1664
        %v3849 = vmul.f32 %v3809, %v1660
        %v3850 = vmul.f32 %v3810, %v1664
        %v3851 = vmul.f32 %v3727, %v1660
        %v3852 = vmul.f32 %v3728, %v1664
        %v3853 = vmul.f32 %v3729, %v1660
        %v3854 = vmul.f32 %v3730, %v1664
        %v3855 = vmul.f32 %v3811, %v1660
        %v3856 = vmul.f32 %v3812, %v1664
        %v3857 = vmul.f32 %v3731, %v1660
        %v3858 = vmul.f32 %v3732, %v1664
        %v3859 = vmul.f32 %v3733, %v1660
        %v3860 = vmul.f32 %v3734, %v1664
        %v3861 = vmul.f32 %v3813, %v1660
        %v3862 = vmul.f32 %v3814, %v1664
        %v3911 = vrot.slane %v3815, 1
        %v3912 = vrot.slane %v3817, 1
        %v3913 = vsel %vm1763, %v3911, %v3912
        %v3914 = vrot.slane %v3816, 1
        %v3915 = vrot.slane %v3818, 1
        %v3916 = vsel %vm1763, %v3914, %v3915
        %v3917 = vrot.slane %v3819, 1
        %v3918 = vsel %vm1763, %v3912, %v3917
        %v3919 = vrot.slane %v3820, 1
        %v3920 = vsel %vm1763, %v3915, %v3919
        %v3921 = vrot.slane %v3821, 1
        %v3922 = vrot.slane %v3823, 1
        %v3923 = vsel %vm1763, %v3921, %v3922
        %v3924 = vrot.slane %v3822, 1
        %v3925 = vrot.slane %v3824, 1
        %v3926 = vsel %vm1763, %v3924, %v3925
        %v3927 = vrot.slane %v3825, 1
        %v3928 = vsel %vm1763, %v3922, %v3927
        %v3929 = vrot.slane %v3826, 1
        %v3930 = vsel %vm1763, %v3925, %v3929
        %v3931 = vrot.slane %v3827, 1
        %v3932 = vrot.slane %v3829, 1
        %v3933 = vsel %vm1763, %v3931, %v3932
        %v3934 = vrot.slane %v3828, 1
        %v3935 = vrot.slane %v3830, 1
        %v3936 = vsel %vm1763, %v3934, %v3935
        %v3937 = vrot.slane %v3831, 1
        %v3938 = vsel %vm1763, %v3932, %v3937
        %v3939 = vrot.slane %v3832, 1
        %v3940 = vsel %vm1763, %v3935, %v3939
        %v3941 = vrot.slane %v3833, 1
        %v3942 = vrot.slane %v3835, 1
        %v3943 = vsel %vm1763, %v3941, %v3942
        %v3944 = vrot.slane %v3834, 1
        %v3945 = vrot.slane %v3836, 1
        %v3946 = vsel %vm1763, %v3944, %v3945
        %v3947 = vrot.slane %v3837, 1
        %v3948 = vsel %vm1763, %v3942, %v3947
        %v3949 = vrot.slane %v3838, 1
        %v3950 = vsel %vm1763, %v3945, %v3949
        %v3951 = vrot.slane %v3839, 1
        %v3952 = vrot.slane %v3841, 1
        %v3953 = vsel %vm1763, %v3951, %v3952
        %v3954 = vrot.slane %v3840, 1
        %v3955 = vrot.slane %v3842, 1
        %v3956 = vsel %vm1763, %v3954, %v3955
        %v3957 = vrot.slane %v3843, 1
        %v3958 = vsel %vm1763, %v3952, %v3957
        %v3959 = vrot.slane %v3844, 1
        %v3960 = vsel %vm1763, %v3955, %v3959
        %v3961 = vrot.slane %v3845, 1
        %v3962 = vrot.slane %v3847, 1
        %v3963 = vsel %vm1763, %v3961, %v3962
        %v3964 = vrot.slane %v3846, 1
        %v3965 = vrot.slane %v3848, 1
        %v3966 = vsel %vm1763, %v3964, %v3965
        %v3967 = vrot.slane %v3849, 1
        %v3968 = vsel %vm1763, %v3962, %v3967
        %v3969 = vrot.slane %v3850, 1
        %v3970 = vsel %vm1763, %v3965, %v3969
        %v3971 = vrot.slane %v3851, 1
        %v3972 = vrot.slane %v3853, 1
        %v3973 = vsel %vm1763, %v3971, %v3972
        %v3974 = vrot.slane %v3852, 1
        %v3975 = vrot.slane %v3854, 1
        %v3976 = vsel %vm1763, %v3974, %v3975
        %v3977 = vrot.slane %v3855, 1
        %v3978 = vsel %vm1763, %v3972, %v3977
        %v3979 = vrot.slane %v3856, 1
        %v3980 = vsel %vm1763, %v3975, %v3979
        %v3981 = vrot.slane %v3857, 1
        %v3982 = vrot.slane %v3859, 1
        %v3983 = vsel %vm1763, %v3981, %v3982
        %v3984 = vrot.slane %v3858, 1
        %v3985 = vrot.slane %v3860, 1
        %v3986 = vsel %vm1763, %v3984, %v3985
        %v3987 = vrot.slane %v3861, 1
        %v3988 = vsel %vm1763, %v3982, %v3987
        %v3989 = vrot.slane %v3862, 1
        %v3990 = vsel %vm1763, %v3985, %v3989
        %v4023 = vadd.f32 %v3767, %v3913
        %v4024 = vadd.f32 %v3768, %v3916
        %v4025 = vadd.f32 %v3769, %v3918
        %v4026 = vadd.f32 %v3770, %v3920
        %v4027 = vadd.f32 %v3771, %v3923
        %v4028 = vadd.f32 %v3772, %v3926
        %v4029 = vadd.f32 %v3773, %v3928
        %v4030 = vadd.f32 %v3774, %v3930
        %v4031 = vadd.f32 %v3775, %v3933
        %v4032 = vadd.f32 %v3776, %v3936
        %v4033 = vadd.f32 %v3777, %v3938
        %v4034 = vadd.f32 %v3778, %v3940
        %v4035 = vadd.f32 %v3779, %v3943
        %v4036 = vadd.f32 %v3780, %v3946
        %v4037 = vadd.f32 %v3781, %v3948
        %v4038 = vadd.f32 %v3782, %v3950
        %v4039 = vadd.f32 %v3783, %v3953
        %v4040 = vadd.f32 %v3784, %v3956
        %v4041 = vadd.f32 %v3785, %v3958
        %v4042 = vadd.f32 %v3786, %v3960
        %v4043 = vadd.f32 %v3787, %v3963
        %v4044 = vadd.f32 %v3788, %v3966
        %v4045 = vadd.f32 %v3789, %v3968
        %v4046 = vadd.f32 %v3790, %v3970
        %v4047 = vadd.f32 %v3791, %v3973
        %v4048 = vadd.f32 %v3792, %v3976
        %v4049 = vadd.f32 %v3793, %v3978
        %v4050 = vadd.f32 %v3794, %v3980
        %v4051 = vadd.f32 %v3795, %v3983
        %v4052 = vadd.f32 %v3796, %v3986
        %v4053 = vadd.f32 %v3797, %v3988
        %v4054 = vadd.f32 %v3798, %v3990
        %v4055 = vmul.f32 %v3703, %v1912
        %v4056 = vmul.f32 %v3704, %v1916
        %v4057 = vmul.f32 %v3705, %v1912
        %v4058 = vmul.f32 %v3706, %v1916
        %v4059 = vmul.f32 %v3799, %v1912
        %v4060 = vmul.f32 %v3800, %v1916
        %v4061 = vmul.f32 %v3707, %v1912
        %v4062 = vmul.f32 %v3708, %v1916
        %v4063 = vmul.f32 %v3709, %v1912
        %v4064 = vmul.f32 %v3710, %v1916
        %v4065 = vmul.f32 %v3801, %v1912
        %v4066 = vmul.f32 %v3802, %v1916
        %v4067 = vmul.f32 %v3711, %v1912
        %v4068 = vmul.f32 %v3712, %v1916
        %v4069 = vmul.f32 %v3713, %v1912
        %v4070 = vmul.f32 %v3714, %v1916
        %v4071 = vmul.f32 %v3803, %v1912
        %v4072 = vmul.f32 %v3804, %v1916
        %v4073 = vmul.f32 %v3715, %v1912
        %v4074 = vmul.f32 %v3716, %v1916
        %v4075 = vmul.f32 %v3717, %v1912
        %v4076 = vmul.f32 %v3718, %v1916
        %v4077 = vmul.f32 %v3805, %v1912
        %v4078 = vmul.f32 %v3806, %v1916
        %v4079 = vmul.f32 %v3719, %v1912
        %v4080 = vmul.f32 %v3720, %v1916
        %v4081 = vmul.f32 %v3721, %v1912
        %v4082 = vmul.f32 %v3722, %v1916
        %v4083 = vmul.f32 %v3807, %v1912
        %v4084 = vmul.f32 %v3808, %v1916
        %v4085 = vmul.f32 %v3723, %v1912
        %v4086 = vmul.f32 %v3724, %v1916
        %v4087 = vmul.f32 %v3725, %v1912
        %v4088 = vmul.f32 %v3726, %v1916
        %v4089 = vmul.f32 %v3809, %v1912
        %v4090 = vmul.f32 %v3810, %v1916
        %v4091 = vmul.f32 %v3727, %v1912
        %v4092 = vmul.f32 %v3728, %v1916
        %v4093 = vmul.f32 %v3729, %v1912
        %v4094 = vmul.f32 %v3730, %v1916
        %v4095 = vmul.f32 %v3811, %v1912
        %v4096 = vmul.f32 %v3812, %v1916
        %v4097 = vmul.f32 %v3731, %v1912
        %v4098 = vmul.f32 %v3732, %v1916
        %v4099 = vmul.f32 %v3733, %v1912
        %v4100 = vmul.f32 %v3734, %v1916
        %v4101 = vmul.f32 %v3813, %v1912
        %v4102 = vmul.f32 %v3814, %v1916
        %v4151 = vrot.slane %v4055, 2
        %v4152 = vrot.slane %v4057, 2
        %v4153 = vsel %vm2015, %v4151, %v4152
        %v4154 = vrot.slane %v4056, 2
        %v4155 = vrot.slane %v4058, 2
        %v4156 = vsel %vm2015, %v4154, %v4155
        %v4157 = vrot.slane %v4059, 2
        %v4158 = vsel %vm2015, %v4152, %v4157
        %v4159 = vrot.slane %v4060, 2
        %v4160 = vsel %vm2015, %v4155, %v4159
        %v4161 = vrot.slane %v4061, 2
        %v4162 = vrot.slane %v4063, 2
        %v4163 = vsel %vm2015, %v4161, %v4162
        %v4164 = vrot.slane %v4062, 2
        %v4165 = vrot.slane %v4064, 2
        %v4166 = vsel %vm2015, %v4164, %v4165
        %v4167 = vrot.slane %v4065, 2
        %v4168 = vsel %vm2015, %v4162, %v4167
        %v4169 = vrot.slane %v4066, 2
        %v4170 = vsel %vm2015, %v4165, %v4169
        %v4171 = vrot.slane %v4067, 2
        %v4172 = vrot.slane %v4069, 2
        %v4173 = vsel %vm2015, %v4171, %v4172
        %v4174 = vrot.slane %v4068, 2
        %v4175 = vrot.slane %v4070, 2
        %v4176 = vsel %vm2015, %v4174, %v4175
        %v4177 = vrot.slane %v4071, 2
        %v4178 = vsel %vm2015, %v4172, %v4177
        %v4179 = vrot.slane %v4072, 2
        %v4180 = vsel %vm2015, %v4175, %v4179
        %v4181 = vrot.slane %v4073, 2
        %v4182 = vrot.slane %v4075, 2
        %v4183 = vsel %vm2015, %v4181, %v4182
        %v4184 = vrot.slane %v4074, 2
        %v4185 = vrot.slane %v4076, 2
        %v4186 = vsel %vm2015, %v4184, %v4185
        %v4187 = vrot.slane %v4077, 2
        %v4188 = vsel %vm2015, %v4182, %v4187
        %v4189 = vrot.slane %v4078, 2
        %v4190 = vsel %vm2015, %v4185, %v4189
        %v4191 = vrot.slane %v4079, 2
        %v4192 = vrot.slane %v4081, 2
        %v4193 = vsel %vm2015, %v4191, %v4192
        %v4194 = vrot.slane %v4080, 2
        %v4195 = vrot.slane %v4082, 2
        %v4196 = vsel %vm2015, %v4194, %v4195
        %v4197 = vrot.slane %v4083, 2
        %v4198 = vsel %vm2015, %v4192, %v4197
        %v4199 = vrot.slane %v4084, 2
        %v4200 = vsel %vm2015, %v4195, %v4199
        %v4201 = vrot.slane %v4085, 2
        %v4202 = vrot.slane %v4087, 2
        %v4203 = vsel %vm2015, %v4201, %v4202
        %v4204 = vrot.slane %v4086, 2
        %v4205 = vrot.slane %v4088, 2
        %v4206 = vsel %vm2015, %v4204, %v4205
        %v4207 = vrot.slane %v4089, 2
        %v4208 = vsel %vm2015, %v4202, %v4207
        %v4209 = vrot.slane %v4090, 2
        %v4210 = vsel %vm2015, %v4205, %v4209
        %v4211 = vrot.slane %v4091, 2
        %v4212 = vrot.slane %v4093, 2
        %v4213 = vsel %vm2015, %v4211, %v4212
        %v4214 = vrot.slane %v4092, 2
        %v4215 = vrot.slane %v4094, 2
        %v4216 = vsel %vm2015, %v4214, %v4215
        %v4217 = vrot.slane %v4095, 2
        %v4218 = vsel %vm2015, %v4212, %v4217
        %v4219 = vrot.slane %v4096, 2
        %v4220 = vsel %vm2015, %v4215, %v4219
        %v4221 = vrot.slane %v4097, 2
        %v4222 = vrot.slane %v4099, 2
        %v4223 = vsel %vm2015, %v4221, %v4222
        %v4224 = vrot.slane %v4098, 2
        %v4225 = vrot.slane %v4100, 2
        %v4226 = vsel %vm2015, %v4224, %v4225
        %v4227 = vrot.slane %v4101, 2
        %v4228 = vsel %vm2015, %v4222, %v4227
        %v4229 = vrot.slane %v4102, 2
        %v4230 = vsel %vm2015, %v4225, %v4229
        %v4263 = vadd.f32 %v4023, %v4153
        %v4264 = vadd.f32 %v4024, %v4156
        %v4265 = vadd.f32 %v4025, %v4158
        %v4266 = vadd.f32 %v4026, %v4160
        %v4267 = vadd.f32 %v4027, %v4163
        %v4268 = vadd.f32 %v4028, %v4166
        %v4269 = vadd.f32 %v4029, %v4168
        %v4270 = vadd.f32 %v4030, %v4170
        %v4271 = vadd.f32 %v4031, %v4173
        %v4272 = vadd.f32 %v4032, %v4176
        %v4273 = vadd.f32 %v4033, %v4178
        %v4274 = vadd.f32 %v4034, %v4180
        %v4275 = vadd.f32 %v4035, %v4183
        %v4276 = vadd.f32 %v4036, %v4186
        %v4277 = vadd.f32 %v4037, %v4188
        %v4278 = vadd.f32 %v4038, %v4190
        %v4279 = vadd.f32 %v4039, %v4193
        %v4280 = vadd.f32 %v4040, %v4196
        %v4281 = vadd.f32 %v4041, %v4198
        %v4282 = vadd.f32 %v4042, %v4200
        %v4283 = vadd.f32 %v4043, %v4203
        %v4284 = vadd.f32 %v4044, %v4206
        %v4285 = vadd.f32 %v4045, %v4208
        %v4286 = vadd.f32 %v4046, %v4210
        %v4287 = vadd.f32 %v4047, %v4213
        %v4288 = vadd.f32 %v4048, %v4216
        %v4289 = vadd.f32 %v4049, %v4218
        %v4290 = vadd.f32 %v4050, %v4220
        %v4291 = vadd.f32 %v4051, %v4223
        %v4292 = vadd.f32 %v4052, %v4226
        %v4293 = vadd.f32 %v4053, %v4228
        %v4294 = vadd.f32 %v4054, %v4230
        %v4295 = vld [vmem:[%s1466] sm:$0xff]
        %v4296 = vld [vmem:[%s1466 + $0x8] sm:$0xff]
        %v4297 = vld [vmem:[%s1466 + $0x10] sm:$0x11]
        %v4298 = vld [vmem:[%s1466 + $0x18] sm:$0xff]
        %v4299 = vld [vmem:[%s1466 + $0x20] sm:$0xff]
        %v4300 = vld [vmem:[%s1466 + $0x28] sm:$0x11]
        %v4301 = vld [vmem:[%s1466 + $0x30] sm:$0xff]
        %v4302 = vld [vmem:[%s1466 + $0x38] sm:$0xff]
        %v4303 = vld [vmem:[%s1466 + $0x40] sm:$0x11]
        %v4304 = vld [vmem:[%s1466 + $0x48] sm:$0xff]
        %v4305 = vld [vmem:[%s1466 + $0x50] sm:$0xff]
        %v4306 = vld [vmem:[%s1466 + $0x58] sm:$0x11]
        %v4307 = vld [vmem:[%s1466 + $0x60] sm:$0xff]
        %v4308 = vld [vmem:[%s1466 + $0x68] sm:$0xff]
        %v4309 = vld [vmem:[%s1466 + $0x70] sm:$0x11]
        %v4310 = vld [vmem:[%s1466 + $0x78] sm:$0xff]
        %v4311 = vld [vmem:[%s1466 + $0x80] sm:$0xff]
        %v4312 = vld [vmem:[%s1466 + $0x88] sm:$0x11]
        %v4313 = vld [vmem:[%s1466 + $0x90] sm:$0xff]
        %v4314 = vld [vmem:[%s1466 + $0x98] sm:$0xff]
        %v4315 = vld [vmem:[%s1466 + $0xa0] sm:$0x11]
        %v4316 = vld [vmem:[%s1466 + $0xa8] sm:$0xff]
        %v4317 = vld [vmem:[%s1466 + $0xb0] sm:$0xff]
        %v4318 = vld [vmem:[%s1466 + $0xb8] sm:$0x11]
        %v4319 = vunpack.c.l.bf16 %v4295
        %v4320 = vunpack.c.h.bf16 %v4295
        %v4321 = vunpack.c.l.bf16 %v4296
        %v4322 = vunpack.c.h.bf16 %v4296
        %v4323 = vunpack.c.l.bf16 %v4298
        %v4324 = vunpack.c.h.bf16 %v4298
        %v4325 = vunpack.c.l.bf16 %v4299
        %v4326 = vunpack.c.h.bf16 %v4299
        %v4327 = vunpack.c.l.bf16 %v4301
        %v4328 = vunpack.c.h.bf16 %v4301
        %v4329 = vunpack.c.l.bf16 %v4302
        %v4330 = vunpack.c.h.bf16 %v4302
        %v4331 = vunpack.c.l.bf16 %v4304
        %v4332 = vunpack.c.h.bf16 %v4304
        %v4333 = vunpack.c.l.bf16 %v4305
        %v4334 = vunpack.c.h.bf16 %v4305
        %v4335 = vunpack.c.l.bf16 %v4307
        %v4336 = vunpack.c.h.bf16 %v4307
        %v4337 = vunpack.c.l.bf16 %v4308
        %v4338 = vunpack.c.h.bf16 %v4308
        %v4339 = vunpack.c.l.bf16 %v4310
        %v4340 = vunpack.c.h.bf16 %v4310
        %v4341 = vunpack.c.l.bf16 %v4311
        %v4342 = vunpack.c.h.bf16 %v4311
        %v4343 = vunpack.c.l.bf16 %v4313
        %v4344 = vunpack.c.h.bf16 %v4313
        %v4345 = vunpack.c.l.bf16 %v4314
        %v4346 = vunpack.c.h.bf16 %v4314
        %v4347 = vunpack.c.l.bf16 %v4316
        %v4348 = vunpack.c.h.bf16 %v4316
        %v4349 = vunpack.c.l.bf16 %v4317
        %v4350 = vunpack.c.h.bf16 %v4317
        %v4351 = vmul.f32 %v4319, %v2220
        %v4352 = vmul.f32 %v4320, %v2224
        %v4353 = vmul.f32 %v4321, %v2220
        %v4354 = vmul.f32 %v4322, %v2224
        %v4355 = vmul.f32 %v4323, %v2220
        %v4356 = vmul.f32 %v4324, %v2224
        %v4357 = vmul.f32 %v4325, %v2220
        %v4358 = vmul.f32 %v4326, %v2224
        %v4359 = vmul.f32 %v4327, %v2220
        %v4360 = vmul.f32 %v4328, %v2224
        %v4361 = vmul.f32 %v4329, %v2220
        %v4362 = vmul.f32 %v4330, %v2224
        %v4363 = vmul.f32 %v4331, %v2220
        %v4364 = vmul.f32 %v4332, %v2224
        %v4365 = vmul.f32 %v4333, %v2220
        %v4366 = vmul.f32 %v4334, %v2224
        %v4367 = vmul.f32 %v4335, %v2220
        %v4368 = vmul.f32 %v4336, %v2224
        %v4369 = vmul.f32 %v4337, %v2220
        %v4370 = vmul.f32 %v4338, %v2224
        %v4371 = vmul.f32 %v4339, %v2220
        %v4372 = vmul.f32 %v4340, %v2224
        %v4373 = vmul.f32 %v4341, %v2220
        %v4374 = vmul.f32 %v4342, %v2224
        %v4375 = vmul.f32 %v4343, %v2220
        %v4376 = vmul.f32 %v4344, %v2224
        %v4377 = vmul.f32 %v4345, %v2220
        %v4378 = vmul.f32 %v4346, %v2224
        %v4379 = vmul.f32 %v4347, %v2220
        %v4380 = vmul.f32 %v4348, %v2224
        %v4381 = vmul.f32 %v4349, %v2220
        %v4382 = vmul.f32 %v4350, %v2224
        %v4383 = vadd.f32 %v4263, %v4351
        %v4384 = vadd.f32 %v4264, %v4352
        %v4385 = vadd.f32 %v4265, %v4353
        %v4386 = vadd.f32 %v4266, %v4354
        %v4387 = vadd.f32 %v4267, %v4355
        %v4388 = vadd.f32 %v4268, %v4356
        %v4389 = vadd.f32 %v4269, %v4357
        %v4390 = vadd.f32 %v4270, %v4358
        %v4391 = vadd.f32 %v4271, %v4359
        %v4392 = vadd.f32 %v4272, %v4360
        %v4393 = vadd.f32 %v4273, %v4361
        %v4394 = vadd.f32 %v4274, %v4362
        %v4395 = vadd.f32 %v4275, %v4363
        %v4396 = vadd.f32 %v4276, %v4364
        %v4397 = vadd.f32 %v4277, %v4365
        %v4398 = vadd.f32 %v4278, %v4366
        %v4399 = vadd.f32 %v4279, %v4367
        %v4400 = vadd.f32 %v4280, %v4368
        %v4401 = vadd.f32 %v4281, %v4369
        %v4402 = vadd.f32 %v4282, %v4370
        %v4403 = vadd.f32 %v4283, %v4371
        %v4404 = vadd.f32 %v4284, %v4372
        %v4405 = vadd.f32 %v4285, %v4373
        %v4406 = vadd.f32 %v4286, %v4374
        %v4407 = vadd.f32 %v4287, %v4375
        %v4408 = vadd.f32 %v4288, %v4376
        %v4409 = vadd.f32 %v4289, %v4377
        %v4410 = vadd.f32 %v4290, %v4378
        %v4411 = vadd.f32 %v4291, %v4379
        %v4412 = vadd.f32 %v4292, %v4380
        %v4413 = vadd.f32 %v4293, %v4381
        %v4414 = vadd.f32 %v4294, %v4382
        %v4415 = vunpack.c.l.bf16 %v4297
        %v4416 = vunpack.c.h.bf16 %v4297
        %v4417 = vunpack.c.l.bf16 %v4300
        %v4418 = vunpack.c.h.bf16 %v4300
        %v4419 = vunpack.c.l.bf16 %v4303
        %v4420 = vunpack.c.h.bf16 %v4303
        %v4421 = vunpack.c.l.bf16 %v4306
        %v4422 = vunpack.c.h.bf16 %v4306
        %v4423 = vunpack.c.l.bf16 %v4309
        %v4424 = vunpack.c.h.bf16 %v4309
        %v4425 = vunpack.c.l.bf16 %v4312
        %v4426 = vunpack.c.h.bf16 %v4312
        %v4427 = vunpack.c.l.bf16 %v4315
        %v4428 = vunpack.c.h.bf16 %v4315
        %v4429 = vunpack.c.l.bf16 %v4318
        %v4430 = vunpack.c.h.bf16 %v4318
        %v4431 = vmul.f32 %v4319, %v2311
        %v4432 = vmul.f32 %v4320, %v2315
        %v4433 = vmul.f32 %v4321, %v2311
        %v4434 = vmul.f32 %v4322, %v2315
        %v4435 = vmul.f32 %v4415, %v2311
        %v4436 = vmul.f32 %v4416, %v2315
        %v4437 = vmul.f32 %v4323, %v2311
        %v4438 = vmul.f32 %v4324, %v2315
        %v4439 = vmul.f32 %v4325, %v2311
        %v4440 = vmul.f32 %v4326, %v2315
        %v4441 = vmul.f32 %v4417, %v2311
        %v4442 = vmul.f32 %v4418, %v2315
        %v4443 = vmul.f32 %v4327, %v2311
        %v4444 = vmul.f32 %v4328, %v2315
        %v4445 = vmul.f32 %v4329, %v2311
        %v4446 = vmul.f32 %v4330, %v2315
        %v4447 = vmul.f32 %v4419, %v2311
        %v4448 = vmul.f32 %v4420, %v2315
        %v4449 = vmul.f32 %v4331, %v2311
        %v4450 = vmul.f32 %v4332, %v2315
        %v4451 = vmul.f32 %v4333, %v2311
        %v4452 = vmul.f32 %v4334, %v2315
        %v4453 = vmul.f32 %v4421, %v2311
        %v4454 = vmul.f32 %v4422, %v2315
        %v4455 = vmul.f32 %v4335, %v2311
        %v4456 = vmul.f32 %v4336, %v2315
        %v4457 = vmul.f32 %v4337, %v2311
        %v4458 = vmul.f32 %v4338, %v2315
        %v4459 = vmul.f32 %v4423, %v2311
        %v4460 = vmul.f32 %v4424, %v2315
        %v4461 = vmul.f32 %v4339, %v2311
        %v4462 = vmul.f32 %v4340, %v2315
        %v4463 = vmul.f32 %v4341, %v2311
        %v4464 = vmul.f32 %v4342, %v2315
        %v4465 = vmul.f32 %v4425, %v2311
        %v4466 = vmul.f32 %v4426, %v2315
        %v4467 = vmul.f32 %v4343, %v2311
        %v4468 = vmul.f32 %v4344, %v2315
        %v4469 = vmul.f32 %v4345, %v2311
        %v4470 = vmul.f32 %v4346, %v2315
        %v4471 = vmul.f32 %v4427, %v2311
        %v4472 = vmul.f32 %v4428, %v2315
        %v4473 = vmul.f32 %v4347, %v2311
        %v4474 = vmul.f32 %v4348, %v2315
        %v4475 = vmul.f32 %v4349, %v2311
        %v4476 = vmul.f32 %v4350, %v2315
        %v4477 = vmul.f32 %v4429, %v2311
        %v4478 = vmul.f32 %v4430, %v2315
        %v4527 = vrot.slane %v4431, 1
        %v4528 = vrot.slane %v4433, 1
        %v4529 = vsel %vm1763, %v4527, %v4528
        %v4530 = vrot.slane %v4432, 1
        %v4531 = vrot.slane %v4434, 1
        %v4532 = vsel %vm1763, %v4530, %v4531
        %v4533 = vrot.slane %v4435, 1
        %v4534 = vsel %vm1763, %v4528, %v4533
        %v4535 = vrot.slane %v4436, 1
        %v4536 = vsel %vm1763, %v4531, %v4535
        %v4537 = vrot.slane %v4437, 1
        %v4538 = vrot.slane %v4439, 1
        %v4539 = vsel %vm1763, %v4537, %v4538
        %v4540 = vrot.slane %v4438, 1
        %v4541 = vrot.slane %v4440, 1
        %v4542 = vsel %vm1763, %v4540, %v4541
        %v4543 = vrot.slane %v4441, 1
        %v4544 = vsel %vm1763, %v4538, %v4543
        %v4545 = vrot.slane %v4442, 1
        %v4546 = vsel %vm1763, %v4541, %v4545
        %v4547 = vrot.slane %v4443, 1
        %v4548 = vrot.slane %v4445, 1
        %v4549 = vsel %vm1763, %v4547, %v4548
        %v4550 = vrot.slane %v4444, 1
        %v4551 = vrot.slane %v4446, 1
        %v4552 = vsel %vm1763, %v4550, %v4551
        %v4553 = vrot.slane %v4447, 1
        %v4554 = vsel %vm1763, %v4548, %v4553
        %v4555 = vrot.slane %v4448, 1
        %v4556 = vsel %vm1763, %v4551, %v4555
        %v4557 = vrot.slane %v4449, 1
        %v4558 = vrot.slane %v4451, 1
        %v4559 = vsel %vm1763, %v4557, %v4558
        %v4560 = vrot.slane %v4450, 1
        %v4561 = vrot.slane %v4452, 1
        %v4562 = vsel %vm1763, %v4560, %v4561
        %v4563 = vrot.slane %v4453, 1
        %v4564 = vsel %vm1763, %v4558, %v4563
        %v4565 = vrot.slane %v4454, 1
        %v4566 = vsel %vm1763, %v4561, %v4565
        %v4567 = vrot.slane %v4455, 1
        %v4568 = vrot.slane %v4457, 1
        %v4569 = vsel %vm1763, %v4567, %v4568
        %v4570 = vrot.slane %v4456, 1
        %v4571 = vrot.slane %v4458, 1
        %v4572 = vsel %vm1763, %v4570, %v4571
        %v4573 = vrot.slane %v4459, 1
        %v4574 = vsel %vm1763, %v4568, %v4573
        %v4575 = vrot.slane %v4460, 1
        %v4576 = vsel %vm1763, %v4571, %v4575
        %v4577 = vrot.slane %v4461, 1
        %v4578 = vrot.slane %v4463, 1
        %v4579 = vsel %vm1763, %v4577, %v4578
        %v4580 = vrot.slane %v4462, 1
        %v4581 = vrot.slane %v4464, 1
        %v4582 = vsel %vm1763, %v4580, %v4581
        %v4583 = vrot.slane %v4465, 1
        %v4584 = vsel %vm1763, %v4578, %v4583
        %v4585 = vrot.slane %v4466, 1
        %v4586 = vsel %vm1763, %v4581, %v4585
        %v4587 = vrot.slane %v4467, 1
        %v4588 = vrot.slane %v4469, 1
        %v4589 = vsel %vm1763, %v4587, %v4588
        %v4590 = vrot.slane %v4468, 1
        %v4591 = vrot.slane %v4470, 1
        %v4592 = vsel %vm1763, %v4590, %v4591
        %v4593 = vrot.slane %v4471, 1
        %v4594 = vsel %vm1763, %v4588, %v4593
        %v4595 = vrot.slane %v4472, 1
        %v4596 = vsel %vm1763, %v4591, %v4595
        %v4597 = vrot.slane %v4473, 1
        %v4598 = vrot.slane %v4475, 1
        %v4599 = vsel %vm1763, %v4597, %v4598
        %v4600 = vrot.slane %v4474, 1
        %v4601 = vrot.slane %v4476, 1
        %v4602 = vsel %vm1763, %v4600, %v4601
        %v4603 = vrot.slane %v4477, 1
        %v4604 = vsel %vm1763, %v4598, %v4603
        %v4605 = vrot.slane %v4478, 1
        %v4606 = vsel %vm1763, %v4601, %v4605
        %v4639 = vadd.f32 %v4383, %v4529
        %v4640 = vadd.f32 %v4384, %v4532
        %v4641 = vadd.f32 %v4385, %v4534
        %v4642 = vadd.f32 %v4386, %v4536
        %v4643 = vadd.f32 %v4387, %v4539
        %v4644 = vadd.f32 %v4388, %v4542
        %v4645 = vadd.f32 %v4389, %v4544
        %v4646 = vadd.f32 %v4390, %v4546
        %v4647 = vadd.f32 %v4391, %v4549
        %v4648 = vadd.f32 %v4392, %v4552
        %v4649 = vadd.f32 %v4393, %v4554
        %v4650 = vadd.f32 %v4394, %v4556
        %v4651 = vadd.f32 %v4395, %v4559
        %v4652 = vadd.f32 %v4396, %v4562
        %v4653 = vadd.f32 %v4397, %v4564
        %v4654 = vadd.f32 %v4398, %v4566
        %v4655 = vadd.f32 %v4399, %v4569
        %v4656 = vadd.f32 %v4400, %v4572
        %v4657 = vadd.f32 %v4401, %v4574
        %v4658 = vadd.f32 %v4402, %v4576
        %v4659 = vadd.f32 %v4403, %v4579
        %v4660 = vadd.f32 %v4404, %v4582
        %v4661 = vadd.f32 %v4405, %v4584
        %v4662 = vadd.f32 %v4406, %v4586
        %v4663 = vadd.f32 %v4407, %v4589
        %v4664 = vadd.f32 %v4408, %v4592
        %v4665 = vadd.f32 %v4409, %v4594
        %v4666 = vadd.f32 %v4410, %v4596
        %v4667 = vadd.f32 %v4411, %v4599
        %v4668 = vadd.f32 %v4412, %v4602
        %v4669 = vadd.f32 %v4413, %v4604
        %v4670 = vadd.f32 %v4414, %v4606
        %v4671 = vmul.f32 %v4319, %v2562
        %v4672 = vmul.f32 %v4320, %v2566
        %v4673 = vmul.f32 %v4321, %v2562
        %v4674 = vmul.f32 %v4322, %v2566
        %v4675 = vmul.f32 %v4415, %v2562
        %v4676 = vmul.f32 %v4416, %v2566
        %v4677 = vmul.f32 %v4323, %v2562
        %v4678 = vmul.f32 %v4324, %v2566
        %v4679 = vmul.f32 %v4325, %v2562
        %v4680 = vmul.f32 %v4326, %v2566
        %v4681 = vmul.f32 %v4417, %v2562
        %v4682 = vmul.f32 %v4418, %v2566
        %v4683 = vmul.f32 %v4327, %v2562
        %v4684 = vmul.f32 %v4328, %v2566
        %v4685 = vmul.f32 %v4329, %v2562
        %v4686 = vmul.f32 %v4330, %v2566
        %v4687 = vmul.f32 %v4419, %v2562
        %v4688 = vmul.f32 %v4420, %v2566
        %v4689 = vmul.f32 %v4331, %v2562
        %v4690 = vmul.f32 %v4332, %v2566
        %v4691 = vmul.f32 %v4333, %v2562
        %v4692 = vmul.f32 %v4334, %v2566
        %v4693 = vmul.f32 %v4421, %v2562
        %v4694 = vmul.f32 %v4422, %v2566
        %v4695 = vmul.f32 %v4335, %v2562
        %v4696 = vmul.f32 %v4336, %v2566
        %v4697 = vmul.f32 %v4337, %v2562
        %v4698 = vmul.f32 %v4338, %v2566
        %v4699 = vmul.f32 %v4423, %v2562
        %v4700 = vmul.f32 %v4424, %v2566
        %v4701 = vmul.f32 %v4339, %v2562
        %v4702 = vmul.f32 %v4340, %v2566
        %v4703 = vmul.f32 %v4341, %v2562
        %v4704 = vmul.f32 %v4342, %v2566
        %v4705 = vmul.f32 %v4425, %v2562
        %v4706 = vmul.f32 %v4426, %v2566
        %v4707 = vmul.f32 %v4343, %v2562
        %v4708 = vmul.f32 %v4344, %v2566
        %v4709 = vmul.f32 %v4345, %v2562
        %v4710 = vmul.f32 %v4346, %v2566
        %v4711 = vmul.f32 %v4427, %v2562
        %v4712 = vmul.f32 %v4428, %v2566
        %v4713 = vmul.f32 %v4347, %v2562
        %v4714 = vmul.f32 %v4348, %v2566
        %v4715 = vmul.f32 %v4349, %v2562
        %v4716 = vmul.f32 %v4350, %v2566
        %v4717 = vmul.f32 %v4429, %v2562
        %v4718 = vmul.f32 %v4430, %v2566
        %v4767 = vrot.slane %v4671, 2
        %v4768 = vrot.slane %v4673, 2
        %v4769 = vsel %vm2015, %v4767, %v4768
        %v4770 = vrot.slane %v4672, 2
        %v4771 = vrot.slane %v4674, 2
        %v4772 = vsel %vm2015, %v4770, %v4771
        %v4773 = vrot.slane %v4675, 2
        %v4774 = vsel %vm2015, %v4768, %v4773
        %v4775 = vrot.slane %v4676, 2
        %v4776 = vsel %vm2015, %v4771, %v4775
        %v4777 = vrot.slane %v4677, 2
        %v4778 = vrot.slane %v4679, 2
        %v4779 = vsel %vm2015, %v4777, %v4778
        %v4780 = vrot.slane %v4678, 2
        %v4781 = vrot.slane %v4680, 2
        %v4782 = vsel %vm2015, %v4780, %v4781
        %v4783 = vrot.slane %v4681, 2
        %v4784 = vsel %vm2015, %v4778, %v4783
        %v4785 = vrot.slane %v4682, 2
        %v4786 = vsel %vm2015, %v4781, %v4785
        %v4787 = vrot.slane %v4683, 2
        %v4788 = vrot.slane %v4685, 2
        %v4789 = vsel %vm2015, %v4787, %v4788
        %v4790 = vrot.slane %v4684, 2
        %v4791 = vrot.slane %v4686, 2
        %v4792 = vsel %vm2015, %v4790, %v4791
        %v4793 = vrot.slane %v4687, 2
        %v4794 = vsel %vm2015, %v4788, %v4793
        %v4795 = vrot.slane %v4688, 2
        %v4796 = vsel %vm2015, %v4791, %v4795
        %v4797 = vrot.slane %v4689, 2
        %v4798 = vrot.slane %v4691, 2
        %v4799 = vsel %vm2015, %v4797, %v4798
        %v4800 = vrot.slane %v4690, 2
        %v4801 = vrot.slane %v4692, 2
        %v4802 = vsel %vm2015, %v4800, %v4801
        %v4803 = vrot.slane %v4693, 2
        %v4804 = vsel %vm2015, %v4798, %v4803
        %v4805 = vrot.slane %v4694, 2
        %v4806 = vsel %vm2015, %v4801, %v4805
        %v4807 = vrot.slane %v4695, 2
        %v4808 = vrot.slane %v4697, 2
        %v4809 = vsel %vm2015, %v4807, %v4808
        %v4810 = vrot.slane %v4696, 2
        %v4811 = vrot.slane %v4698, 2
        %v4812 = vsel %vm2015, %v4810, %v4811
        %v4813 = vrot.slane %v4699, 2
        %v4814 = vsel %vm2015, %v4808, %v4813
        %v4815 = vrot.slane %v4700, 2
        %v4816 = vsel %vm2015, %v4811, %v4815
        %v4817 = vrot.slane %v4701, 2
        %v4818 = vrot.slane %v4703, 2
        %v4819 = vsel %vm2015, %v4817, %v4818
        %v4820 = vrot.slane %v4702, 2
        %v4821 = vrot.slane %v4704, 2
        %v4822 = vsel %vm2015, %v4820, %v4821
        %v4823 = vrot.slane %v4705, 2
        %v4824 = vsel %vm2015, %v4818, %v4823
        %v4825 = vrot.slane %v4706, 2
        %v4826 = vsel %vm2015, %v4821, %v4825
        %v4827 = vrot.slane %v4707, 2
        %v4828 = vrot.slane %v4709, 2
        %v4829 = vsel %vm2015, %v4827, %v4828
        %v4830 = vrot.slane %v4708, 2
        %v4831 = vrot.slane %v4710, 2
        %v4832 = vsel %vm2015, %v4830, %v4831
        %v4833 = vrot.slane %v4711, 2
        %v4834 = vsel %vm2015, %v4828, %v4833
        %v4835 = vrot.slane %v4712, 2
        %v4836 = vsel %vm2015, %v4831, %v4835
        %v4837 = vrot.slane %v4713, 2
        %v4838 = vrot.slane %v4715, 2
        %v4839 = vsel %vm2015, %v4837, %v4838
        %v4840 = vrot.slane %v4714, 2
        %v4841 = vrot.slane %v4716, 2
        %v4842 = vsel %vm2015, %v4840, %v4841
        %v4843 = vrot.slane %v4717, 2
        %v4844 = vsel %vm2015, %v4838, %v4843
        %v4845 = vrot.slane %v4718, 2
        %v4846 = vsel %vm2015, %v4841, %v4845
        %v4879 = vadd.f32 %v4639, %v4769
        %v4880 = vadd.f32 %v4640, %v4772
        %v4881 = vadd.f32 %v4641, %v4774
        %v4882 = vadd.f32 %v4642, %v4776
        %v4883 = vadd.f32 %v4643, %v4779
        %v4884 = vadd.f32 %v4644, %v4782
        %v4885 = vadd.f32 %v4645, %v4784
        %v4886 = vadd.f32 %v4646, %v4786
        %v4887 = vadd.f32 %v4647, %v4789
        %v4888 = vadd.f32 %v4648, %v4792
        %v4889 = vadd.f32 %v4649, %v4794
        %v4890 = vadd.f32 %v4650, %v4796
        %v4891 = vadd.f32 %v4651, %v4799
        %v4892 = vadd.f32 %v4652, %v4802
        %v4893 = vadd.f32 %v4653, %v4804
        %v4894 = vadd.f32 %v4654, %v4806
        %v4895 = vadd.f32 %v4655, %v4809
        %v4896 = vadd.f32 %v4656, %v4812
        %v4897 = vadd.f32 %v4657, %v4814
        %v4898 = vadd.f32 %v4658, %v4816
        %v4899 = vadd.f32 %v4659, %v4819
        %v4900 = vadd.f32 %v4660, %v4822
        %v4901 = vadd.f32 %v4661, %v4824
        %v4902 = vadd.f32 %v4662, %v4826
        %v4903 = vadd.f32 %v4663, %v4829
        %v4904 = vadd.f32 %v4664, %v4832
        %v4905 = vadd.f32 %v4665, %v4834
        %v4906 = vadd.f32 %v4666, %v4836
        %v4907 = vadd.f32 %v4667, %v4839
        %v4908 = vadd.f32 %v4668, %v4842
        %v4909 = vadd.f32 %v4669, %v4844
        %v4910 = vadd.f32 %v4670, %v4846
        %s4911 = scalar_lea.vmem [#allocation2], 240
        %v4912 = vld [vmem:[%s4911] sm:$0xff]
        %v4913 = vld [vmem:[%s4911 + $0x8] sm:$0xff]
        %v4914 = vld [vmem:[%s4911 + $0x10] sm:$0x11]
        %v4915 = vld [vmem:[%s4911 + $0x18] sm:$0xff]
        %v4916 = vld [vmem:[%s4911 + $0x20] sm:$0xff]
        %v4917 = vld [vmem:[%s4911 + $0x28] sm:$0x11]
        %v4918 = vld [vmem:[%s4911 + $0x30] sm:$0xff]
        %v4919 = vld [vmem:[%s4911 + $0x38] sm:$0xff]
        %v4920 = vld [vmem:[%s4911 + $0x40] sm:$0x11]
        %v4921 = vld [vmem:[%s4911 + $0x48] sm:$0xff]
        %v4922 = vld [vmem:[%s4911 + $0x50] sm:$0xff]
        %v4923 = vld [vmem:[%s4911 + $0x58] sm:$0x11]
        %v4924 = vld [vmem:[%s4911 + $0x60] sm:$0xff]
        %v4925 = vld [vmem:[%s4911 + $0x68] sm:$0xff]
        %v4926 = vld [vmem:[%s4911 + $0x70] sm:$0x11]
        %v4927 = vld [vmem:[%s4911 + $0x78] sm:$0xff]
        %v4928 = vld [vmem:[%s4911 + $0x80] sm:$0xff]
        %v4929 = vld [vmem:[%s4911 + $0x88] sm:$0x11]
        %v4930 = vld [vmem:[%s4911 + $0x90] sm:$0xff]
        %v4931 = vld [vmem:[%s4911 + $0x98] sm:$0xff]
        %v4932 = vld [vmem:[%s4911 + $0xa0] sm:$0x11]
        %v4933 = vld [vmem:[%s4911 + $0xa8] sm:$0xff]
        %v4934 = vld [vmem:[%s4911 + $0xb0] sm:$0xff]
        %v4935 = vld [vmem:[%s4911 + $0xb8] sm:$0x11]
        %v4936 = vunpack.c.l.bf16 %v4912
        %v4937 = vunpack.c.h.bf16 %v4912
        %v4938 = vunpack.c.l.bf16 %v4913
        %v4939 = vunpack.c.h.bf16 %v4913
        %v4940 = vunpack.c.l.bf16 %v4915
        %v4941 = vunpack.c.h.bf16 %v4915
        %v4942 = vunpack.c.l.bf16 %v4916
        %v4943 = vunpack.c.h.bf16 %v4916
        %v4944 = vunpack.c.l.bf16 %v4918
        %v4945 = vunpack.c.h.bf16 %v4918
        %v4946 = vunpack.c.l.bf16 %v4919
        %v4947 = vunpack.c.h.bf16 %v4919
        %v4948 = vunpack.c.l.bf16 %v4921
        %v4949 = vunpack.c.h.bf16 %v4921
        %v4950 = vunpack.c.l.bf16 %v4922
        %v4951 = vunpack.c.h.bf16 %v4922
        %v4952 = vunpack.c.l.bf16 %v4924
        %v4953 = vunpack.c.h.bf16 %v4924
        %v4954 = vunpack.c.l.bf16 %v4925
        %v4955 = vunpack.c.h.bf16 %v4925
        %v4956 = vunpack.c.l.bf16 %v4927
        %v4957 = vunpack.c.h.bf16 %v4927
        %v4958 = vunpack.c.l.bf16 %v4928
        %v4959 = vunpack.c.h.bf16 %v4928
        %v4960 = vunpack.c.l.bf16 %v4930
        %v4961 = vunpack.c.h.bf16 %v4930
        %v4962 = vunpack.c.l.bf16 %v4931
        %v4963 = vunpack.c.h.bf16 %v4931
        %v4964 = vunpack.c.l.bf16 %v4933
        %v4965 = vunpack.c.h.bf16 %v4933
        %v4966 = vunpack.c.l.bf16 %v4934
        %v4967 = vunpack.c.h.bf16 %v4934
        %v4968 = vmul.f32 %v4936, %v2870
        %v4969 = vmul.f32 %v4937, %v2874
        %v4970 = vmul.f32 %v4938, %v2870
        %v4971 = vmul.f32 %v4939, %v2874
        %v4972 = vmul.f32 %v4940, %v2870
        %v4973 = vmul.f32 %v4941, %v2874
        %v4974 = vmul.f32 %v4942, %v2870
        %v4975 = vmul.f32 %v4943, %v2874
        %v4976 = vmul.f32 %v4944, %v2870
        %v4977 = vmul.f32 %v4945, %v2874
        %v4978 = vmul.f32 %v4946, %v2870
        %v4979 = vmul.f32 %v4947, %v2874
        %v4980 = vmul.f32 %v4948, %v2870
        %v4981 = vmul.f32 %v4949, %v2874
        %v4982 = vmul.f32 %v4950, %v2870
        %v4983 = vmul.f32 %v4951, %v2874
        %v4984 = vmul.f32 %v4952, %v2870
        %v4985 = vmul.f32 %v4953, %v2874
        %v4986 = vmul.f32 %v4954, %v2870
        %v4987 = vmul.f32 %v4955, %v2874
        %v4988 = vmul.f32 %v4956, %v2870
        %v4989 = vmul.f32 %v4957, %v2874
        %v4990 = vmul.f32 %v4958, %v2870
        %v4991 = vmul.f32 %v4959, %v2874
        %v4992 = vmul.f32 %v4960, %v2870
        %v4993 = vmul.f32 %v4961, %v2874
        %v4994 = vmul.f32 %v4962, %v2870
        %v4995 = vmul.f32 %v4963, %v2874
        %v4996 = vmul.f32 %v4964, %v2870
        %v4997 = vmul.f32 %v4965, %v2874
        %v4998 = vmul.f32 %v4966, %v2870
        %v4999 = vmul.f32 %v4967, %v2874
        %v5000 = vadd.f32 %v4879, %v4968
        %v5001 = vadd.f32 %v4880, %v4969
        %v5002 = vadd.f32 %v4881, %v4970
        %v5003 = vadd.f32 %v4882, %v4971
        %v5004 = vadd.f32 %v4883, %v4972
        %v5005 = vadd.f32 %v4884, %v4973
        %v5006 = vadd.f32 %v4885, %v4974
        %v5007 = vadd.f32 %v4886, %v4975
        %v5008 = vadd.f32 %v4887, %v4976
        %v5009 = vadd.f32 %v4888, %v4977
        %v5010 = vadd.f32 %v4889, %v4978
        %v5011 = vadd.f32 %v4890, %v4979
        %v5012 = vadd.f32 %v4891, %v4980
        %v5013 = vadd.f32 %v4892, %v4981
        %v5014 = vadd.f32 %v4893, %v4982
        %v5015 = vadd.f32 %v4894, %v4983
        %v5016 = vadd.f32 %v4895, %v4984
        %v5017 = vadd.f32 %v4896, %v4985
        %v5018 = vadd.f32 %v4897, %v4986
        %v5019 = vadd.f32 %v4898, %v4987
        %v5020 = vadd.f32 %v4899, %v4988
        %v5021 = vadd.f32 %v4900, %v4989
        %v5022 = vadd.f32 %v4901, %v4990
        %v5023 = vadd.f32 %v4902, %v4991
        %v5024 = vadd.f32 %v4903, %v4992
        %v5025 = vadd.f32 %v4904, %v4993
        %v5026 = vadd.f32 %v4905, %v4994
        %v5027 = vadd.f32 %v4906, %v4995
        %v5028 = vadd.f32 %v4907, %v4996
        %v5029 = vadd.f32 %v4908, %v4997
        %v5030 = vadd.f32 %v4909, %v4998
        %v5031 = vadd.f32 %v4910, %v4999
        %v5032 = vunpack.c.l.bf16 %v4914
        %v5033 = vunpack.c.h.bf16 %v4914
        %v5034 = vunpack.c.l.bf16 %v4917
        %v5035 = vunpack.c.h.bf16 %v4917
        %v5036 = vunpack.c.l.bf16 %v4920
        %v5037 = vunpack.c.h.bf16 %v4920
        %v5038 = vunpack.c.l.bf16 %v4923
        %v5039 = vunpack.c.h.bf16 %v4923
        %v5040 = vunpack.c.l.bf16 %v4926
        %v5041 = vunpack.c.h.bf16 %v4926
        %v5042 = vunpack.c.l.bf16 %v4929
        %v5043 = vunpack.c.h.bf16 %v4929
        %v5044 = vunpack.c.l.bf16 %v4932
        %v5045 = vunpack.c.h.bf16 %v4932
        %v5046 = vunpack.c.l.bf16 %v4935
        %v5047 = vunpack.c.h.bf16 %v4935
        %v5048 = vmul.f32 %v4936, %v2961
        %v5049 = vmul.f32 %v4937, %v2965
        %v5050 = vmul.f32 %v4938, %v2961
        %v5051 = vmul.f32 %v4939, %v2965
        %v5052 = vmul.f32 %v5032, %v2961
        %v5053 = vmul.f32 %v5033, %v2965
        %v5054 = vmul.f32 %v4940, %v2961
        %v5055 = vmul.f32 %v4941, %v2965
        %v5056 = vmul.f32 %v4942, %v2961
        %v5057 = vmul.f32 %v4943, %v2965
        %v5058 = vmul.f32 %v5034, %v2961
        %v5059 = vmul.f32 %v5035, %v2965
        %v5060 = vmul.f32 %v4944, %v2961
        %v5061 = vmul.f32 %v4945, %v2965
        %v5062 = vmul.f32 %v4946, %v2961
        %v5063 = vmul.f32 %v4947, %v2965
        %v5064 = vmul.f32 %v5036, %v2961
        %v5065 = vmul.f32 %v5037, %v2965
        %v5066 = vmul.f32 %v4948, %v2961
        %v5067 = vmul.f32 %v4949, %v2965
        %v5068 = vmul.f32 %v4950, %v2961
        %v5069 = vmul.f32 %v4951, %v2965
        %v5070 = vmul.f32 %v5038, %v2961
        %v5071 = vmul.f32 %v5039, %v2965
        %v5072 = vmul.f32 %v4952, %v2961
        %v5073 = vmul.f32 %v4953, %v2965
        %v5074 = vmul.f32 %v4954, %v2961
        %v5075 = vmul.f32 %v4955, %v2965
        %v5076 = vmul.f32 %v5040, %v2961
        %v5077 = vmul.f32 %v5041, %v2965
        %v5078 = vmul.f32 %v4956, %v2961
        %v5079 = vmul.f32 %v4957, %v2965
        %v5080 = vmul.f32 %v4958, %v2961
        %v5081 = vmul.f32 %v4959, %v2965
        %v5082 = vmul.f32 %v5042, %v2961
        %v5083 = vmul.f32 %v5043, %v2965
        %v5084 = vmul.f32 %v4960, %v2961
        %v5085 = vmul.f32 %v4961, %v2965
        %v5086 = vmul.f32 %v4962, %v2961
        %v5087 = vmul.f32 %v4963, %v2965
        %v5088 = vmul.f32 %v5044, %v2961
        %v5089 = vmul.f32 %v5045, %v2965
        %v5090 = vmul.f32 %v4964, %v2961
        %v5091 = vmul.f32 %v4965, %v2965
        %v5092 = vmul.f32 %v4966, %v2961
        %v5093 = vmul.f32 %v4967, %v2965
        %v5094 = vmul.f32 %v5046, %v2961
        %v5095 = vmul.f32 %v5047, %v2965
        %v5144 = vrot.slane %v5048, 1
        %v5145 = vrot.slane %v5050, 1
        %v5146 = vsel %vm1763, %v5144, %v5145
        %v5147 = vrot.slane %v5049, 1
        %v5148 = vrot.slane %v5051, 1
        %v5149 = vsel %vm1763, %v5147, %v5148
        %v5150 = vrot.slane %v5052, 1
        %v5151 = vsel %vm1763, %v5145, %v5150
        %v5152 = vrot.slane %v5053, 1
        %v5153 = vsel %vm1763, %v5148, %v5152
        %v5154 = vrot.slane %v5054, 1
        %v5155 = vrot.slane %v5056, 1
        %v5156 = vsel %vm1763, %v5154, %v5155
        %v5157 = vrot.slane %v5055, 1
        %v5158 = vrot.slane %v5057, 1
        %v5159 = vsel %vm1763, %v5157, %v5158
        %v5160 = vrot.slane %v5058, 1
        %v5161 = vsel %vm1763, %v5155, %v5160
        %v5162 = vrot.slane %v5059, 1
        %v5163 = vsel %vm1763, %v5158, %v5162
        %v5164 = vrot.slane %v5060, 1
        %v5165 = vrot.slane %v5062, 1
        %v5166 = vsel %vm1763, %v5164, %v5165
        %v5167 = vrot.slane %v5061, 1
        %v5168 = vrot.slane %v5063, 1
        %v5169 = vsel %vm1763, %v5167, %v5168
        %v5170 = vrot.slane %v5064, 1
        %v5171 = vsel %vm1763, %v5165, %v5170
        %v5172 = vrot.slane %v5065, 1
        %v5173 = vsel %vm1763, %v5168, %v5172
        %v5174 = vrot.slane %v5066, 1
        %v5175 = vrot.slane %v5068, 1
        %v5176 = vsel %vm1763, %v5174, %v5175
        %v5177 = vrot.slane %v5067, 1
        %v5178 = vrot.slane %v5069, 1
        %v5179 = vsel %vm1763, %v5177, %v5178
        %v5180 = vrot.slane %v5070, 1
        %v5181 = vsel %vm1763, %v5175, %v5180
        %v5182 = vrot.slane %v5071, 1
        %v5183 = vsel %vm1763, %v5178, %v5182
        %v5184 = vrot.slane %v5072, 1
        %v5185 = vrot.slane %v5074, 1
        %v5186 = vsel %vm1763, %v5184, %v5185
        %v5187 = vrot.slane %v5073, 1
        %v5188 = vrot.slane %v5075, 1
        %v5189 = vsel %vm1763, %v5187, %v5188
        %v5190 = vrot.slane %v5076, 1
        %v5191 = vsel %vm1763, %v5185, %v5190
        %v5192 = vrot.slane %v5077, 1
        %v5193 = vsel %vm1763, %v5188, %v5192
        %v5194 = vrot.slane %v5078, 1
        %v5195 = vrot.slane %v5080, 1
        %v5196 = vsel %vm1763, %v5194, %v5195
        %v5197 = vrot.slane %v5079, 1
        %v5198 = vrot.slane %v5081, 1
        %v5199 = vsel %vm1763, %v5197, %v5198
        %v5200 = vrot.slane %v5082, 1
        %v5201 = vsel %vm1763, %v5195, %v5200
        %v5202 = vrot.slane %v5083, 1
        %v5203 = vsel %vm1763, %v5198, %v5202
        %v5204 = vrot.slane %v5084, 1
        %v5205 = vrot.slane %v5086, 1
        %v5206 = vsel %vm1763, %v5204, %v5205
        %v5207 = vrot.slane %v5085, 1
        %v5208 = vrot.slane %v5087, 1
        %v5209 = vsel %vm1763, %v5207, %v5208
        %v5210 = vrot.slane %v5088, 1
        %v5211 = vsel %vm1763, %v5205, %v5210
        %v5212 = vrot.slane %v5089, 1
        %v5213 = vsel %vm1763, %v5208, %v5212
        %v5214 = vrot.slane %v5090, 1
        %v5215 = vrot.slane %v5092, 1
        %v5216 = vsel %vm1763, %v5214, %v5215
        %v5217 = vrot.slane %v5091, 1
        %v5218 = vrot.slane %v5093, 1
        %v5219 = vsel %vm1763, %v5217, %v5218
        %v5220 = vrot.slane %v5094, 1
        %v5221 = vsel %vm1763, %v5215, %v5220
        %v5222 = vrot.slane %v5095, 1
        %v5223 = vsel %vm1763, %v5218, %v5222
        %v5256 = vadd.f32 %v5000, %v5146
        %v5257 = vadd.f32 %v5001, %v5149
        %v5258 = vadd.f32 %v5002, %v5151
        %v5259 = vadd.f32 %v5003, %v5153
        %v5260 = vadd.f32 %v5004, %v5156
        %v5261 = vadd.f32 %v5005, %v5159
        %v5262 = vadd.f32 %v5006, %v5161
        %v5263 = vadd.f32 %v5007, %v5163
        %v5264 = vadd.f32 %v5008, %v5166
        %v5265 = vadd.f32 %v5009, %v5169
        %v5266 = vadd.f32 %v5010, %v5171
        %v5267 = vadd.f32 %v5011, %v5173
        %v5268 = vadd.f32 %v5012, %v5176
        %v5269 = vadd.f32 %v5013, %v5179
        %v5270 = vadd.f32 %v5014, %v5181
        %v5271 = vadd.f32 %v5015, %v5183
        %v5272 = vadd.f32 %v5016, %v5186
        %v5273 = vadd.f32 %v5017, %v5189
        %v5274 = vadd.f32 %v5018, %v5191
        %v5275 = vadd.f32 %v5019, %v5193
        %v5276 = vadd.f32 %v5020, %v5196
        %v5277 = vadd.f32 %v5021, %v5199
        %v5278 = vadd.f32 %v5022, %v5201
        %v5279 = vadd.f32 %v5023, %v5203
        %v5280 = vadd.f32 %v5024, %v5206
        %v5281 = vadd.f32 %v5025, %v5209
        %v5282 = vadd.f32 %v5026, %v5211
        %v5283 = vadd.f32 %v5027, %v5213
        %v5284 = vadd.f32 %v5028, %v5216
        %v5285 = vadd.f32 %v5029, %v5219
        %v5286 = vadd.f32 %v5030, %v5221
        %v5287 = vadd.f32 %v5031, %v5223
        %v5288 = vmul.f32 %v4936, %v3212
        %v5289 = vmul.f32 %v4937, %v3216
        %v5290 = vmul.f32 %v4938, %v3212
        %v5291 = vmul.f32 %v4939, %v3216
        %v5292 = vmul.f32 %v5032, %v3212
        %v5293 = vmul.f32 %v5033, %v3216
        %v5294 = vmul.f32 %v4940, %v3212
        %v5295 = vmul.f32 %v4941, %v3216
        %v5296 = vmul.f32 %v4942, %v3212
        %v5297 = vmul.f32 %v4943, %v3216
        %v5298 = vmul.f32 %v5034, %v3212
        %v5299 = vmul.f32 %v5035, %v3216
        %v5300 = vmul.f32 %v4944, %v3212
        %v5301 = vmul.f32 %v4945, %v3216
        %v5302 = vmul.f32 %v4946, %v3212
        %v5303 = vmul.f32 %v4947, %v3216
        %v5304 = vmul.f32 %v5036, %v3212
        %v5305 = vmul.f32 %v5037, %v3216
        %v5306 = vmul.f32 %v4948, %v3212
        %v5307 = vmul.f32 %v4949, %v3216
        %v5308 = vmul.f32 %v4950, %v3212
        %v5309 = vmul.f32 %v4951, %v3216
        %v5310 = vmul.f32 %v5038, %v3212
        %v5311 = vmul.f32 %v5039, %v3216
        %v5312 = vmul.f32 %v4952, %v3212
        %v5313 = vmul.f32 %v4953, %v3216
        %v5314 = vmul.f32 %v4954, %v3212
        %v5315 = vmul.f32 %v4955, %v3216
        %v5316 = vmul.f32 %v5040, %v3212
        %v5317 = vmul.f32 %v5041, %v3216
        %v5318 = vmul.f32 %v4956, %v3212
        %v5319 = vmul.f32 %v4957, %v3216
        %v5320 = vmul.f32 %v4958, %v3212
        %v5321 = vmul.f32 %v4959, %v3216
        %v5322 = vmul.f32 %v5042, %v3212
        %v5323 = vmul.f32 %v5043, %v3216
        %v5324 = vmul.f32 %v4960, %v3212
        %v5325 = vmul.f32 %v4961, %v3216
        %v5326 = vmul.f32 %v4962, %v3212
        %v5327 = vmul.f32 %v4963, %v3216
        %v5328 = vmul.f32 %v5044, %v3212
        %v5329 = vmul.f32 %v5045, %v3216
        %v5330 = vmul.f32 %v4964, %v3212
        %v5331 = vmul.f32 %v4965, %v3216
        %v5332 = vmul.f32 %v4966, %v3212
        %v5333 = vmul.f32 %v4967, %v3216
        %v5334 = vmul.f32 %v5046, %v3212
        %v5335 = vmul.f32 %v5047, %v3216
        %v5384 = vrot.slane %v5288, 2
        %v5385 = vrot.slane %v5290, 2
        %v5386 = vsel %vm2015, %v5384, %v5385
        %v5387 = vrot.slane %v5289, 2
        %v5388 = vrot.slane %v5291, 2
        %v5389 = vsel %vm2015, %v5387, %v5388
        %v5390 = vrot.slane %v5292, 2
        %v5391 = vsel %vm2015, %v5385, %v5390
        %v5392 = vrot.slane %v5293, 2
        %v5393 = vsel %vm2015, %v5388, %v5392
        %v5394 = vrot.slane %v5294, 2
        %v5395 = vrot.slane %v5296, 2
        %v5396 = vsel %vm2015, %v5394, %v5395
        %v5397 = vrot.slane %v5295, 2
        %v5398 = vrot.slane %v5297, 2
        %v5399 = vsel %vm2015, %v5397, %v5398
        %v5400 = vrot.slane %v5298, 2
        %v5401 = vsel %vm2015, %v5395, %v5400
        %v5402 = vrot.slane %v5299, 2
        %v5403 = vsel %vm2015, %v5398, %v5402
        %v5404 = vrot.slane %v5300, 2
        %v5405 = vrot.slane %v5302, 2
        %v5406 = vsel %vm2015, %v5404, %v5405
        %v5407 = vrot.slane %v5301, 2
        %v5408 = vrot.slane %v5303, 2
        %v5409 = vsel %vm2015, %v5407, %v5408
        %v5410 = vrot.slane %v5304, 2
        %v5411 = vsel %vm2015, %v5405, %v5410
        %v5412 = vrot.slane %v5305, 2
        %v5413 = vsel %vm2015, %v5408, %v5412
        %v5414 = vrot.slane %v5306, 2
        %v5415 = vrot.slane %v5308, 2
        %v5416 = vsel %vm2015, %v5414, %v5415
        %v5417 = vrot.slane %v5307, 2
        %v5418 = vrot.slane %v5309, 2
        %v5419 = vsel %vm2015, %v5417, %v5418
        %v5420 = vrot.slane %v5310, 2
        %v5421 = vsel %vm2015, %v5415, %v5420
        %v5422 = vrot.slane %v5311, 2
        %v5423 = vsel %vm2015, %v5418, %v5422
        %v5424 = vrot.slane %v5312, 2
        %v5425 = vrot.slane %v5314, 2
        %v5426 = vsel %vm2015, %v5424, %v5425
        %v5427 = vrot.slane %v5313, 2
        %v5428 = vrot.slane %v5315, 2
        %v5429 = vsel %vm2015, %v5427, %v5428
        %v5430 = vrot.slane %v5316, 2
        %v5431 = vsel %vm2015, %v5425, %v5430
        %v5432 = vrot.slane %v5317, 2
        %v5433 = vsel %vm2015, %v5428, %v5432
        %v5434 = vrot.slane %v5318, 2
        %v5435 = vrot.slane %v5320, 2
        %v5436 = vsel %vm2015, %v5434, %v5435
        %v5437 = vrot.slane %v5319, 2
        %v5438 = vrot.slane %v5321, 2
        %v5439 = vsel %vm2015, %v5437, %v5438
        %v5440 = vrot.slane %v5322, 2
        %v5441 = vsel %vm2015, %v5435, %v5440
        %v5442 = vrot.slane %v5323, 2
        %v5443 = vsel %vm2015, %v5438, %v5442
        %v5444 = vrot.slane %v5324, 2
        %v5445 = vrot.slane %v5326, 2
        %v5446 = vsel %vm2015, %v5444, %v5445
        %v5447 = vrot.slane %v5325, 2
        %v5448 = vrot.slane %v5327, 2
        %v5449 = vsel %vm2015, %v5447, %v5448
        %v5450 = vrot.slane %v5328, 2
        %v5451 = vsel %vm2015, %v5445, %v5450
        %v5452 = vrot.slane %v5329, 2
        %v5453 = vsel %vm2015, %v5448, %v5452
        %v5454 = vrot.slane %v5330, 2
        %v5455 = vrot.slane %v5332, 2
        %v5456 = vsel %vm2015, %v5454, %v5455
        %v5457 = vrot.slane %v5331, 2
        %v5458 = vrot.slane %v5333, 2
        %v5459 = vsel %vm2015, %v5457, %v5458
        %v5460 = vrot.slane %v5334, 2
        %v5461 = vsel %vm2015, %v5455, %v5460
        %v5462 = vrot.slane %v5335, 2
        %v5463 = vsel %vm2015, %v5458, %v5462
        %v5496 = vadd.f32 %v5256, %v5386
        %v5497 = vadd.f32 %v5257, %v5389
        %v5498 = vadd.f32 %v5258, %v5391
        %v5499 = vadd.f32 %v5259, %v5393
        %v5500 = vadd.f32 %v5260, %v5396
        %v5501 = vadd.f32 %v5261, %v5399
        %v5502 = vadd.f32 %v5262, %v5401
        %v5503 = vadd.f32 %v5263, %v5403
        %v5504 = vadd.f32 %v5264, %v5406
        %v5505 = vadd.f32 %v5265, %v5409
        %v5506 = vadd.f32 %v5266, %v5411
        %v5507 = vadd.f32 %v5267, %v5413
        %v5508 = vadd.f32 %v5268, %v5416
        %v5509 = vadd.f32 %v5269, %v5419
        %v5510 = vadd.f32 %v5270, %v5421
        %v5511 = vadd.f32 %v5271, %v5423
        %v5512 = vadd.f32 %v5272, %v5426
        %v5513 = vadd.f32 %v5273, %v5429
        %v5514 = vadd.f32 %v5274, %v5431
        %v5515 = vadd.f32 %v5275, %v5433
        %v5516 = vadd.f32 %v5276, %v5436
        %v5517 = vadd.f32 %v5277, %v5439
        %v5518 = vadd.f32 %v5278, %v5441
        %v5519 = vadd.f32 %v5279, %v5443
        %v5520 = vadd.f32 %v5280, %v5446
        %v5521 = vadd.f32 %v5281, %v5449
        %v5522 = vadd.f32 %v5282, %v5451
        %v5523 = vadd.f32 %v5283, %v5453
        %v5524 = vadd.f32 %v5284, %v5456
        %v5525 = vadd.f32 %v5285, %v5459
        %v5526 = vadd.f32 %v5286, %v5461
        %v5527 = vadd.f32 %v5287, %v5463
        %v5528 = vadd.f32 %v5496, %v3463
        %v5529 = vadd.f32 %v5497, %v3467
        %v5530 = vadd.f32 %v5498, %v3463
        %v5531 = vadd.f32 %v5499, %v3467
        %v5532 = vadd.f32 %v5500, %v3463
        %v5533 = vadd.f32 %v5501, %v3467
        %v5534 = vadd.f32 %v5502, %v3463
        %v5535 = vadd.f32 %v5503, %v3467
        %v5536 = vadd.f32 %v5504, %v3463
        %v5537 = vadd.f32 %v5505, %v3467
        %v5538 = vadd.f32 %v5506, %v3463
        %v5539 = vadd.f32 %v5507, %v3467
        %v5540 = vadd.f32 %v5508, %v3463
        %v5541 = vadd.f32 %v5509, %v3467
        %v5542 = vadd.f32 %v5510, %v3463
        %v5543 = vadd.f32 %v5511, %v3467
        %v5544 = vadd.f32 %v5512, %v3463
        %v5545 = vadd.f32 %v5513, %v3467
        %v5546 = vadd.f32 %v5514, %v3463
        %v5547 = vadd.f32 %v5515, %v3467
        %v5548 = vadd.f32 %v5516, %v3463
        %v5549 = vadd.f32 %v5517, %v3467
        %v5550 = vadd.f32 %v5518, %v3463
        %v5551 = vadd.f32 %v5519, %v3467
        %v5552 = vadd.f32 %v5520, %v3463
        %v5553 = vadd.f32 %v5521, %v3467
        %v5554 = vadd.f32 %v5522, %v3463
        %v5555 = vadd.f32 %v5523, %v3467
        %v5556 = vadd.f32 %v5524, %v3463
        %v5557 = vadd.f32 %v5525, %v3467
        %v5558 = vadd.f32 %v5526, %v3463
        %v5559 = vadd.f32 %v5527, %v3467
        %v5560 = vmax.f32 %v5528, 0.0
        %v5561 = vmax.f32 %v5529, 0.0
        %v5562 = vmax.f32 %v5530, 0.0
        %v5563 = vmax.f32 %v5531, 0.0
        %v5564 = vmax.f32 %v5532, 0.0
        %v5565 = vmax.f32 %v5533, 0.0
        %v5566 = vmax.f32 %v5534, 0.0
        %v5567 = vmax.f32 %v5535, 0.0
        %v5568 = vmax.f32 %v5536, 0.0
        %v5569 = vmax.f32 %v5537, 0.0
        %v5570 = vmax.f32 %v5538, 0.0
        %v5571 = vmax.f32 %v5539, 0.0
        %v5572 = vmax.f32 %v5540, 0.0
        %v5573 = vmax.f32 %v5541, 0.0
        %v5574 = vmax.f32 %v5542, 0.0
        %v5575 = vmax.f32 %v5543, 0.0
        %v5576 = vmax.f32 %v5544, 0.0
        %v5577 = vmax.f32 %v5545, 0.0
        %v5578 = vmax.f32 %v5546, 0.0
        %v5579 = vmax.f32 %v5547, 0.0
        %v5580 = vmax.f32 %v5548, 0.0
        %v5581 = vmax.f32 %v5549, 0.0
        %v5582 = vmax.f32 %v5550, 0.0
        %v5583 = vmax.f32 %v5551, 0.0
        %v5584 = vmax.f32 %v5552, 0.0
        %v5585 = vmax.f32 %v5553, 0.0
        %v5586 = vmax.f32 %v5554, 0.0
        %v5587 = vmax.f32 %v5555, 0.0
        %v5588 = vmax.f32 %v5556, 0.0
        %v5589 = vmax.f32 %v5557, 0.0
        %v5590 = vmax.f32 %v5558, 0.0
        %v5591 = vmax.f32 %v5559, 0.0
        %v5592 = vmin.f32 %v5560, 6.0
        %v5593 = vmin.f32 %v5561, 6.0
        %v5594 = vmin.f32 %v5562, 6.0
        %v5595 = vmin.f32 %v5563, 6.0
        %v5596 = vmin.f32 %v5564, 6.0
        %v5597 = vmin.f32 %v5565, 6.0
        %v5598 = vmin.f32 %v5566, 6.0
        %v5599 = vmin.f32 %v5567, 6.0
        %v5600 = vmin.f32 %v5568, 6.0
        %v5601 = vmin.f32 %v5569, 6.0
        %v5602 = vmin.f32 %v5570, 6.0
        %v5603 = vmin.f32 %v5571, 6.0
        %v5604 = vmin.f32 %v5572, 6.0
        %v5605 = vmin.f32 %v5573, 6.0
        %v5606 = vmin.f32 %v5574, 6.0
        %v5607 = vmin.f32 %v5575, 6.0
        %v5608 = vmin.f32 %v5576, 6.0
        %v5609 = vmin.f32 %v5577, 6.0
        %v5610 = vmin.f32 %v5578, 6.0
        %v5611 = vmin.f32 %v5579, 6.0
        %v5612 = vmin.f32 %v5580, 6.0
        %v5613 = vmin.f32 %v5581, 6.0
        %v5614 = vmin.f32 %v5582, 6.0
        %v5615 = vmin.f32 %v5583, 6.0
        %v5616 = vmin.f32 %v5584, 6.0
        %v5617 = vmin.f32 %v5585, 6.0
        %v5618 = vmin.f32 %v5586, 6.0
        %v5619 = vmin.f32 %v5587, 6.0
        %v5620 = vmin.f32 %v5588, 6.0
        %v5621 = vmin.f32 %v5589, 6.0
        %v5622 = vmin.f32 %v5590, 6.0
        %v5623 = vmin.f32 %v5591, 6.0
        %v5624 = vpack.c.bf16 %v5594, %v5592
        %v5625 = vpack.c.bf16 %v5595, %v5593
        %v5626 = vpack.c.bf16 %v5598, %v5596
        %v5627 = vpack.c.bf16 %v5599, %v5597
        %v5628 = vpack.c.bf16 %v5602, %v5600
        %v5629 = vpack.c.bf16 %v5603, %v5601
        %v5630 = vpack.c.bf16 %v5606, %v5604
        %v5631 = vpack.c.bf16 %v5607, %v5605
        %v5632 = vpack.c.bf16 %v5610, %v5608
        %v5633 = vpack.c.bf16 %v5611, %v5609
        %v5634 = vpack.c.bf16 %v5614, %v5612
        %v5635 = vpack.c.bf16 %v5615, %v5613
        %v5636 = vpack.c.bf16 %v5618, %v5616
        %v5637 = vpack.c.bf16 %v5619, %v5617
        %v5638 = vpack.c.bf16 %v5622, %v5620
        %v5639 = vpack.c.bf16 %v5623, %v5621
        %v5656 = vunpack.c.l.b16 %v5624
        %v5657 = vunpack.c.l.b16 %v5625
        %v5658 = vunpack.c.h.b16 %v5624
        %v5659 = vunpack.c.h.b16 %v5625
        %v5660 = vunpack.c.l.b16 %v5626
        %v5661 = vunpack.c.l.b16 %v5627
        %v5662 = vunpack.c.h.b16 %v5626
        %v5663 = vunpack.c.h.b16 %v5627
        %v5664 = vunpack.c.l.b16 %v5628
        %v5665 = vunpack.c.l.b16 %v5629
        %v5666 = vunpack.c.h.b16 %v5628
        %v5667 = vunpack.c.h.b16 %v5629
        %v5668 = vunpack.c.l.b16 %v5630
        %v5669 = vunpack.c.l.b16 %v5631
        %v5670 = vunpack.c.h.b16 %v5630
        %v5671 = vunpack.c.h.b16 %v5631
        %v5672 = vunpack.c.l.b16 %v5632
        %v5673 = vunpack.c.l.b16 %v5633
        %v5674 = vunpack.c.h.b16 %v5632
        %v5675 = vunpack.c.h.b16 %v5633
        %v5676 = vunpack.c.l.b16 %v5634
        %v5677 = vunpack.c.l.b16 %v5635
        %v5678 = vunpack.c.h.b16 %v5634
        %v5679 = vunpack.c.h.b16 %v5635
        %v5680 = vunpack.c.l.b16 %v5636
        %v5681 = vunpack.c.l.b16 %v5637
        %v5682 = vunpack.c.h.b16 %v5636
        %v5683 = vunpack.c.h.b16 %v5637
        %v5684 = vunpack.c.l.b16 %v5638
        %v5685 = vunpack.c.l.b16 %v5639
        %v5686 = vunpack.c.h.b16 %v5638
        %v5687 = vunpack.c.h.b16 %v5639
        %v5688 = vpack.c.b16 %v5657, %v5656
        %v5689 = vpack.c.b16 %v5659, %v5658
        %v5690 = vpack.c.b16 %v5661, %v5660
        %v5691 = vpack.c.b16 %v5663, %v5662
        %v5692 = vpack.c.b16 %v5665, %v5664
        %v5693 = vpack.c.b16 %v5667, %v5666
        %v5694 = vpack.c.b16 %v5669, %v5668
        %v5695 = vpack.c.b16 %v5671, %v5670
        %v5696 = vpack.c.b16 %v5673, %v5672
        %v5697 = vpack.c.b16 %v5675, %v5674
        %v5698 = vpack.c.b16 %v5677, %v5676
        %v5699 = vpack.c.b16 %v5679, %v5678
        %v5700 = vpack.c.b16 %v5681, %v5680
        %v5701 = vpack.c.b16 %v5683, %v5682
        %v5702 = vpack.c.b16 %v5685, %v5684
        %v5703 = vpack.c.b16 %v5687, %v5686
        %5720 = vst.msk [vmem:[#allocation3 + $0x80] sm:$0xff] %vm300, %v5688
        %5721 = vst.msk [vmem:[#allocation3 + $0x88] sm:$0xff] %vm300, %v5689
        %5722 = vst.msk [vmem:[#allocation3 + $0x90] sm:$0xff] %vm300, %v5690
        %5723 = vst.msk [vmem:[#allocation3 + $0x98] sm:$0xff] %vm300, %v5691
        %5724 = vst.msk [vmem:[#allocation3 + $0xa0] sm:$0xff] %vm300, %v5692
        %5725 = vst.msk [vmem:[#allocation3 + $0xa8] sm:$0xff] %vm300, %v5693
        %5726 = vst.msk [vmem:[#allocation3 + $0xb0] sm:$0xff] %vm300, %v5694
        %5727 = vst.msk [vmem:[#allocation3 + $0xb8] sm:$0xff] %vm300, %v5695
        %5728 = vst.msk [vmem:[#allocation3 + $0xc0] sm:$0xff] %vm300, %v5696
        %5729 = vst.msk [vmem:[#allocation3 + $0xc8] sm:$0xff] %vm300, %v5697
        %5730 = vst.msk [vmem:[#allocation3 + $0xd0] sm:$0xff] %vm300, %v5698
        %5731 = vst.msk [vmem:[#allocation3 + $0xd8] sm:$0xff] %vm300, %v5699
        %5732 = vst.msk [vmem:[#allocation3 + $0xe0] sm:$0xff] %vm300, %v5700
        %5733 = vst.msk [vmem:[#allocation3 + $0xe8] sm:$0xff] %vm300, %v5701
        %5734 = vst.msk [vmem:[#allocation3 + $0xf0] sm:$0xff] %vm300, %v5702
        %5735 = vst.msk [vmem:[#allocation3 + $0xf8] sm:$0xff] %vm300, %v5703
        %v5736 = vld [vmem:[%s5] sm:$0xf]
        %v5737 = vld [vmem:[%s5 + $0x4] sm:$0xf]
        %v5738 = vld [vmem:[%s5 + $0x8] sm:$0xf]
        %v5739 = vld [vmem:[%s5 + $0xc] sm:$0xf]
        %v5740 = vld [vmem:[%s5 + $0x10] sm:$0xf]
        %v5741 = vld [vmem:[%s5 + $0x14] sm:$0xf]
        %v5742 = vld [vmem:[%s5 + $0x18] sm:$0xf]
        %v5743 = vld [vmem:[%s5 + $0x1c] sm:$0xf]
        %v5744 = vld [vmem:[%s5 + $0x20] sm:$0xf]
        %v5745 = vld [vmem:[%s5 + $0x24] sm:$0xf]
        %v5746 = vld [vmem:[%s5 + $0x28] sm:$0xf]
        %v5747 = vld [vmem:[%s5 + $0x2c] sm:$0xf]
        %v5748 = vld [vmem:[%s5 + $0x30] sm:$0xf]
        %v5749 = vld [vmem:[%s5 + $0x34] sm:$0xf]
        %v5750 = vld [vmem:[%s5 + $0x38] sm:$0xf]
        %v5751 = vld [vmem:[%s5 + $0x3c] sm:$0xf]
        %v5752 = vld [vmem:[%s5 + $0x40] sm:$0xf]
        %v5753 = vld [vmem:[%s5 + $0x44] sm:$0xf]
        %v5754 = vld [vmem:[%s5 + $0x48] sm:$0xf]
        %v5755 = vld [vmem:[%s5 + $0x4c] sm:$0xf]
        %v5756 = vld [vmem:[%s5 + $0x50] sm:$0xf]
        %v5757 = vld [vmem:[%s5 + $0x54] sm:$0xf]
        %v5758 = vld [vmem:[%s5 + $0x58] sm:$0xf]
        %v5759 = vld [vmem:[%s5 + $0x5c] sm:$0xf]
        %v5760 = vld [vmem:[%s6] sm:$0x1]
        %v5761 = vld [vmem:[#allocation3] sm:$0xff]
        %v5762 = vld [vmem:[#allocation3 + $0x8] sm:$0xff]
        %v5763 = vld [vmem:[#allocation3 + $0x10] sm:$0xff]
        %v5764 = vld [vmem:[#allocation3 + $0x18] sm:$0xff]
        %v5765 = vld [vmem:[#allocation3 + $0x20] sm:$0xff]
        %v5766 = vld [vmem:[#allocation3 + $0x28] sm:$0xff]
        %v5767 = vld [vmem:[#allocation3 + $0x30] sm:$0xff]
        %v5768 = vld [vmem:[#allocation3 + $0x38] sm:$0xff]
        %v5769 = vld [vmem:[#allocation3 + $0x40] sm:$0xff]
        %v5770 = vld [vmem:[#allocation3 + $0x48] sm:$0xff]
        %v5771 = vld [vmem:[#allocation3 + $0x50] sm:$0xff]
        %v5772 = vld [vmem:[#allocation3 + $0x58] sm:$0xff]
        %v5773 = vld [vmem:[#allocation3 + $0x60] sm:$0xff]
        %v5774 = vld [vmem:[#allocation3 + $0x68] sm:$0xff]
        %v5775 = vld [vmem:[#allocation3 + $0x70] sm:$0xff]
        %v5776 = vld [vmem:[#allocation3 + $0x78] sm:$0xff]
        %v5777 = vld [vmem:[#allocation3 + $0x80] sm:$0xff]
        %v5778 = vld [vmem:[#allocation3 + $0x88] sm:$0xff]
        %v5779 = vld [vmem:[#allocation3 + $0x90] sm:$0xff]
        %v5780 = vld [vmem:[#allocation3 + $0x98] sm:$0xff]
        %v5781 = vld [vmem:[#allocation3 + $0xa0] sm:$0xff]
        %v5782 = vld [vmem:[#allocation3 + $0xa8] sm:$0xff]
        %v5783 = vld [vmem:[#allocation3 + $0xb0] sm:$0xff]
        %v5784 = vld [vmem:[#allocation3 + $0xb8] sm:$0xff]
        %v5785 = vld [vmem:[#allocation3 + $0xc0] sm:$0xff]
        %v5786 = vld [vmem:[#allocation3 + $0xc8] sm:$0xff]
        %v5787 = vld [vmem:[#allocation3 + $0xd0] sm:$0xff]
        %v5788 = vld [vmem:[#allocation3 + $0xd8] sm:$0xff]
        %v5789 = vld [vmem:[#allocation3 + $0xe0] sm:$0xff]
        %v5790 = vld [vmem:[#allocation3 + $0xe8] sm:$0xff]
        %v5791 = vld [vmem:[#allocation3 + $0xf0] sm:$0xff]
        %v5792 = vld [vmem:[#allocation3 + $0xf8] sm:$0xff]
        %v5794 = vlaneseq
        %v5795 = vshrl.u32 %v5794, 7
        %v5796 = vsub.s32 0, %v5795
        %v5797 = vrot.slane %v5760, %v5796
        %v5831 = vunpack.c.l.b16 %v5761
        %v5832 = vunpack.c.h.b16 %v5761
        %v5833 = vunpack.c.l.b16 %v5762
        %v5834 = vunpack.c.h.b16 %v5762
        %v5835 = vunpack.c.l.b16 %v5763
        %v5836 = vunpack.c.h.b16 %v5763
        %v5837 = vunpack.c.l.b16 %v5764
        %v5838 = vunpack.c.h.b16 %v5764
        %v5839 = vunpack.c.l.b16 %v5765
        %v5840 = vunpack.c.h.b16 %v5765
        %v5841 = vunpack.c.l.b16 %v5766
        %v5842 = vunpack.c.h.b16 %v5766
        %v5843 = vunpack.c.l.b16 %v5767
        %v5844 = vunpack.c.h.b16 %v5767
        %v5845 = vunpack.c.l.b16 %v5768
        %v5846 = vunpack.c.h.b16 %v5768
        %v5847 = vunpack.c.l.b16 %v5769
        %v5848 = vunpack.c.h.b16 %v5769
        %v5849 = vunpack.c.l.b16 %v5770
        %v5850 = vunpack.c.h.b16 %v5770
        %v5851 = vunpack.c.l.b16 %v5771
        %v5852 = vunpack.c.h.b16 %v5771
        %v5853 = vunpack.c.l.b16 %v5772
        %v5854 = vunpack.c.h.b16 %v5772
        %v5855 = vunpack.c.l.b16 %v5773
        %v5856 = vunpack.c.h.b16 %v5773
        %v5857 = vunpack.c.l.b16 %v5774
        %v5858 = vunpack.c.h.b16 %v5774
        %v5859 = vunpack.c.l.b16 %v5775
        %v5860 = vunpack.c.h.b16 %v5775
        %v5861 = vunpack.c.l.b16 %v5776
        %v5862 = vunpack.c.h.b16 %v5776
        %v5863 = vunpack.c.l.b16 %v5777
        %v5864 = vunpack.c.h.b16 %v5777
        %v5865 = vunpack.c.l.b16 %v5778
        %v5866 = vunpack.c.h.b16 %v5778
        %v5867 = vunpack.c.l.b16 %v5779
        %v5868 = vunpack.c.h.b16 %v5779
        %v5869 = vunpack.c.l.b16 %v5780
        %v5870 = vunpack.c.h.b16 %v5780
        %v5871 = vunpack.c.l.b16 %v5781
        %v5872 = vunpack.c.h.b16 %v5781
        %v5873 = vunpack.c.l.b16 %v5782
        %v5874 = vunpack.c.h.b16 %v5782
        %v5875 = vunpack.c.l.b16 %v5783
        %v5876 = vunpack.c.h.b16 %v5783
        %v5877 = vunpack.c.l.b16 %v5784
        %v5878 = vunpack.c.h.b16 %v5784
        %v5879 = vunpack.c.l.b16 %v5785
        %v5880 = vunpack.c.h.b16 %v5785
        %v5881 = vunpack.c.l.b16 %v5786
        %v5882 = vunpack.c.h.b16 %v5786
        %v5883 = vunpack.c.l.b16 %v5787
        %v5884 = vunpack.c.h.b16 %v5787
        %v5885 = vunpack.c.l.b16 %v5788
        %v5886 = vunpack.c.h.b16 %v5788
        %v5887 = vunpack.c.l.b16 %v5789
        %v5888 = vunpack.c.h.b16 %v5789
        %v5889 = vunpack.c.l.b16 %v5790
        %v5890 = vunpack.c.h.b16 %v5790
        %v5891 = vunpack.c.l.b16 %v5791
        %v5892 = vunpack.c.h.b16 %v5791
        %v5893 = vunpack.c.l.b16 %v5792
        %v5894 = vunpack.c.h.b16 %v5792
        %v5895 = vpack.c.b16 %v5833, %v5831
        %v5896 = vpack.c.b16 %v5834, %v5832
        %v5897 = vpack.c.b16 %v5837, %v5835
        %v5898 = vpack.c.b16 %v5838, %v5836
        %v5899 = vpack.c.b16 %v5841, %v5839
        %v5900 = vpack.c.b16 %v5842, %v5840
        %v5901 = vpack.c.b16 %v5845, %v5843
        %v5902 = vpack.c.b16 %v5846, %v5844
        %v5903 = vpack.c.b16 %v5849, %v5847
        %v5904 = vpack.c.b16 %v5850, %v5848
        %v5905 = vpack.c.b16 %v5853, %v5851
        %v5906 = vpack.c.b16 %v5854, %v5852
        %v5907 = vpack.c.b16 %v5857, %v5855
        %v5908 = vpack.c.b16 %v5858, %v5856
        %v5909 = vpack.c.b16 %v5861, %v5859
        %v5910 = vpack.c.b16 %v5862, %v5860
        %v5911 = vpack.c.b16 %v5865, %v5863
        %v5912 = vpack.c.b16 %v5866, %v5864
        %v5913 = vpack.c.b16 %v5869, %v5867
        %v5914 = vpack.c.b16 %v5870, %v5868
        %v5915 = vpack.c.b16 %v5873, %v5871
        %v5916 = vpack.c.b16 %v5874, %v5872
        %v5917 = vpack.c.b16 %v5877, %v5875
        %v5918 = vpack.c.b16 %v5878, %v5876
        %v5919 = vpack.c.b16 %v5881, %v5879
        %v5920 = vpack.c.b16 %v5882, %v5880
        %v5921 = vpack.c.b16 %v5885, %v5883
        %v5922 = vpack.c.b16 %v5886, %v5884
        %v5923 = vpack.c.b16 %v5889, %v5887
        %v5924 = vpack.c.b16 %v5890, %v5888
        %v5925 = vpack.c.b16 %v5893, %v5891
        %v5926 = vpack.c.b16 %v5894, %v5892
        %v5967 = vunpack.c.l.b16 %v5736
        %v5968 = vunpack.c.l.b16 %v5737
        %v5969 = vunpack.c.l.b16 %v5738
        %v5970 = vunpack.c.l.b16 %v5739
        %v5971 = vunpack.c.l.b16 %v5740
        %v5972 = vunpack.c.l.b16 %v5741
        %v5973 = vunpack.c.l.b16 %v5742
        %v5974 = vunpack.c.l.b16 %v5743
        %v5975 = vunpack.c.l.b16 %v5744
        %v5976 = vunpack.c.l.b16 %v5745
        %v5977 = vunpack.c.l.b16 %v5746
        %v5978 = vunpack.c.l.b16 %v5747
        %v5979 = vunpack.c.l.b16 %v5748
        %v5980 = vunpack.c.l.b16 %v5749
        %v5981 = vunpack.c.l.b16 %v5750
        %v5982 = vunpack.c.l.b16 %v5751
        %v5983 = vunpack.c.l.b16 %v5752
        %v5984 = vunpack.c.l.b16 %v5753
        %v5985 = vunpack.c.l.b16 %v5754
        %v5986 = vunpack.c.l.b16 %v5755
        %v5987 = vunpack.c.l.b16 %v5756
        %v5988 = vunpack.c.l.b16 %v5757
        %v5989 = vunpack.c.l.b16 %v5758
        %v5990 = vunpack.c.l.b16 %v5759
        %v5991 = vpack.c.b16 %v5968, %v5967
        %v5992 = vpack.c.b16 %v5970, %v5969
        %v5993 = vpack.c.b16 %v5972, %v5971
        %v5994 = vpack.c.b16 %v5974, %v5973
        %v5995 = vpack.c.b16 %v5976, %v5975
        %v5996 = vpack.c.b16 %v5978, %v5977
        %v5997 = vpack.c.b16 %v5980, %v5979
        %v5998 = vpack.c.b16 %v5982, %v5981
        %v5999 = vpack.c.b16 %v5984, %v5983
        %v6000 = vpack.c.b16 %v5986, %v5985
        %v6001 = vpack.c.b16 %v5988, %v5987
        %v6002 = vpack.c.b16 %v5990, %v5989
        %vm6015 = vcmask 523264
        %v6017 = vsel %vm6015, %v5896, 0
        %v6020 = vsel %vm6015, %v5898, 0
        %v6023 = vsel %vm6015, %v5900, 0
        %v6026 = vsel %vm6015, %v5902, 0
        %v6029 = vsel %vm6015, %v5904, 0
        %v6032 = vsel %vm6015, %v5906, 0
        %v6035 = vsel %vm6015, %v5908, 0
        %v6038 = vsel %vm6015, %v5910, 0
        %v6041 = vsel %vm6015, %v5912, 0
        %v6044 = vsel %vm6015, %v5914, 0
        %v6047 = vsel %vm6015, %v5916, 0
        %v6050 = vsel %vm6015, %v5918, 0
        %v6053 = vsel %vm6015, %v5920, 0
        %v6056 = vsel %vm6015, %v5922, 0
        %v6059 = vsel %vm6015, %v5924, 0
        %v6062 = vsel %vm6015, %v5926, 0
        %6064 = vmatprep.subr.bf16.mxu0 0
        %6065 = vmatpush1.bf16.msra.mxu0 %v5998
        %6066 = vmatprep.subr.bf16.mxu0 0
        %6067 = vmatpush1.bf16.msra.mxu0 %v5997
        %6068 = vmatprep.subr.bf16.mxu0 0
        %6069 = vmatpush1.bf16.msra.mxu0 %v5996
        %6070 = vmatprep.subr.bf16.mxu0 0
        %6071 = vmatpush1.bf16.msra.mxu0 %v5995
        %6072 = vmatprep.subr.bf16.mxu0 0
        %6073 = vmatpush1.bf16.msra.mxu0 %v5994
        %6074 = vmatprep.subr.bf16.mxu0 0
        %6075 = vmatpush1.bf16.msra.mxu0 %v5993
        %6076 = vmatprep.subr.bf16.mxu0 0
        %6077 = vmatpush1.bf16.msra.mxu0 %v5992
        %6078 = vmatprep.subr.bf16.mxu0 0
        %6079 = vmatpush1.bf16.msra.mxu0 %v5991
        %6080 = vmatprep.subr.bf16.mxu0 0
        %6081 = vmatpush2.bf16.msra.mxu0 0
        %6082 = vmatprep.subr.bf16.mxu0 0
        %6083 = vmatpush2.bf16.msra.mxu0 0
        %6084 = vmatprep.subr.bf16.mxu0 0
        %6085 = vmatpush2.bf16.msra.mxu0 0
        %6086 = vmatprep.subr.bf16.mxu0 0
        %6087 = vmatpush2.bf16.msra.mxu0 0
        %6088 = vmatprep.subr.bf16.mxu0 0
        %6089 = vmatpush2.bf16.msra.mxu0 %v6002
        %6090 = vmatprep.subr.bf16.mxu0 0
        %6091 = vmatpush2.bf16.msra.mxu0 %v6001
        %6092 = vmatprep.subr.bf16.mxu0 0
        %6093 = vmatpush2.bf16.msra.mxu0 %v6000
        %6094 = vmatprep.subr.bf16.mxu0 0
        %6095 = vmatpush2.bf16.msra.mxu0 %v5999
        %6096 = vmatprep.mubr.bf16.mxu0 %v6017
        %6097 = vmatmul.mubr.bf16.gmra.mxu0 %v5895
        %v6098 = vpop.f32.mrf.mxu0
        %v6099 = vadd.f32 %v5797, %v6098
        %v6100 = vpop.f32.mrf.mxu0
        %v6101 = vpop.f32.mrf.mxu0
        %v6102 = vadd.f32 %v5797, %v6101
        %v6103 = vpop.f32.mrf.mxu0
        %6104 = vmatprep.mubr.bf16.mxu0 %v6020
        %6105 = vmatmul.mubr.bf16.gmra.mxu0 %v5897
        %v6106 = vpop.f32.mrf.mxu0
        %v6107 = vadd.f32 %v5797, %v6106
        %v6108 = vpop.f32.mrf.mxu0
        %v6109 = vpop.f32.mrf.mxu0
        %v6110 = vadd.f32 %v5797, %v6109
        %v6111 = vpop.f32.mrf.mxu0
        %6112 = vmatprep.mubr.bf16.mxu0 %v6023
        %6113 = vmatmul.mubr.bf16.gmra.mxu0 %v5899
        %v6114 = vpop.f32.mrf.mxu0
        %v6115 = vadd.f32 %v5797, %v6114
        %v6116 = vpop.f32.mrf.mxu0
        %v6117 = vpop.f32.mrf.mxu0
        %v6118 = vadd.f32 %v5797, %v6117
        %v6119 = vpop.f32.mrf.mxu0
        %6120 = vmatprep.mubr.bf16.mxu0 %v6026
        %6121 = vmatmul.mubr.bf16.gmra.mxu0 %v5901
        %v6122 = vpop.f32.mrf.mxu0
        %v6123 = vadd.f32 %v5797, %v6122
        %v6124 = vpop.f32.mrf.mxu0
        %v6125 = vpop.f32.mrf.mxu0
        %v6126 = vadd.f32 %v5797, %v6125
        %v6127 = vpop.f32.mrf.mxu0
        %6128 = vmatprep.mubr.bf16.mxu0 %v6029
        %6129 = vmatmul.mubr.bf16.gmra.mxu0 %v5903
        %v6130 = vpop.f32.mrf.mxu0
        %v6131 = vadd.f32 %v5797, %v6130
        %v6132 = vpop.f32.mrf.mxu0
        %v6133 = vpop.f32.mrf.mxu0
        %v6134 = vadd.f32 %v5797, %v6133
        %v6135 = vpop.f32.mrf.mxu0
        %6136 = vmatprep.mubr.bf16.mxu0 %v6032
        %6137 = vmatmul.mubr.bf16.gmra.mxu0 %v5905
        %v6138 = vpop.f32.mrf.mxu0
        %v6139 = vadd.f32 %v5797, %v6138
        %v6140 = vpop.f32.mrf.mxu0
        %v6141 = vpop.f32.mrf.mxu0
        %v6142 = vadd.f32 %v5797, %v6141
        %v6143 = vpop.f32.mrf.mxu0
        %6144 = vmatprep.mubr.bf16.mxu0 %v6035
        %6145 = vmatmul.mubr.bf16.gmra.mxu0 %v5907
        %v6146 = vpop.f32.mrf.mxu0
        %v6147 = vadd.f32 %v5797, %v6146
        %v6148 = vpop.f32.mrf.mxu0
        %v6149 = vpop.f32.mrf.mxu0
        %v6150 = vadd.f32 %v5797, %v6149
        %v6151 = vpop.f32.mrf.mxu0
        %6152 = vmatprep.mubr.bf16.mxu0 %v6038
        %6153 = vmatmul.mubr.bf16.gmra.mxu0 %v5909
        %v6154 = vpop.f32.mrf.mxu0
        %v6155 = vadd.f32 %v5797, %v6154
        %v6156 = vpop.f32.mrf.mxu0
        %v6157 = vpop.f32.mrf.mxu0
        %v6158 = vadd.f32 %v5797, %v6157
        %v6159 = vpop.f32.mrf.mxu0
        %6160 = vmatprep.mubr.bf16.mxu0 %v6041
        %6161 = vmatmul.mubr.bf16.gmra.mxu0 %v5911
        %v6162 = vpop.f32.mrf.mxu0
        %v6163 = vadd.f32 %v5797, %v6162
        %v6164 = vpop.f32.mrf.mxu0
        %v6165 = vpop.f32.mrf.mxu0
        %v6166 = vadd.f32 %v5797, %v6165
        %v6167 = vpop.f32.mrf.mxu0
        %6168 = vmatprep.mubr.bf16.mxu0 %v6044
        %6169 = vmatmul.mubr.bf16.gmra.mxu0 %v5913
        %v6170 = vpop.f32.mrf.mxu0
        %v6171 = vadd.f32 %v5797, %v6170
        %v6172 = vpop.f32.mrf.mxu0
        %v6173 = vpop.f32.mrf.mxu0
        %v6174 = vadd.f32 %v5797, %v6173
        %v6175 = vpop.f32.mrf.mxu0
        %6176 = vmatprep.mubr.bf16.mxu0 %v6047
        %6177 = vmatmul.mubr.bf16.gmra.mxu0 %v5915
        %v6178 = vpop.f32.mrf.mxu0
        %v6179 = vadd.f32 %v5797, %v6178
        %v6180 = vpop.f32.mrf.mxu0
        %v6181 = vpop.f32.mrf.mxu0
        %v6182 = vadd.f32 %v5797, %v6181
        %v6183 = vpop.f32.mrf.mxu0
        %6184 = vmatprep.mubr.bf16.mxu0 %v6050
        %6185 = vmatmul.mubr.bf16.gmra.mxu0 %v5917
        %v6186 = vpop.f32.mrf.mxu0
        %v6187 = vadd.f32 %v5797, %v6186
        %v6188 = vpop.f32.mrf.mxu0
        %v6189 = vpop.f32.mrf.mxu0
        %v6190 = vadd.f32 %v5797, %v6189
        %v6191 = vpop.f32.mrf.mxu0
        %6192 = vmatprep.mubr.bf16.mxu0 %v6053
        %6193 = vmatmul.mubr.bf16.gmra.mxu0 %v5919
        %v6194 = vpop.f32.mrf.mxu0
        %v6195 = vadd.f32 %v5797, %v6194
        %v6196 = vpop.f32.mrf.mxu0
        %v6197 = vpop.f32.mrf.mxu0
        %v6198 = vadd.f32 %v5797, %v6197
        %v6199 = vpop.f32.mrf.mxu0
        %6200 = vmatprep.mubr.bf16.mxu0 %v6056
        %6201 = vmatmul.mubr.bf16.gmra.mxu0 %v5921
        %v6202 = vpop.f32.mrf.mxu0
        %v6203 = vadd.f32 %v5797, %v6202
        %v6204 = vpop.f32.mrf.mxu0
        %v6205 = vpop.f32.mrf.mxu0
        %v6206 = vadd.f32 %v5797, %v6205
        %v6207 = vpop.f32.mrf.mxu0
        %6208 = vmatprep.mubr.bf16.mxu0 %v6059
        %6209 = vmatmul.mubr.bf16.gmra.mxu0 %v5923
        %v6210 = vpop.f32.mrf.mxu0
        %v6211 = vadd.f32 %v5797, %v6210
        %v6212 = vpop.f32.mrf.mxu0
        %v6213 = vpop.f32.mrf.mxu0
        %v6214 = vadd.f32 %v5797, %v6213
        %v6215 = vpop.f32.mrf.mxu0
        %6216 = vmatprep.mubr.bf16.mxu0 %v6062
        %6217 = vmatmul.mubr.bf16.gmra.mxu0 %v5925
        %v6218 = vpop.f32.mrf.mxu0
        %v6219 = vadd.f32 %v5797, %v6218
        %v6220 = vpop.f32.mrf.mxu0
        %v6221 = vpop.f32.mrf.mxu0
        %v6222 = vadd.f32 %v5797, %v6221
        %v6223 = vpop.f32.mrf.mxu0
        %6224 = vdwg.mxu0
        %v6225 = vld [vmem:[%s266] sm:$0xff]
        %v6226 = vld [vmem:[%s266 + $0x8] sm:$0xff]
        %v6227 = vld [vmem:[%s266 + $0x10] sm:$0xff]
        %v6228 = vld [vmem:[%s266 + $0x18] sm:$0xff]
        %v6229 = vld [vmem:[%s266 + $0x20] sm:$0xff]
        %v6230 = vld [vmem:[%s266 + $0x28] sm:$0xff]
        %v6231 = vld [vmem:[%s266 + $0x30] sm:$0xff]
        %v6232 = vld [vmem:[%s266 + $0x38] sm:$0xff]
        %v6233 = vld [vmem:[%s266 + $0x40] sm:$0xff]
        %v6234 = vld [vmem:[%s266 + $0x48] sm:$0xff]
        %v6235 = vld [vmem:[%s266 + $0x50] sm:$0xff]
        %v6236 = vld [vmem:[%s266 + $0x58] sm:$0xff]
        %v6237 = vld [vmem:[%s266 + $0x60] sm:$0xff]
        %v6238 = vld [vmem:[%s266 + $0x68] sm:$0xff]
        %v6239 = vld [vmem:[%s266 + $0x70] sm:$0xff]
        %v6240 = vld [vmem:[%s266 + $0x78] sm:$0xff]
        %v6241 = vld [vmem:[%s266 + $0x80] sm:$0xff]
        %v6242 = vld [vmem:[%s266 + $0x88] sm:$0xff]
        %v6243 = vld [vmem:[%s266 + $0x90] sm:$0xff]
        %v6244 = vld [vmem:[%s266 + $0x98] sm:$0xff]
        %v6245 = vld [vmem:[%s266 + $0xa0] sm:$0xff]
        %v6246 = vld [vmem:[%s266 + $0xa8] sm:$0xff]
        %v6247 = vld [vmem:[%s266 + $0xb0] sm:$0xff]
        %v6248 = vld [vmem:[%s266 + $0xb8] sm:$0xff]
        %v6249 = vld [vmem:[%s266 + $0xc0] sm:$0xff]
        %v6250 = vld [vmem:[%s266 + $0xc8] sm:$0xff]
        %v6251 = vld [vmem:[%s266 + $0xd0] sm:$0xff]
        %v6252 = vld [vmem:[%s266 + $0xd8] sm:$0xff]
        %v6253 = vld [vmem:[%s266 + $0xe0] sm:$0xff]
        %v6254 = vld [vmem:[%s266 + $0xe8] sm:$0xff]
        %v6255 = vld [vmem:[%s266 + $0xf0] sm:$0xff]
        %v6256 = vld [vmem:[%s266 + $0xf8] sm:$0xff]
        %v6257 = vadd.f32 %v6099, %v6225
        %v6258 = vadd.f32 %v6102, %v6226
        %v6259 = vadd.f32 %v6107, %v6227
        %v6260 = vadd.f32 %v6110, %v6228
        %v6261 = vadd.f32 %v6115, %v6229
        %v6262 = vadd.f32 %v6118, %v6230
        %v6263 = vadd.f32 %v6123, %v6231
        %v6264 = vadd.f32 %v6126, %v6232
        %v6265 = vadd.f32 %v6131, %v6233
        %v6266 = vadd.f32 %v6134, %v6234
        %v6267 = vadd.f32 %v6139, %v6235
        %v6268 = vadd.f32 %v6142, %v6236
        %v6269 = vadd.f32 %v6147, %v6237
        %v6270 = vadd.f32 %v6150, %v6238
        %v6271 = vadd.f32 %v6155, %v6239
        %v6272 = vadd.f32 %v6158, %v6240
        %v6273 = vadd.f32 %v6163, %v6241
        %v6274 = vadd.f32 %v6166, %v6242
        %v6275 = vadd.f32 %v6171, %v6243
        %v6276 = vadd.f32 %v6174, %v6244
        %v6277 = vadd.f32 %v6179, %v6245
        %v6278 = vadd.f32 %v6182, %v6246
        %v6279 = vadd.f32 %v6187, %v6247
        %v6280 = vadd.f32 %v6190, %v6248
        %v6281 = vadd.f32 %v6195, %v6249
        %v6282 = vadd.f32 %v6198, %v6250
        %v6283 = vadd.f32 %v6203, %v6251
        %v6284 = vadd.f32 %v6206, %v6252
        %v6285 = vadd.f32 %v6211, %v6253
        %v6286 = vadd.f32 %v6214, %v6254
        %v6287 = vadd.f32 %v6219, %v6255
        %v6288 = vadd.f32 %v6222, %v6256
        %6289 = vst.msk [vmem:[%s296] sm:$0xff] %vm371, %v6257
        %6290 = vst.msk [vmem:[%s296 + $0x8] sm:$0xff] %vm371, %v6258
        %6291 = vst.msk [vmem:[%s296 + $0x10] sm:$0xff] %vm371, %v6259
        %6292 = vst.msk [vmem:[%s296 + $0x18] sm:$0xff] %vm371, %v6260
        %6293 = vst.msk [vmem:[%s296 + $0x20] sm:$0xff] %vm371, %v6261
        %6294 = vst.msk [vmem:[%s296 + $0x28] sm:$0xff] %vm371, %v6262
        %6295 = vst.msk [vmem:[%s296 + $0x30] sm:$0xff] %vm371, %v6263
        %6296 = vst.msk [vmem:[%s296 + $0x38] sm:$0xff] %vm371, %v6264
        %6297 = vst.msk [vmem:[%s296 + $0x40] sm:$0xff] %vm371, %v6265
        %6298 = vst.msk [vmem:[%s296 + $0x48] sm:$0xff] %vm371, %v6266
        %6299 = vst.msk [vmem:[%s296 + $0x50] sm:$0xff] %vm371, %v6267
        %6300 = vst.msk [vmem:[%s296 + $0x58] sm:$0xff] %vm371, %v6268
        %6301 = vst.msk [vmem:[%s296 + $0x60] sm:$0xff] %vm371, %v6269
        %6302 = vst.msk [vmem:[%s296 + $0x68] sm:$0xff] %vm371, %v6270
        %6303 = vst.msk [vmem:[%s296 + $0x70] sm:$0xff] %vm371, %v6271
        %6304 = vst.msk [vmem:[%s296 + $0x78] sm:$0xff] %vm371, %v6272
        %6305 = vst.msk [vmem:[%s296 + $0x80] sm:$0xff] %vm371, %v6273
        %6306 = vst.msk [vmem:[%s296 + $0x88] sm:$0xff] %vm371, %v6274
        %6307 = vst.msk [vmem:[%s296 + $0x90] sm:$0xff] %vm371, %v6275
        %6308 = vst.msk [vmem:[%s296 + $0x98] sm:$0xff] %vm371, %v6276
        %6309 = vst.msk [vmem:[%s296 + $0xa0] sm:$0xff] %vm371, %v6277
        %6310 = vst.msk [vmem:[%s296 + $0xa8] sm:$0xff] %vm371, %v6278
        %6311 = vst.msk [vmem:[%s296 + $0xb0] sm:$0xff] %vm371, %v6279
        %6312 = vst.msk [vmem:[%s296 + $0xb8] sm:$0xff] %vm371, %v6280
        %6313 = vst.msk [vmem:[%s296 + $0xc0] sm:$0xff] %vm371, %v6281
        %6314 = vst.msk [vmem:[%s296 + $0xc8] sm:$0xff] %vm371, %v6282
        %6315 = vst.msk [vmem:[%s296 + $0xd0] sm:$0xff] %vm371, %v6283
        %6316 = vst.msk [vmem:[%s296 + $0xd8] sm:$0xff] %vm371, %v6284
        %6317 = vst.msk [vmem:[%s296 + $0xe0] sm:$0xff] %vm371, %v6285
        %6318 = vst.msk [vmem:[%s296 + $0xe8] sm:$0xff] %vm371, %v6286
        %6319 = vst.msk [vmem:[%s296 + $0xf0] sm:$0xff] %vm371, %v6287
        %6320 = vst.msk [vmem:[%s296 + $0xf8] sm:$0xff] %vm371, %v6288
        %s6321 = sand.u32 %s184, 1
        %s6322 = scalar_lea.sflag [#allocation6], %s6321
        %s6323 = sand.u32 %s184, 1
        %s6324 = smul.addr %s6323, 256
        %s6325 = scalar_lea.vmem [#allocation7], %s6324
        // Predicated region
        $region53: #{inverted_residual_forward.1} parent=47 // pred_check
          %p6326 = pneg %p194
        $region54: #{inverted_residual_forward.1} parent=47 // pred_check_branch
          %6328 = sbr.rel (%p6326) target = $region56
        $region55: #{inverted_residual_forward.1} parent=47 // pred_region
          %s6330 = ssub.s32 4096, 4096
          %6331 = vsyncadd %s6322, %s6330
          %s6332 = smul.addr %s24, 32
          %s6333 = smul.addr %s6332, 128
          %s6334 = scalar_lea.hbm %s7, %s6333
          %s6335 = sshll.u32 %s6325, 4
          %s6336 = int_to_ptr.vmem [resolvable:$true] %s6335
          %6341 = dma.vmem_to_hbm [thread:$0]  %s6336, 4096, %s6334, %s6322, 128, 128, 8
        $region56: #{inverted_residual_forward.1} parent=47 // pred_fallthru
          _
      $region48: #{inverted_residual_forward.1} parent=5 // pred_fallthru
        _
      %p6342 = scmp.le.s32.totalorder 2, %s19
      // Predicated region
      $region57: #{inverted_residual_forward.1} parent=5 // pred_check
        %p6343 = pneg %p6342
      $region58: #{inverted_residual_forward.1} parent=5 // pred_check_branch
        %6345 = sbr.rel (%p6343) target = $region60
      $region59: #{inverted_residual_forward.1} parent=5 // pred_region
        %s6346 = ssub.s32 %s19, 2
        // Predicated region
        $region61: #{inverted_residual_forward.1} parent=59 // pred_check
          %p6347 = pneg %p200
        $region62: #{inverted_residual_forward.1} parent=59 // pred_check_branch
          %6349 = sbr.rel (%p6347) target = $region64
        $region63: #{inverted_residual_forward.1} parent=59 // pred_region
          %s6350 = sand.u32 %s185, 1
          %s6351 = scalar_lea.sflag [#allocation6], %s6350
          %s6352 = sand.u32 %s185, 1
          %s6353 = smul.addr %s6352, 256
          %s6354 = scalar_lea.vmem [#allocation7], %s6353
          %6355 = dma.done %s6351, 4096
        $region64: #{inverted_residual_forward.1} parent=59 // pred_fallthru
          _
      $region60: #{inverted_residual_forward.1} parent=5 // pred_fallthru
        _
    $region6: #{inverted_residual_forward.1} parent=1 // loop_footer
      %s23 = sadd.s32 1, %s19
    $region7: #{inverted_residual_forward.1} parent=1 // loop_footer_branch
      %18 = sbr.rel target = $region3
    $region8: #{inverted_residual_forward.1} parent=1 // loop_exit
      _
    %6356 = vsyncpa [#allocation5], 1
    %s6357 = scalar_lea.sflag [#allocation5], 1
    %6358 = vsyncpa %s6357, 1
    %6359 = vsyncpa [#allocation6], 1
    %s6360 = scalar_lea.sflag [#allocation6], 1
    %6361 = vsyncpa %s6360, 1

</llo_original>
